<compile_context>
chip_gen: v7x
topology: tpu7x:2x2x1
jax: 0.10.0
libtpu: 0.0.40
codegen_flags: <defaults>
</compile_context>

<pallas_src>
import functools

import jax
import jax.numpy as jnp
import numpy as np
from jax import lax
from jax.experimental import pallas as pl
from jax.experimental.pallas import tpu as pltpu


def _elic_block_kernel(x_ref, w1_ref, b1_ref, w2_ref, b2_ref, w3_ref, b3_ref,
                       ml_ref, mr_ref, o_ref, fbuf_ref, *, C, H, W, LPAD):
    """All L residual units for one batch element, activations as (C, H*W)."""
    Ch = C // 2
    HW = H * W
    L = w1_ref.shape[0]
    f32 = jnp.float32

    # Row-padded flat buffer for the 3x3 conv input:
    #   fbuf[c, LPAD + r*W + x] = padded_image[c, r, x],  r in [0, H+2)
    # Halo rows (r=0, r=H+1), the left pad and the trailing element must read
    # as zero; the interior is fully overwritten every layer, so zero once per
    # grid step only.
    fbuf_ref[...] = jnp.zeros_like(fbuf_ref)

    # Column masks for the dx = -1 / +1 taps (row-major flattening makes those
    # taps wrap across image rows).  Shapes (1, HW), broadcast over channels.
    mask_l = ml_ref[...]   # 0.0 where x == 0
    mask_r = mr_ref[...]   # 0.0 where x == W-1

    cur = x_ref[0]         # (C, HW) residual stream, carried across layers

    for l in range(L):
        # ---- conv1x1 (C -> C/2) + ReLU : one MXU matmul -------------------
        h1 = jnp.maximum(
            jnp.dot(w1_ref[l], cur, preferred_element_type=f32) + b1_ref[l],
            0.0)                                                   # (Ch, HW)

        # Store the interior rows (lane-aligned: LPAD + W is a multiple of 128).
        fbuf_ref[:, LPAD + W:LPAD + W + HW] = h1

        # ---- conv3x3 (C/2 -> C/2), padding=1, + ReLU : 9 shifted matmuls ---
        acc = jnp.zeros((Ch, HW), f32)
        for dy in range(3):
            for dx in range(3):
                off = LPAD + dy * W + dx - 1          # static lane offset
                win = fbuf_ref[:, off:off + HW]       # (Ch, HW) shifted window
                if dx == 0:
                    win = win * mask_l
                elif dx == 2:
                    win = win * mask_r
                acc = acc + jnp.dot(w2_ref[l, dy, dx], win,
                                    preferred_element_type=f32)
        h2 = jnp.maximum(acc + b2_ref[l], 0.0)                     # (Ch, HW)

        # ---- conv1x1 (C/2 -> C) + bias + residual add ----------------------
        cur = cur + jnp.dot(w3_ref[l], h2, preferred_element_type=f32) \
                  + b3_ref[l]

    o_ref[0] = cur


def elic_residual_block(x, params):
    """x: (N, C, H, W) float32; params: stacked per-layer Conv2d weights."""
    N, C, H, W = x.shape
    Ch = C // 2
    HW = H * W
    L = params["w1"].shape[0]

    # Left pad so that the interior store starts at a 128-lane-aligned offset.
    LPAD = 128 - (W % 128) if (W % 128) != 0 else 128
    FW = LPAD + (H + 2) * W + 1       # flat padded-buffer width

    # --- weight / bias reshapes (done once, outside the kernel) -------------
    w1 = params["w1"].reshape(L, Ch, C)                       # (L, out, in)
    w2 = jnp.transpose(params["w2"], (0, 3, 4, 1, 2))         # (L, ky, kx, out, in)
    w3 = params["w3"].reshape(L, C, Ch)                       # (L, out, in)
    b1 = params["b1"].reshape(L, Ch, 1)
    b2 = params["b2"].reshape(L, Ch, 1)
    b3 = params["b3"].reshape(L, C, 1)

    # Column masks for the wrap-around taps of the 3x3 conv.
    col = jnp.arange(HW, dtype=jnp.int32) % W
    mask_l = (col != 0).astype(jnp.float32).reshape(1, HW)
    mask_r = (col != (W - 1)).astype(jnp.float32).reshape(1, HW)

    xf = x.reshape(N, C, HW)          # lane-dense activation layout

    kernel = functools.partial(_elic_block_kernel, C=C, H=H, W=W, LPAD=LPAD)
    full = lambda shape: pl.BlockSpec(shape, lambda n: (0,) * len(shape))

    out = pl.pallas_call(
        kernel,
        out_shape=jax.ShapeDtypeStruct((N, C, HW), jnp.float32),
        grid_spec=pltpu.PrefetchScalarGridSpec(
            num_scalar_prefetch=0,
            grid=(N,),
            in_specs=[
                pl.BlockSpec((1, C, HW), lambda n: (n, 0, 0)),   # x
                full((L, Ch, C)),                                # w1
                full((L, Ch, 1)),                                # b1
                full((L, 3, 3, Ch, Ch)),                         # w2
                full((L, Ch, 1)),                                # b2
                full((L, C, Ch)),                                # w3
                full((L, C, 1)),                                 # b3
                full((1, HW)),                                   # mask_l
                full((1, HW)),                                   # mask_r
            ],
            out_specs=pl.BlockSpec((1, C, HW), lambda n: (n, 0, 0)),
            scratch_shapes=[pltpu.VMEM((Ch, FW), jnp.float32)],
        ),
        compiler_params=pltpu.CompilerParams(
            dimension_semantics=("parallel",)),
    )(xf, w1, b1, w2, b2, w3, b3, mask_l, mask_r)

    return out.reshape(N, C, H, W)


# ------------------------- pure-JAX reference ---------------------------- #
def _conv2d(x, w, b, pad):
    y = lax.conv_general_dilated(
        x, w, window_strides=(1, 1), padding=[(pad, pad), (pad, pad)],
        dimension_numbers=("NCHW", "OIHW", "NCHW"))
    return y + b[None, :, None, None]


def reference(x, params):
    L = params["w1"].shape[0]
    for l in range(L):
        h = jnp.maximum(_conv2d(x, params["w1"][l], params["b1"][l], 0), 0.0)
        h = jnp.maximum(_conv2d(h, params["w2"][l], params["b2"][l], 1), 0.0)
        h = _conv2d(h, params["w3"][l], params["b3"][l], 0)
        x = x + h
    return x


if __name__ == "__main__":
    N, C, H, W, L = 2, 4, 16, 16, 3
    Ch = C // 2

    key = jax.random.PRNGKey(0)
    keys = jax.random.split(key, 7)
    x = jax.random.normal(keys[0], (N, C, H, W), jnp.float32)

    # Deterministic synthetic parameters (Conv2d shapes: (out, in, kH, kW)).
    params = {
        "w1": jax.random.normal(keys[1], (L, Ch, C, 1, 1), jnp.float32) * 0.2,
        "b1": jax.random.normal(keys[2], (L, Ch), jnp.float32) * 0.1,
        "w2": jax.random.normal(keys[3], (L, Ch, Ch, 3, 3), jnp.float32) * 0.2,
        "b2": jax.random.normal(keys[4], (L, Ch), jnp.float32) * 0.1,
        "w3": jax.random.normal(keys[5], (L, C, Ch, 1, 1), jnp.float32) * 0.2,
        "b3": jax.random.normal(keys[6], (L, C), jnp.float32) * 0.1,
    }

    out = elic_residual_block(x, params)
    out = jax.block_until_ready(out)

    ref = reference(x, params)
    assert out.shape == x.shape and out.dtype == x.dtype
    # Slightly relaxed tolerance: the MXU f32 (multi-pass) matmul path rounds
    # differently from the XLA conv reference's accumulation order.
    np.testing.assert_allclose(np.asarray(out), np.asarray(ref),
                               rtol=1e-3, atol=1e-3)
    print("KERNEL_OK")
</pallas_src>

<mosaic_0001>
module attributes {stable_mosaic.version = 11 : i64} {
  func.func @_elic_block_kernel(%arg0: i32, %arg1: memref<1x4x256xf32, #tpu.memory_space<vmem>>, %arg2: memref<3x2x4xf32, #tpu.memory_space<vmem>>, %arg3: memref<3x2x1xf32, #tpu.memory_space<vmem>>, %arg4: memref<3x3x3x2x2xf32, #tpu.memory_space<vmem>>, %arg5: memref<3x2x1xf32, #tpu.memory_space<vmem>>, %arg6: memref<3x4x2xf32, #tpu.memory_space<vmem>>, %arg7: memref<3x4x1xf32, #tpu.memory_space<vmem>>, %arg8: memref<1x256xf32, #tpu.memory_space<vmem>>, %arg9: memref<1x256xf32, #tpu.memory_space<vmem>>, %arg10: memref<1x4x256xf32, #tpu.memory_space<vmem>>, %arg11: memref<2x401xf32, #tpu.memory_space<vmem>>) attributes {dimension_semantics = [#tpu.dimension_semantics<parallel>], iteration_bounds = array<i64: 2>, scalar_prefetch = 0 : i64, scratch_operands = 1 : i64, tpu.core_type = #tpu.core_type<tc>, window_params = [{transform_indices = @transform_0, window_bounds = array<i64: 1, 4, 256>}, {pipeline_mode = #tpu.pipeline_mode<synchronous>, transform_indices = @transform_1, window_bounds = array<i64: 3, 2, 4>}, {pipeline_mode = #tpu.pipeline_mode<synchronous>, transform_indices = @transform_2, window_bounds = array<i64: 3, 2, 1>}, {pipeline_mode = #tpu.pipeline_mode<synchronous>, transform_indices = @transform_3, window_bounds = array<i64: 3, 3, 3, 2, 2>}, {pipeline_mode = #tpu.pipeline_mode<synchronous>, transform_indices = @transform_4, window_bounds = array<i64: 3, 2, 1>}, {pipeline_mode = #tpu.pipeline_mode<synchronous>, transform_indices = @transform_5, window_bounds = array<i64: 3, 4, 2>}, {pipeline_mode = #tpu.pipeline_mode<synchronous>, transform_indices = @transform_6, window_bounds = array<i64: 3, 4, 1>}, {pipeline_mode = #tpu.pipeline_mode<synchronous>, transform_indices = @transform_7, window_bounds = array<i64: 1, 256>}, {pipeline_mode = #tpu.pipeline_mode<synchronous>, transform_indices = @transform_8, window_bounds = array<i64: 1, 256>}, {transform_indices = @transform_9, window_bounds = array<i64: 1, 4, 256>}]} {
    %cst = arith.constant 0.000000e+00 : f32
    %0 = vector.broadcast %cst : f32 to vector<2x401xf32>
    %c0 = arith.constant 0 : index
    %c0_0 = arith.constant 0 : index
    %1 = vector.load %arg11[%c0, %c0_0] : memref<2x401xf32, #tpu.memory_space<vmem>>, vector<2x401xf32>
    tpu.vector_store %arg11[%c0, %c0_0], %0 {strides = array<i32>} : memref<2x401xf32, #tpu.memory_space<vmem>>, vector<2x401xf32>,
    %c0_1 = arith.constant 0 : index
    %c0_2 = arith.constant 0 : index
    %2 = vector.load %arg8[%c0_1, %c0_2] : memref<1x256xf32, #tpu.memory_space<vmem>>, vector<1x256xf32>
    %c0_3 = arith.constant 0 : index
    %c0_4 = arith.constant 0 : index
    %3 = vector.load %arg9[%c0_3, %c0_4] : memref<1x256xf32, #tpu.memory_space<vmem>>, vector<1x256xf32>
    %c0_5 = arith.constant 0 : index
    %c0_6 = arith.constant 0 : index
    %c0_7 = arith.constant 0 : index
    %4 = vector.load %arg1[%c0_5, %c0_6, %c0_7] : memref<1x4x256xf32, #tpu.memory_space<vmem>>, vector<1x4x256xf32>
    %5 = vector.shape_cast %4 : vector<1x4x256xf32> to vector<4x256xf32>
    %c0_8 = arith.constant 0 : index
    %c0_9 = arith.constant 0 : index
    %c0_10 = arith.constant 0 : index
    %6 = vector.load %arg2[%c0_8, %c0_9, %c0_10] : memref<3x2x4xf32, #tpu.memory_space<vmem>>, vector<1x2x4xf32>
    %7 = vector.shape_cast %6 : vector<1x2x4xf32> to vector<2x4xf32>
    %cst_11 = arith.constant dense<0.000000e+00> : vector<2x256xf32>
    %8 = tpu.matmul %7, %5, %cst_11 {dimension_numbers = #tpu.dot_dimension_numbers<[1], [0], [0], [1], [0, 0, 1, 1], [], []>} : vector<2x4xf32>, vector<4x256xf32>, vector<2x256xf32> -> vector<2x256xf32>
    %c0_12 = arith.constant 0 : index
    %c0_13 = arith.constant 0 : index
    %c0_14 = arith.constant 0 : index
    %9 = vector.load %arg3[%c0_12, %c0_13, %c0_14] : memref<3x2x1xf32, #tpu.memory_space<vmem>>, vector<1x2x1xf32>
    %10 = vector.shape_cast %9 : vector<1x2x1xf32> to vector<2x1xf32>
    %11 = vector.broadcast %10 : vector<2x1xf32> to vector<2x256xf32>
    %12 = arith.addf %8, %11 : vector<2x256xf32>
    %cst_15 = arith.constant 0.000000e+00 : f32
    %13 = vector.broadcast %cst_15 : f32 to vector<2x256xf32>
    %14 = arith.maximumf %12, %13 : vector<2x256xf32>
    %c0_16 = arith.constant 0 : index
    %c128 = arith.constant 128 : index
    %15 = vector.load %arg11[%c0_16, %c128] : memref<2x401xf32, #tpu.memory_space<vmem>>, vector<2x256xf32>
    tpu.vector_store %arg11[%c0_16, %c128], %14 {strides = array<i32>} : memref<2x401xf32, #tpu.memory_space<vmem>>, vector<2x256xf32>,
    %cst_17 = arith.constant 0.000000e+00 : f32
    %16 = vector.broadcast %cst_17 : f32 to vector<2x256xf32>
    %c0_18 = arith.constant 0 : index
    %c111 = arith.constant 111 : index
    %17 = vector.load %arg11[%c0_18, %c111] : memref<2x401xf32, #tpu.memory_space<vmem>>, vector<2x256xf32>
    %18 = vector.broadcast %2 : vector<1x256xf32> to vector<2x256xf32>
    %19 = arith.mulf %17, %18 : vector<2x256xf32>
    %c0_19 = arith.constant 0 : index
    %c0_20 = arith.constant 0 : index
    %c0_21 = arith.constant 0 : index
    %c0_22 = arith.constant 0 : index
    %c0_23 = arith.constant 0 : index
    %20 = vector.load %arg4[%c0_19, %c0_20, %c0_21, %c0_22, %c0_23] : memref<3x3x3x2x2xf32, #tpu.memory_space<vmem>>, vector<1x1x1x2x2xf32>
    %21 = vector.shape_cast %20 : vector<1x1x1x2x2xf32> to vector<2x2xf32>
    %cst_24 = arith.constant dense<0.000000e+00> : vector<2x256xf32>
    %22 = tpu.matmul %21, %19, %cst_24 {dimension_numbers = #tpu.dot_dimension_numbers<[1], [0], [0], [1], [0, 0, 1, 1], [], []>} : vector<2x2xf32>, vector<2x256xf32>, vector<2x256xf32> -> vector<2x256xf32>
    %23 = arith.addf %16, %22 : vector<2x256xf32>
    %c0_25 = arith.constant 0 : index
    %c112 = arith.constant 112 : index
    %24 = vector.load %arg11[%c0_25, %c112] : memref<2x401xf32, #tpu.memory_space<vmem>>, vector<2x256xf32>
    %c0_26 = arith.constant 0 : index
    %c0_27 = arith.constant 0 : index
    %c1 = arith.constant 1 : index
    %c0_28 = arith.constant 0 : index
    %c0_29 = arith.constant 0 : index
    %25 = vector.load %arg4[%c0_26, %c0_27, %c1, %c0_28, %c0_29] : memref<3x3x3x2x2xf32, #tpu.memory_space<vmem>>, vector<1x1x1x2x2xf32>
    %26 = vector.shape_cast %25 : vector<1x1x1x2x2xf32> to vector<2x2xf32>
    %cst_30 = arith.constant dense<0.000000e+00> : vector<2x256xf32>
    %27 = tpu.matmul %26, %24, %cst_30 {dimension_numbers = #tpu.dot_dimension_numbers<[1], [0], [0], [1], [0, 0, 1, 1], [], []>} : vector<2x2xf32>, vector<2x256xf32>, vector<2x256xf32> -> vector<2x256xf32>
    %28 = arith.addf %23, %27 : vector<2x256xf32>
    %c0_31 = arith.constant 0 : index
    %c113 = arith.constant 113 : index
    %29 = vector.load %arg11[%c0_31, %c113] : memref<2x401xf32, #tpu.memory_space<vmem>>, vector<2x256xf32>
    %30 = vector.broadcast %3 : vector<1x256xf32> to vector<2x256xf32>
    %31 = arith.mulf %29, %30 : vector<2x256xf32>
    %c0_32 = arith.constant 0 : index
    %c0_33 = arith.constant 0 : index
    %c2 = arith.constant 2 : index
    %c0_34 = arith.constant 0 : index
    %c0_35 = arith.constant 0 : index
    %32 = vector.load %arg4[%c0_32, %c0_33, %c2, %c0_34, %c0_35] : memref<3x3x3x2x2xf32, #tpu.memory_space<vmem>>, vector<1x1x1x2x2xf32>
    %33 = vector.shape_cast %32 : vector<1x1x1x2x2xf32> to vector<2x2xf32>
    %cst_36 = arith.constant dense<0.000000e+00> : vector<2x256xf32>
    %34 = tpu.matmul %33, %31, %cst_36 {dimension_numbers = #tpu.dot_dimension_numbers<[1], [0], [0], [1], [0, 0, 1, 1], [], []>} : vector<2x2xf32>, vector<2x256xf32>, vector<2x256xf32> -> vector<2x256xf32>
    %35 = arith.addf %28, %34 : vector<2x256xf32>
    %c0_37 = arith.constant 0 : index
    %c127 = arith.constant 127 : index
    %36 = vector.load %arg11[%c0_37, %c127] : memref<2x401xf32, #tpu.memory_space<vmem>>, vector<2x256xf32>
    %37 = vector.broadcast %2 : vector<1x256xf32> to vector<2x256xf32>
    %38 = arith.mulf %36, %37 : vector<2x256xf32>
    %c0_38 = arith.constant 0 : index
    %c1_39 = arith.constant 1 : index
    %c0_40 = arith.constant 0 : index
    %c0_41 = arith.constant 0 : index
    %c0_42 = arith.constant 0 : index
    %39 = vector.load %arg4[%c0_38, %c1_39, %c0_40, %c0_41, %c0_42] : memref<3x3x3x2x2xf32, #tpu.memory_space<vmem>>, vector<1x1x1x2x2xf32>
    %40 = vector.shape_cast %39 : vector<1x1x1x2x2xf32> to vector<2x2xf32>
    %cst_43 = arith.constant dense<0.000000e+00> : vector<2x256xf32>
    %41 = tpu.matmul %40, %38, %cst_43 {dimension_numbers = #tpu.dot_dimension_numbers<[1], [0], [0], [1], [0, 0, 1, 1], [], []>} : vector<2x2xf32>, vector<2x256xf32>, vector<2x256xf32> -> vector<2x256xf32>
    %42 = arith.addf %35, %41 : vector<2x256xf32>
    %c0_44 = arith.constant 0 : index
    %c128_45 = arith.constant 128 : index
    %43 = vector.load %arg11[%c0_44, %c128_45] : memref<2x401xf32, #tpu.memory_space<vmem>>, vector<2x256xf32>
    %c0_46 = arith.constant 0 : index
    %c1_47 = arith.constant 1 : index
    %c1_48 = arith.constant 1 : index
    %c0_49 = arith.constant 0 : index
    %c0_50 = arith.constant 0 : index
    %44 = vector.load %arg4[%c0_46, %c1_47, %c1_48, %c0_49, %c0_50] : memref<3x3x3x2x2xf32, #tpu.memory_space<vmem>>, vector<1x1x1x2x2xf32>
    %45 = vector.shape_cast %44 : vector<1x1x1x2x2xf32> to vector<2x2xf32>
    %cst_51 = arith.constant dense<0.000000e+00> : vector<2x256xf32>
    %46 = tpu.matmul %45, %43, %cst_51 {dimension_numbers = #tpu.dot_dimension_numbers<[1], [0], [0], [1], [0, 0, 1, 1], [], []>} : vector<2x2xf32>, vector<2x256xf32>, vector<2x256xf32> -> vector<2x256xf32>
    %47 = arith.addf %42, %46 : vector<2x256xf32>
    %c0_52 = arith.constant 0 : index
    %c129 = arith.constant 129 : index
    %48 = vector.load %arg11[%c0_52, %c129] : memref<2x401xf32, #tpu.memory_space<vmem>>, vector<2x256xf32>
    %49 = vector.broadcast %3 : vector<1x256xf32> to vector<2x256xf32>
    %50 = arith.mulf %48, %49 : vector<2x256xf32>
    %c0_53 = arith.constant 0 : index
    %c1_54 = arith.constant 1 : index
    %c2_55 = arith.constant 2 : index
    %c0_56 = arith.constant 0 : index
    %c0_57 = arith.constant 0 : index
    %51 = vector.load %arg4[%c0_53, %c1_54, %c2_55, %c0_56, %c0_57] : memref<3x3x3x2x2xf32, #tpu.memory_space<vmem>>, vector<1x1x1x2x2xf32>
    %52 = vector.shape_cast %51 : vector<1x1x1x2x2xf32> to vector<2x2xf32>
    %cst_58 = arith.constant dense<0.000000e+00> : vector<2x256xf32>
    %53 = tpu.matmul %52, %50, %cst_58 {dimension_numbers = #tpu.dot_dimension_numbers<[1], [0], [0], [1], [0, 0, 1, 1], [], []>} : vector<2x2xf32>, vector<2x256xf32>, vector<2x256xf32> -> vector<2x256xf32>
    %54 = arith.addf %47, %53 : vector<2x256xf32>
    %c0_59 = arith.constant 0 : index
    %c143 = arith.constant 143 : index
    %55 = vector.load %arg11[%c0_59, %c143] : memref<2x401xf32, #tpu.memory_space<vmem>>, vector<2x256xf32>
    %56 = vector.broadcast %2 : vector<1x256xf32> to vector<2x256xf32>
    %57 = arith.mulf %55, %56 : vector<2x256xf32>
    %c0_60 = arith.constant 0 : index
    %c2_61 = arith.constant 2 : index
    %c0_62 = arith.constant 0 : index
    %c0_63 = arith.constant 0 : index
    %c0_64 = arith.constant 0 : index
    %58 = vector.load %arg4[%c0_60, %c2_61, %c0_62, %c0_63, %c0_64] : memref<3x3x3x2x2xf32, #tpu.memory_space<vmem>>, vector<1x1x1x2x2xf32>
    %59 = vector.shape_cast %58 : vector<1x1x1x2x2xf32> to vector<2x2xf32>
    %cst_65 = arith.constant dense<0.000000e+00> : vector<2x256xf32>
    %60 = tpu.matmul %59, %57, %cst_65 {dimension_numbers = #tpu.dot_dimension_numbers<[1], [0], [0], [1], [0, 0, 1, 1], [], []>} : vector<2x2xf32>, vector<2x256xf32>, vector<2x256xf32> -> vector<2x256xf32>
    %61 = arith.addf %54, %60 : vector<2x256xf32>
    %c0_66 = arith.constant 0 : index
    %c144 = arith.constant 144 : index
    %62 = vector.load %arg11[%c0_66, %c144] : memref<2x401xf32, #tpu.memory_space<vmem>>, vector<2x256xf32>
    %c0_67 = arith.constant 0 : index
    %c2_68 = arith.constant 2 : index
    %c1_69 = arith.constant 1 : index
    %c0_70 = arith.constant 0 : index
    %c0_71 = arith.constant 0 : index
    %63 = vector.load %arg4[%c0_67, %c2_68, %c1_69, %c0_70, %c0_71] : memref<3x3x3x2x2xf32, #tpu.memory_space<vmem>>, vector<1x1x1x2x2xf32>
    %64 = vector.shape_cast %63 : vector<1x1x1x2x2xf32> to vector<2x2xf32>
    %cst_72 = arith.constant dense<0.000000e+00> : vector<2x256xf32>
    %65 = tpu.matmul %64, %62, %cst_72 {dimension_numbers = #tpu.dot_dimension_numbers<[1], [0], [0], [1], [0, 0, 1, 1], [], []>} : vector<2x2xf32>, vector<2x256xf32>, vector<2x256xf32> -> vector<2x256xf32>
    %66 = arith.addf %61, %65 : vector<2x256xf32>
    %c0_73 = arith.constant 0 : index
    %c145 = arith.constant 145 : index
    %67 = vector.load %arg11[%c0_73, %c145] : memref<2x401xf32, #tpu.memory_space<vmem>>, vector<2x256xf32>
    %68 = vector.broadcast %3 : vector<1x256xf32> to vector<2x256xf32>
    %69 = arith.mulf %67, %68 : vector<2x256xf32>
    %c0_74 = arith.constant 0 : index
    %c2_75 = arith.constant 2 : index
    %c2_76 = arith.constant 2 : index
    %c0_77 = arith.constant 0 : index
    %c0_78 = arith.constant 0 : index
    %70 = vector.load %arg4[%c0_74, %c2_75, %c2_76, %c0_77, %c0_78] : memref<3x3x3x2x2xf32, #tpu.memory_space<vmem>>, vector<1x1x1x2x2xf32>
    %71 = vector.shape_cast %70 : vector<1x1x1x2x2xf32> to vector<2x2xf32>
    %cst_79 = arith.constant dense<0.000000e+00> : vector<2x256xf32>
    %72 = tpu.matmul %71, %69, %cst_79 {dimension_numbers = #tpu.dot_dimension_numbers<[1], [0], [0], [1], [0, 0, 1, 1], [], []>} : vector<2x2xf32>, vector<2x256xf32>, vector<2x256xf32> -> vector<2x256xf32>
    %73 = arith.addf %66, %72 : vector<2x256xf32>
    %c0_80 = arith.constant 0 : index
    %c0_81 = arith.constant 0 : index
    %c0_82 = arith.constant 0 : index
    %74 = vector.load %arg5[%c0_80, %c0_81, %c0_82] : memref<3x2x1xf32, #tpu.memory_space<vmem>>, vector<1x2x1xf32>
    %75 = vector.shape_cast %74 : vector<1x2x1xf32> to vector<2x1xf32>
    %76 = vector.broadcast %75 : vector<2x1xf32> to vector<2x256xf32>
    %77 = arith.addf %73, %76 : vector<2x256xf32>
    %cst_83 = arith.constant 0.000000e+00 : f32
    %78 = vector.broadcast %cst_83 : f32 to vector<2x256xf32>
    %79 = arith.maximumf %77, %78 : vector<2x256xf32>
    %c0_84 = arith.constant 0 : index
    %c0_85 = arith.constant 0 : index
    %c0_86 = arith.constant 0 : index
    %80 = vector.load %arg6[%c0_84, %c0_85, %c0_86] : memref<3x4x2xf32, #tpu.memory_space<vmem>>, vector<1x4x2xf32>
    %81 = vector.shape_cast %80 : vector<1x4x2xf32> to vector<4x2xf32>
    %cst_87 = arith.constant dense<0.000000e+00> : vector<4x256xf32>
    %82 = tpu.matmul %81, %79, %cst_87 {dimension_numbers = #tpu.dot_dimension_numbers<[1], [0], [0], [1], [0, 0, 1, 1], [], []>} : vector<4x2xf32>, vector<2x256xf32>, vector<4x256xf32> -> vector<4x256xf32>
    %83 = arith.addf %5, %82 : vector<4x256xf32>
    %c0_88 = arith.constant 0 : index
    %c0_89 = arith.constant 0 : index
    %c0_90 = arith.constant 0 : index
    %84 = vector.load %arg7[%c0_88, %c0_89, %c0_90] : memref<3x4x1xf32, #tpu.memory_space<vmem>>, vector<1x4x1xf32>
    %85 = vector.shape_cast %84 : vector<1x4x1xf32> to vector<4x1xf32>
    %86 = vector.broadcast %85 : vector<4x1xf32> to vector<4x256xf32>
    %87 = arith.addf %83, %86 : vector<4x256xf32>
    %c1_91 = arith.constant 1 : index
    %c0_92 = arith.constant 0 : index
    %c0_93 = arith.constant 0 : index
    %88 = vector.load %arg2[%c1_91, %c0_92, %c0_93] : memref<3x2x4xf32, #tpu.memory_space<vmem>>, vector<1x2x4xf32>
    %89 = vector.shape_cast %88 : vector<1x2x4xf32> to vector<2x4xf32>
    %cst_94 = arith.constant dense<0.000000e+00> : vector<2x256xf32>
    %90 = tpu.matmul %89, %87, %cst_94 {dimension_numbers = #tpu.dot_dimension_numbers<[1], [0], [0], [1], [0, 0, 1, 1], [], []>} : vector<2x4xf32>, vector<4x256xf32>, vector<2x256xf32> -> vector<2x256xf32>
    %c1_95 = arith.constant 1 : index
    %c0_96 = arith.constant 0 : index
    %c0_97 = arith.constant 0 : index
    %91 = vector.load %arg3[%c1_95, %c0_96, %c0_97] : memref<3x2x1xf32, #tpu.memory_space<vmem>>, vector<1x2x1xf32>
    %92 = vector.shape_cast %91 : vector<1x2x1xf32> to vector<2x1xf32>
    %93 = vector.broadcast %92 : vector<2x1xf32> to vector<2x256xf32>
    %94 = arith.addf %90, %93 : vector<2x256xf32>
    %cst_98 = arith.constant 0.000000e+00 : f32
    %95 = vector.broadcast %cst_98 : f32 to vector<2x256xf32>
    %96 = arith.maximumf %94, %95 : vector<2x256xf32>
    %c0_99 = arith.constant 0 : index
    %c128_100 = arith.constant 128 : index
    %97 = vector.load %arg11[%c0_99, %c128_100] : memref<2x401xf32, #tpu.memory_space<vmem>>, vector<2x256xf32>
    tpu.vector_store %arg11[%c0_99, %c128_100], %96 {strides = array<i32>} : memref<2x401xf32, #tpu.memory_space<vmem>>, vector<2x256xf32>,
    %cst_101 = arith.constant 0.000000e+00 : f32
    %98 = vector.broadcast %cst_101 : f32 to vector<2x256xf32>
    %c0_102 = arith.constant 0 : index
    %c111_103 = arith.constant 111 : index
    %99 = vector.load %arg11[%c0_102, %c111_103] : memref<2x401xf32, #tpu.memory_space<vmem>>, vector<2x256xf32>
    %100 = vector.broadcast %2 : vector<1x256xf32> to vector<2x256xf32>
    %101 = arith.mulf %99, %100 : vector<2x256xf32>
    %c1_104 = arith.constant 1 : index
    %c0_105 = arith.constant 0 : index
    %c0_106 = arith.constant 0 : index
    %c0_107 = arith.constant 0 : index
    %c0_108 = arith.constant 0 : index
    %102 = vector.load %arg4[%c1_104, %c0_105, %c0_106, %c0_107, %c0_108] : memref<3x3x3x2x2xf32, #tpu.memory_space<vmem>>, vector<1x1x1x2x2xf32>
    %103 = vector.shape_cast %102 : vector<1x1x1x2x2xf32> to vector<2x2xf32>
    %cst_109 = arith.constant dense<0.000000e+00> : vector<2x256xf32>
    %104 = tpu.matmul %103, %101, %cst_109 {dimension_numbers = #tpu.dot_dimension_numbers<[1], [0], [0], [1], [0, 0, 1, 1], [], []>} : vector<2x2xf32>, vector<2x256xf32>, vector<2x256xf32> -> vector<2x256xf32>
    %105 = arith.addf %98, %104 : vector<2x256xf32>
    %c0_110 = arith.constant 0 : index
    %c112_111 = arith.constant 112 : index
    %106 = vector.load %arg11[%c0_110, %c112_111] : memref<2x401xf32, #tpu.memory_space<vmem>>, vector<2x256xf32>
    %c1_112 = arith.constant 1 : index
    %c0_113 = arith.constant 0 : index
    %c1_114 = arith.constant 1 : index
    %c0_115 = arith.constant 0 : index
    %c0_116 = arith.constant 0 : index
    %107 = vector.load %arg4[%c1_112, %c0_113, %c1_114, %c0_115, %c0_116] : memref<3x3x3x2x2xf32, #tpu.memory_space<vmem>>, vector<1x1x1x2x2xf32>
    %108 = vector.shape_cast %107 : vector<1x1x1x2x2xf32> to vector<2x2xf32>
    %cst_117 = arith.constant dense<0.000000e+00> : vector<2x256xf32>
    %109 = tpu.matmul %108, %106, %cst_117 {dimension_numbers = #tpu.dot_dimension_numbers<[1], [0], [0], [1], [0, 0, 1, 1], [], []>} : vector<2x2xf32>, vector<2x256xf32>, vector<2x256xf32> -> vector<2x256xf32>
    %110 = arith.addf %105, %109 : vector<2x256xf32>
    %c0_118 = arith.constant 0 : index
    %c113_119 = arith.constant 113 : index
    %111 = vector.load %arg11[%c0_118, %c113_119] : memref<2x401xf32, #tpu.memory_space<vmem>>, vector<2x256xf32>
    %112 = vector.broadcast %3 : vector<1x256xf32> to vector<2x256xf32>
    %113 = arith.mulf %111, %112 : vector<2x256xf32>
    %c1_120 = arith.constant 1 : index
    %c0_121 = arith.constant 0 : index
    %c2_122 = arith.constant 2 : index
    %c0_123 = arith.constant 0 : index
    %c0_124 = arith.constant 0 : index
    %114 = vector.load %arg4[%c1_120, %c0_121, %c2_122, %c0_123, %c0_124] : memref<3x3x3x2x2xf32, #tpu.memory_space<vmem>>, vector<1x1x1x2x2xf32>
    %115 = vector.shape_cast %114 : vector<1x1x1x2x2xf32> to vector<2x2xf32>
    %cst_125 = arith.constant dense<0.000000e+00> : vector<2x256xf32>
    %116 = tpu.matmul %115, %113, %cst_125 {dimension_numbers = #tpu.dot_dimension_numbers<[1], [0], [0], [1], [0, 0, 1, 1], [], []>} : vector<2x2xf32>, vector<2x256xf32>, vector<2x256xf32> -> vector<2x256xf32>
    %117 = arith.addf %110, %116 : vector<2x256xf32>
    %c0_126 = arith.constant 0 : index
    %c127_127 = arith.constant 127 : index
    %118 = vector.load %arg11[%c0_126, %c127_127] : memref<2x401xf32, #tpu.memory_space<vmem>>, vector<2x256xf32>
    %119 = vector.broadcast %2 : vector<1x256xf32> to vector<2x256xf32>
    %120 = arith.mulf %118, %119 : vector<2x256xf32>
    %c1_128 = arith.constant 1 : index
    %c1_129 = arith.constant 1 : index
    %c0_130 = arith.constant 0 : index
    %c0_131 = arith.constant 0 : index
    %c0_132 = arith.constant 0 : index
    %121 = vector.load %arg4[%c1_128, %c1_129, %c0_130, %c0_131, %c0_132] : memref<3x3x3x2x2xf32, #tpu.memory_space<vmem>>, vector<1x1x1x2x2xf32>
    %122 = vector.shape_cast %121 : vector<1x1x1x2x2xf32> to vector<2x2xf32>
    %cst_133 = arith.constant dense<0.000000e+00> : vector<2x256xf32>
    %123 = tpu.matmul %122, %120, %cst_133 {dimension_numbers = #tpu.dot_dimension_numbers<[1], [0], [0], [1], [0, 0, 1, 1], [], []>} : vector<2x2xf32>, vector<2x256xf32>, vector<2x256xf32> -> vector<2x256xf32>
    %124 = arith.addf %117, %123 : vector<2x256xf32>
    %c0_134 = arith.constant 0 : index
    %c128_135 = arith.constant 128 : index
    %125 = vector.load %arg11[%c0_134, %c128_135] : memref<2x401xf32, #tpu.memory_space<vmem>>, vector<2x256xf32>
    %c1_136 = arith.constant 1 : index
    %c1_137 = arith.constant 1 : index
    %c1_138 = arith.constant 1 : index
    %c0_139 = arith.constant 0 : index
    %c0_140 = arith.constant 0 : index
    %126 = vector.load %arg4[%c1_136, %c1_137, %c1_138, %c0_139, %c0_140] : memref<3x3x3x2x2xf32, #tpu.memory_space<vmem>>, vector<1x1x1x2x2xf32>
    %127 = vector.shape_cast %126 : vector<1x1x1x2x2xf32> to vector<2x2xf32>
    %cst_141 = arith.constant dense<0.000000e+00> : vector<2x256xf32>
    %128 = tpu.matmul %127, %125, %cst_141 {dimension_numbers = #tpu.dot_dimension_numbers<[1], [0], [0], [1], [0, 0, 1, 1], [], []>} : vector<2x2xf32>, vector<2x256xf32>, vector<2x256xf32> -> vector<2x256xf32>
    %129 = arith.addf %124, %128 : vector<2x256xf32>
    %c0_142 = arith.constant 0 : index
    %c129_143 = arith.constant 129 : index
    %130 = vector.load %arg11[%c0_142, %c129_143] : memref<2x401xf32, #tpu.memory_space<vmem>>, vector<2x256xf32>
    %131 = vector.broadcast %3 : vector<1x256xf32> to vector<2x256xf32>
    %132 = arith.mulf %130, %131 : vector<2x256xf32>
    %c1_144 = arith.constant 1 : index
    %c1_145 = arith.constant 1 : index
    %c2_146 = arith.constant 2 : index
    %c0_147 = arith.constant 0 : index
    %c0_148 = arith.constant 0 : index
    %133 = vector.load %arg4[%c1_144, %c1_145, %c2_146, %c0_147, %c0_148] : memref<3x3x3x2x2xf32, #tpu.memory_space<vmem>>, vector<1x1x1x2x2xf32>
    %134 = vector.shape_cast %133 : vector<1x1x1x2x2xf32> to vector<2x2xf32>
    %cst_149 = arith.constant dense<0.000000e+00> : vector<2x256xf32>
    %135 = tpu.matmul %134, %132, %cst_149 {dimension_numbers = #tpu.dot_dimension_numbers<[1], [0], [0], [1], [0, 0, 1, 1], [], []>} : vector<2x2xf32>, vector<2x256xf32>, vector<2x256xf32> -> vector<2x256xf32>
    %136 = arith.addf %129, %135 : vector<2x256xf32>
    %c0_150 = arith.constant 0 : index
    %c143_151 = arith.constant 143 : index
    %137 = vector.load %arg11[%c0_150, %c143_151] : memref<2x401xf32, #tpu.memory_space<vmem>>, vector<2x256xf32>
    %138 = vector.broadcast %2 : vector<1x256xf32> to vector<2x256xf32>
    %139 = arith.mulf %137, %138 : vector<2x256xf32>
    %c1_152 = arith.constant 1 : index
    %c2_153 = arith.constant 2 : index
    %c0_154 = arith.constant 0 : index
    %c0_155 = arith.constant 0 : index
    %c0_156 = arith.constant 0 : index
    %140 = vector.load %arg4[%c1_152, %c2_153, %c0_154, %c0_155, %c0_156] : memref<3x3x3x2x2xf32, #tpu.memory_space<vmem>>, vector<1x1x1x2x2xf32>
    %141 = vector.shape_cast %140 : vector<1x1x1x2x2xf32> to vector<2x2xf32>
    %cst_157 = arith.constant dense<0.000000e+00> : vector<2x256xf32>
    %142 = tpu.matmul %141, %139, %cst_157 {dimension_numbers = #tpu.dot_dimension_numbers<[1], [0], [0], [1], [0, 0, 1, 1], [], []>} : vector<2x2xf32>, vector<2x256xf32>, vector<2x256xf32> -> vector<2x256xf32>
    %143 = arith.addf %136, %142 : vector<2x256xf32>
    %c0_158 = arith.constant 0 : index
    %c144_159 = arith.constant 144 : index
    %144 = vector.load %arg11[%c0_158, %c144_159] : memref<2x401xf32, #tpu.memory_space<vmem>>, vector<2x256xf32>
    %c1_160 = arith.constant 1 : index
    %c2_161 = arith.constant 2 : index
    %c1_162 = arith.constant 1 : index
    %c0_163 = arith.constant 0 : index
    %c0_164 = arith.constant 0 : index
    %145 = vector.load %arg4[%c1_160, %c2_161, %c1_162, %c0_163, %c0_164] : memref<3x3x3x2x2xf32, #tpu.memory_space<vmem>>, vector<1x1x1x2x2xf32>
    %146 = vector.shape_cast %145 : vector<1x1x1x2x2xf32> to vector<2x2xf32>
    %cst_165 = arith.constant dense<0.000000e+00> : vector<2x256xf32>
    %147 = tpu.matmul %146, %144, %cst_165 {dimension_numbers = #tpu.dot_dimension_numbers<[1], [0], [0], [1], [0, 0, 1, 1], [], []>} : vector<2x2xf32>, vector<2x256xf32>, vector<2x256xf32> -> vector<2x256xf32>
    %148 = arith.addf %143, %147 : vector<2x256xf32>
    %c0_166 = arith.constant 0 : index
    %c145_167 = arith.constant 145 : index
    %149 = vector.load %arg11[%c0_166, %c145_167] : memref<2x401xf32, #tpu.memory_space<vmem>>, vector<2x256xf32>
    %150 = vector.broadcast %3 : vector<1x256xf32> to vector<2x256xf32>
    %151 = arith.mulf %149, %150 : vector<2x256xf32>
    %c1_168 = arith.constant 1 : index
    %c2_169 = arith.constant 2 : index
    %c2_170 = arith.constant 2 : index
    %c0_171 = arith.constant 0 : index
    %c0_172 = arith.constant 0 : index
    %152 = vector.load %arg4[%c1_168, %c2_169, %c2_170, %c0_171, %c0_172] : memref<3x3x3x2x2xf32, #tpu.memory_space<vmem>>, vector<1x1x1x2x2xf32>
    %153 = vector.shape_cast %152 : vector<1x1x1x2x2xf32> to vector<2x2xf32>
    %cst_173 = arith.constant dense<0.000000e+00> : vector<2x256xf32>
    %154 = tpu.matmul %153, %151, %cst_173 {dimension_numbers = #tpu.dot_dimension_numbers<[1], [0], [0], [1], [0, 0, 1, 1], [], []>} : vector<2x2xf32>, vector<2x256xf32>, vector<2x256xf32> -> vector<2x256xf32>
    %155 = arith.addf %148, %154 : vector<2x256xf32>
    %c1_174 = arith.constant 1 : index
    %c0_175 = arith.constant 0 : index
    %c0_176 = arith.constant 0 : index
    %156 = vector.load %arg5[%c1_174, %c0_175, %c0_176] : memref<3x2x1xf32, #tpu.memory_space<vmem>>, vector<1x2x1xf32>
    %157 = vector.shape_cast %156 : vector<1x2x1xf32> to vector<2x1xf32>
    %158 = vector.broadcast %157 : vector<2x1xf32> to vector<2x256xf32>
    %159 = arith.addf %155, %158 : vector<2x256xf32>
    %cst_177 = arith.constant 0.000000e+00 : f32
    %160 = vector.broadcast %cst_177 : f32 to vector<2x256xf32>
    %161 = arith.maximumf %159, %160 : vector<2x256xf32>
    %c1_178 = arith.constant 1 : index
    %c0_179 = arith.constant 0 : index
    %c0_180 = arith.constant 0 : index
    %162 = vector.load %arg6[%c1_178, %c0_179, %c0_180] : memref<3x4x2xf32, #tpu.memory_space<vmem>>, vector<1x4x2xf32>
    %163 = vector.shape_cast %162 : vector<1x4x2xf32> to vector<4x2xf32>
    %cst_181 = arith.constant dense<0.000000e+00> : vector<4x256xf32>
    %164 = tpu.matmul %163, %161, %cst_181 {dimension_numbers = #tpu.dot_dimension_numbers<[1], [0], [0], [1], [0, 0, 1, 1], [], []>} : vector<4x2xf32>, vector<2x256xf32>, vector<4x256xf32> -> vector<4x256xf32>
    %165 = arith.addf %87, %164 : vector<4x256xf32>
    %c1_182 = arith.constant 1 : index
    %c0_183 = arith.constant 0 : index
    %c0_184 = arith.constant 0 : index
    %166 = vector.load %arg7[%c1_182, %c0_183, %c0_184] : memref<3x4x1xf32, #tpu.memory_space<vmem>>, vector<1x4x1xf32>
    %167 = vector.shape_cast %166 : vector<1x4x1xf32> to vector<4x1xf32>
    %168 = vector.broadcast %167 : vector<4x1xf32> to vector<4x256xf32>
    %169 = arith.addf %165, %168 : vector<4x256xf32>
    %c2_185 = arith.constant 2 : index
    %c0_186 = arith.constant 0 : index
    %c0_187 = arith.constant 0 : index
    %170 = vector.load %arg2[%c2_185, %c0_186, %c0_187] : memref<3x2x4xf32, #tpu.memory_space<vmem>>, vector<1x2x4xf32>
    %171 = vector.shape_cast %170 : vector<1x2x4xf32> to vector<2x4xf32>
    %cst_188 = arith.constant dense<0.000000e+00> : vector<2x256xf32>
    %172 = tpu.matmul %171, %169, %cst_188 {dimension_numbers = #tpu.dot_dimension_numbers<[1], [0], [0], [1], [0, 0, 1, 1], [], []>} : vector<2x4xf32>, vector<4x256xf32>, vector<2x256xf32> -> vector<2x256xf32>
    %c2_189 = arith.constant 2 : index
    %c0_190 = arith.constant 0 : index
    %c0_191 = arith.constant 0 : index
    %173 = vector.load %arg3[%c2_189, %c0_190, %c0_191] : memref<3x2x1xf32, #tpu.memory_space<vmem>>, vector<1x2x1xf32>
    %174 = vector.shape_cast %173 : vector<1x2x1xf32> to vector<2x1xf32>
    %175 = vector.broadcast %174 : vector<2x1xf32> to vector<2x256xf32>
    %176 = arith.addf %172, %175 : vector<2x256xf32>
    %cst_192 = arith.constant 0.000000e+00 : f32
    %177 = vector.broadcast %cst_192 : f32 to vector<2x256xf32>
    %178 = arith.maximumf %176, %177 : vector<2x256xf32>
    %c0_193 = arith.constant 0 : index
    %c128_194 = arith.constant 128 : index
    %179 = vector.load %arg11[%c0_193, %c128_194] : memref<2x401xf32, #tpu.memory_space<vmem>>, vector<2x256xf32>
    tpu.vector_store %arg11[%c0_193, %c128_194], %178 {strides = array<i32>} : memref<2x401xf32, #tpu.memory_space<vmem>>, vector<2x256xf32>,
    %cst_195 = arith.constant 0.000000e+00 : f32
    %180 = vector.broadcast %cst_195 : f32 to vector<2x256xf32>
    %c0_196 = arith.constant 0 : index
    %c111_197 = arith.constant 111 : index
    %181 = vector.load %arg11[%c0_196, %c111_197] : memref<2x401xf32, #tpu.memory_space<vmem>>, vector<2x256xf32>
    %182 = vector.broadcast %2 : vector<1x256xf32> to vector<2x256xf32>
    %183 = arith.mulf %181, %182 : vector<2x256xf32>
    %c2_198 = arith.constant 2 : index
    %c0_199 = arith.constant 0 : index
    %c0_200 = arith.constant 0 : index
    %c0_201 = arith.constant 0 : index
    %c0_202 = arith.constant 0 : index
    %184 = vector.load %arg4[%c2_198, %c0_199, %c0_200, %c0_201, %c0_202] : memref<3x3x3x2x2xf32, #tpu.memory_space<vmem>>, vector<1x1x1x2x2xf32>
    %185 = vector.shape_cast %184 : vector<1x1x1x2x2xf32> to vector<2x2xf32>
    %cst_203 = arith.constant dense<0.000000e+00> : vector<2x256xf32>
    %186 = tpu.matmul %185, %183, %cst_203 {dimension_numbers = #tpu.dot_dimension_numbers<[1], [0], [0], [1], [0, 0, 1, 1], [], []>} : vector<2x2xf32>, vector<2x256xf32>, vector<2x256xf32> -> vector<2x256xf32>
    %187 = arith.addf %180, %186 : vector<2x256xf32>
    %c0_204 = arith.constant 0 : index
    %c112_205 = arith.constant 112 : index
    %188 = vector.load %arg11[%c0_204, %c112_205] : memref<2x401xf32, #tpu.memory_space<vmem>>, vector<2x256xf32>
    %c2_206 = arith.constant 2 : index
    %c0_207 = arith.constant 0 : index
    %c1_208 = arith.constant 1 : index
    %c0_209 = arith.constant 0 : index
    %c0_210 = arith.constant 0 : index
    %189 = vector.load %arg4[%c2_206, %c0_207, %c1_208, %c0_209, %c0_210] : memref<3x3x3x2x2xf32, #tpu.memory_space<vmem>>, vector<1x1x1x2x2xf32>
    %190 = vector.shape_cast %189 : vector<1x1x1x2x2xf32> to vector<2x2xf32>
    %cst_211 = arith.constant dense<0.000000e+00> : vector<2x256xf32>
    %191 = tpu.matmul %190, %188, %cst_211 {dimension_numbers = #tpu.dot_dimension_numbers<[1], [0], [0], [1], [0, 0, 1, 1], [], []>} : vector<2x2xf32>, vector<2x256xf32>, vector<2x256xf32> -> vector<2x256xf32>
    %192 = arith.addf %187, %191 : vector<2x256xf32>
    %c0_212 = arith.constant 0 : index
    %c113_213 = arith.constant 113 : index
    %193 = vector.load %arg11[%c0_212, %c113_213] : memref<2x401xf32, #tpu.memory_space<vmem>>, vector<2x256xf32>
    %194 = vector.broadcast %3 : vector<1x256xf32> to vector<2x256xf32>
    %195 = arith.mulf %193, %194 : vector<2x256xf32>
    %c2_214 = arith.constant 2 : index
    %c0_215 = arith.constant 0 : index
    %c2_216 = arith.constant 2 : index
    %c0_217 = arith.constant 0 : index
    %c0_218 = arith.constant 0 : index
    %196 = vector.load %arg4[%c2_214, %c0_215, %c2_216, %c0_217, %c0_218] : memref<3x3x3x2x2xf32, #tpu.memory_space<vmem>>, vector<1x1x1x2x2xf32>
    %197 = vector.shape_cast %196 : vector<1x1x1x2x2xf32> to vector<2x2xf32>
    %cst_219 = arith.constant dense<0.000000e+00> : vector<2x256xf32>
    %198 = tpu.matmul %197, %195, %cst_219 {dimension_numbers = #tpu.dot_dimension_numbers<[1], [0], [0], [1], [0, 0, 1, 1], [], []>} : vector<2x2xf32>, vector<2x256xf32>, vector<2x256xf32> -> vector<2x256xf32>
    %199 = arith.addf %192, %198 : vector<2x256xf32>
    %c0_220 = arith.constant 0 : index
    %c127_221 = arith.constant 127 : index
    %200 = vector.load %arg11[%c0_220, %c127_221] : memref<2x401xf32, #tpu.memory_space<vmem>>, vector<2x256xf32>
    %201 = vector.broadcast %2 : vector<1x256xf32> to vector<2x256xf32>
    %202 = arith.mulf %200, %201 : vector<2x256xf32>
    %c2_222 = arith.constant 2 : index
    %c1_223 = arith.constant 1 : index
    %c0_224 = arith.constant 0 : index
    %c0_225 = arith.constant 0 : index
    %c0_226 = arith.constant 0 : index
    %203 = vector.load %arg4[%c2_222, %c1_223, %c0_224, %c0_225, %c0_226] : memref<3x3x3x2x2xf32, #tpu.memory_space<vmem>>, vector<1x1x1x2x2xf32>
    %204 = vector.shape_cast %203 : vector<1x1x1x2x2xf32> to vector<2x2xf32>
    %cst_227 = arith.constant dense<0.000000e+00> : vector<2x256xf32>
    %205 = tpu.matmul %204, %202, %cst_227 {dimension_numbers = #tpu.dot_dimension_numbers<[1], [0], [0], [1], [0, 0, 1, 1], [], []>} : vector<2x2xf32>, vector<2x256xf32>, vector<2x256xf32> -> vector<2x256xf32>
    %206 = arith.addf %199, %205 : vector<2x256xf32>
    %c0_228 = arith.constant 0 : index
    %c128_229 = arith.constant 128 : index
    %207 = vector.load %arg11[%c0_228, %c128_229] : memref<2x401xf32, #tpu.memory_space<vmem>>, vector<2x256xf32>
    %c2_230 = arith.constant 2 : index
    %c1_231 = arith.constant 1 : index
    %c1_232 = arith.constant 1 : index
    %c0_233 = arith.constant 0 : index
    %c0_234 = arith.constant 0 : index
    %208 = vector.load %arg4[%c2_230, %c1_231, %c1_232, %c0_233, %c0_234] : memref<3x3x3x2x2xf32, #tpu.memory_space<vmem>>, vector<1x1x1x2x2xf32>
    %209 = vector.shape_cast %208 : vector<1x1x1x2x2xf32> to vector<2x2xf32>
    %cst_235 = arith.constant dense<0.000000e+00> : vector<2x256xf32>
    %210 = tpu.matmul %209, %207, %cst_235 {dimension_numbers = #tpu.dot_dimension_numbers<[1], [0], [0], [1], [0, 0, 1, 1], [], []>} : vector<2x2xf32>, vector<2x256xf32>, vector<2x256xf32> -> vector<2x256xf32>
    %211 = arith.addf %206, %210 : vector<2x256xf32>
    %c0_236 = arith.constant 0 : index
    %c129_237 = arith.constant 129 : index
    %212 = vector.load %arg11[%c0_236, %c129_237] : memref<2x401xf32, #tpu.memory_space<vmem>>, vector<2x256xf32>
    %213 = vector.broadcast %3 : vector<1x256xf32> to vector<2x256xf32>
    %214 = arith.mulf %212, %213 : vector<2x256xf32>
    %c2_238 = arith.constant 2 : index
    %c1_239 = arith.constant 1 : index
    %c2_240 = arith.constant 2 : index
    %c0_241 = arith.constant 0 : index
    %c0_242 = arith.constant 0 : index
    %215 = vector.load %arg4[%c2_238, %c1_239, %c2_240, %c0_241, %c0_242] : memref<3x3x3x2x2xf32, #tpu.memory_space<vmem>>, vector<1x1x1x2x2xf32>
    %216 = vector.shape_cast %215 : vector<1x1x1x2x2xf32> to vector<2x2xf32>
    %cst_243 = arith.constant dense<0.000000e+00> : vector<2x256xf32>
    %217 = tpu.matmul %216, %214, %cst_243 {dimension_numbers = #tpu.dot_dimension_numbers<[1], [0], [0], [1], [0, 0, 1, 1], [], []>} : vector<2x2xf32>, vector<2x256xf32>, vector<2x256xf32> -> vector<2x256xf32>
    %218 = arith.addf %211, %217 : vector<2x256xf32>
    %c0_244 = arith.constant 0 : index
    %c143_245 = arith.constant 143 : index
    %219 = vector.load %arg11[%c0_244, %c143_245] : memref<2x401xf32, #tpu.memory_space<vmem>>, vector<2x256xf32>
    %220 = vector.broadcast %2 : vector<1x256xf32> to vector<2x256xf32>
    %221 = arith.mulf %219, %220 : vector<2x256xf32>
    %c2_246 = arith.constant 2 : index
    %c2_247 = arith.constant 2 : index
    %c0_248 = arith.constant 0 : index
    %c0_249 = arith.constant 0 : index
    %c0_250 = arith.constant 0 : index
    %222 = vector.load %arg4[%c2_246, %c2_247, %c0_248, %c0_249, %c0_250] : memref<3x3x3x2x2xf32, #tpu.memory_space<vmem>>, vector<1x1x1x2x2xf32>
    %223 = vector.shape_cast %222 : vector<1x1x1x2x2xf32> to vector<2x2xf32>
    %cst_251 = arith.constant dense<0.000000e+00> : vector<2x256xf32>
    %224 = tpu.matmul %223, %221, %cst_251 {dimension_numbers = #tpu.dot_dimension_numbers<[1], [0], [0], [1], [0, 0, 1, 1], [], []>} : vector<2x2xf32>, vector<2x256xf32>, vector<2x256xf32> -> vector<2x256xf32>
    %225 = arith.addf %218, %224 : vector<2x256xf32>
    %c0_252 = arith.constant 0 : index
    %c144_253 = arith.constant 144 : index
    %226 = vector.load %arg11[%c0_252, %c144_253] : memref<2x401xf32, #tpu.memory_space<vmem>>, vector<2x256xf32>
    %c2_254 = arith.constant 2 : index
    %c2_255 = arith.constant 2 : index
    %c1_256 = arith.constant 1 : index
    %c0_257 = arith.constant 0 : index
    %c0_258 = arith.constant 0 : index
    %227 = vector.load %arg4[%c2_254, %c2_255, %c1_256, %c0_257, %c0_258] : memref<3x3x3x2x2xf32, #tpu.memory_space<vmem>>, vector<1x1x1x2x2xf32>
    %228 = vector.shape_cast %227 : vector<1x1x1x2x2xf32> to vector<2x2xf32>
    %cst_259 = arith.constant dense<0.000000e+00> : vector<2x256xf32>
    %229 = tpu.matmul %228, %226, %cst_259 {dimension_numbers = #tpu.dot_dimension_numbers<[1], [0], [0], [1], [0, 0, 1, 1], [], []>} : vector<2x2xf32>, vector<2x256xf32>, vector<2x256xf32> -> vector<2x256xf32>
    %230 = arith.addf %225, %229 : vector<2x256xf32>
    %c0_260 = arith.constant 0 : index
    %c145_261 = arith.constant 145 : index
    %231 = vector.load %arg11[%c0_260, %c145_261] : memref<2x401xf32, #tpu.memory_space<vmem>>, vector<2x256xf32>
    %232 = vector.broadcast %3 : vector<1x256xf32> to vector<2x256xf32>
    %233 = arith.mulf %231, %232 : vector<2x256xf32>
    %c2_262 = arith.constant 2 : index
    %c2_263 = arith.constant 2 : index
    %c2_264 = arith.constant 2 : index
    %c0_265 = arith.constant 0 : index
    %c0_266 = arith.constant 0 : index
    %234 = vector.load %arg4[%c2_262, %c2_263, %c2_264, %c0_265, %c0_266] : memref<3x3x3x2x2xf32, #tpu.memory_space<vmem>>, vector<1x1x1x2x2xf32>
    %235 = vector.shape_cast %234 : vector<1x1x1x2x2xf32> to vector<2x2xf32>
    %cst_267 = arith.constant dense<0.000000e+00> : vector<2x256xf32>
    %236 = tpu.matmul %235, %233, %cst_267 {dimension_numbers = #tpu.dot_dimension_numbers<[1], [0], [0], [1], [0, 0, 1, 1], [], []>} : vector<2x2xf32>, vector<2x256xf32>, vector<2x256xf32> -> vector<2x256xf32>
    %237 = arith.addf %230, %236 : vector<2x256xf32>
    %c2_268 = arith.constant 2 : index
    %c0_269 = arith.constant 0 : index
    %c0_270 = arith.constant 0 : index
    %238 = vector.load %arg5[%c2_268, %c0_269, %c0_270] : memref<3x2x1xf32, #tpu.memory_space<vmem>>, vector<1x2x1xf32>
    %239 = vector.shape_cast %238 : vector<1x2x1xf32> to vector<2x1xf32>
    %240 = vector.broadcast %239 : vector<2x1xf32> to vector<2x256xf32>
    %241 = arith.addf %237, %240 : vector<2x256xf32>
    %cst_271 = arith.constant 0.000000e+00 : f32
    %242 = vector.broadcast %cst_271 : f32 to vector<2x256xf32>
    %243 = arith.maximumf %241, %242 : vector<2x256xf32>
    %c2_272 = arith.constant 2 : index
    %c0_273 = arith.constant 0 : index
    %c0_274 = arith.constant 0 : index
    %244 = vector.load %arg6[%c2_272, %c0_273, %c0_274] : memref<3x4x2xf32, #tpu.memory_space<vmem>>, vector<1x4x2xf32>
    %245 = vector.shape_cast %244 : vector<1x4x2xf32> to vector<4x2xf32>
    %cst_275 = arith.constant dense<0.000000e+00> : vector<4x256xf32>
    %246 = tpu.matmul %245, %243, %cst_275 {dimension_numbers = #tpu.dot_dimension_numbers<[1], [0], [0], [1], [0, 0, 1, 1], [], []>} : vector<4x2xf32>, vector<2x256xf32>, vector<4x256xf32> -> vector<4x256xf32>
    %247 = arith.addf %169, %246 : vector<4x256xf32>
    %c2_276 = arith.constant 2 : index
    %c0_277 = arith.constant 0 : index
    %c0_278 = arith.constant 0 : index
    %248 = vector.load %arg7[%c2_276, %c0_277, %c0_278] : memref<3x4x1xf32, #tpu.memory_space<vmem>>, vector<1x4x1xf32>
    %249 = vector.shape_cast %248 : vector<1x4x1xf32> to vector<4x1xf32>
    %250 = vector.broadcast %249 : vector<4x1xf32> to vector<4x256xf32>
    %251 = arith.addf %247, %250 : vector<4x256xf32>
    %c0_279 = arith.constant 0 : index
    %c0_280 = arith.constant 0 : index
    %c0_281 = arith.constant 0 : index
    %252 = vector.load %arg10[%c0_279, %c0_280, %c0_281] : memref<1x4x256xf32, #tpu.memory_space<vmem>>, vector<1x4x256xf32>
    %253 = vector.shape_cast %252 : vector<1x4x256xf32> to vector<4x256xf32>
    %254 = vector.shape_cast %251 : vector<4x256xf32> to vector<1x4x256xf32>
    tpu.vector_store %arg10[%c0_279, %c0_280, %c0_281], %254 {strides = array<i32>} : memref<1x4x256xf32, #tpu.memory_space<vmem>>, vector<1x4x256xf32>,
    return
  }
  func.func @transform_0(%arg0: i32) -> (i32, i32, i32) {
    %c0_i32 = arith.constant 0 : i32
    %c0_i32_0 = arith.constant 0 : i32
    %c0_i32_1 = arith.constant 0 : i32
    return %arg0, %c0_i32, %c0_i32_0 : i32, i32, i32
  }
  func.func @transform_1(%arg0: i32) -> (i32, i32, i32) {
    %c0_i32 = arith.constant 0 : i32
    %c0_i32_0 = arith.constant 0 : i32
    %c0_i32_1 = arith.constant 0 : i32
    %c0_i32_2 = arith.constant 0 : i32
    return %c0_i32, %c0_i32_0, %c0_i32_1 : i32, i32, i32
  }
  func.func @transform_2(%arg0: i32) -> (i32, i32, i32) {
    %c0_i32 = arith.constant 0 : i32
    %c0_i32_0 = arith.constant 0 : i32
    %c0_i32_1 = arith.constant 0 : i32
    %c0_i32_2 = arith.constant 0 : i32
    return %c0_i32, %c0_i32_0, %c0_i32_1 : i32, i32, i32
  }
  func.func @transform_3(%arg0: i32) -> (i32, i32, i32, i32, i32) {
    %c0_i32 = arith.constant 0 : i32
    %c0_i32_0 = arith.constant 0 : i32
    %c0_i32_1 = arith.constant 0 : i32
    %c0_i32_2 = arith.constant 0 : i32
    %c0_i32_3 = arith.constant 0 : i32
    %c0_i32_4 = arith.constant 0 : i32
    return %c0_i32, %c0_i32_0, %c0_i32_1, %c0_i32_2, %c0_i32_3 : i32, i32, i32, i32, i32
  }
  func.func @transform_4(%arg0: i32) -> (i32, i32, i32) {
    %c0_i32 = arith.constant 0 : i32
    %c0_i32_0 = arith.constant 0 : i32
    %c0_i32_1 = arith.constant 0 : i32
    %c0_i32_2 = arith.constant 0 : i32
    return %c0_i32, %c0_i32_0, %c0_i32_1 : i32, i32, i32
  }
  func.func @transform_5(%arg0: i32) -> (i32, i32, i32) {
    %c0_i32 = arith.constant 0 : i32
    %c0_i32_0 = arith.constant 0 : i32
    %c0_i32_1 = arith.constant 0 : i32
    %c0_i32_2 = arith.constant 0 : i32
    return %c0_i32, %c0_i32_0, %c0_i32_1 : i32, i32, i32
  }
  func.func @transform_6(%arg0: i32) -> (i32, i32, i32) {
    %c0_i32 = arith.constant 0 : i32
    %c0_i32_0 = arith.constant 0 : i32
    %c0_i32_1 = arith.constant 0 : i32
    %c0_i32_2 = arith.constant 0 : i32
    return %c0_i32, %c0_i32_0, %c0_i32_1 : i32, i32, i32
  }
  func.func @transform_7(%arg0: i32) -> (i32, i32) {
    %c0_i32 = arith.constant 0 : i32
    %c0_i32_0 = arith.constant 0 : i32
    %c0_i32_1 = arith.constant 0 : i32
    return %c0_i32, %c0_i32_0 : i32, i32
  }
  func.func @transform_8(%arg0: i32) -> (i32, i32) {
    %c0_i32 = arith.constant 0 : i32
    %c0_i32_0 = arith.constant 0 : i32
    %c0_i32_1 = arith.constant 0 : i32
    return %c0_i32, %c0_i32_0 : i32, i32
  }
  func.func @transform_9(%arg0: i32) -> (i32, i32, i32) {
    %c0_i32 = arith.constant 0 : i32
    %c0_i32_0 = arith.constant 0 : i32
    %c0_i32_1 = arith.constant 0 : i32
    return %arg0, %c0_i32, %c0_i32_0 : i32, i32, i32
  }
}

</mosaic_0001>

<llo_original>
// kernel: tpu_custom_call.1
$region0: #{tpu_custom_call.1}
  #allocation0 [shape = 'u32[]', space=smem, size = 0x4, offset = 0x4, fixed_abs, tag = 'smem constant byte address 0x4 - core index']
  #allocation1 [shape = 'u32[144,128]{1,0:T(1,128)}', space=vmem, size = 0x12000, scoped, tag = 'internal scratch']
  #allocation2 [shape = 'f32[2,401]{1,0:T(2,128)}', space=vmem, size = 0x1000, scoped, tag = 'scratch operand']
  %s0 = inlined_call_operand.vmem [shape: f32[2,4,256], index: 0, kind: input, shape index: {}]
  %s1 = inlined_call_operand.vmem [shape: f32[3,2,4], index: 1, kind: input, shape index: {}]
  %s2 = inlined_call_operand.vmem [shape: f32[3,2,1], index: 2, kind: input, shape index: {}]
  %s3 = inlined_call_operand.vmem [shape: f32[3,3,3,2,2], index: 3, kind: input, shape index: {}]
  %s4 = inlined_call_operand.vmem [shape: f32[3,2,1], index: 4, kind: input, shape index: {}]
  %s5 = inlined_call_operand.vmem [shape: f32[3,4,2], index: 5, kind: input, shape index: {}]
  %s6 = inlined_call_operand.vmem [shape: f32[3,4,1], index: 6, kind: input, shape index: {}]
  %s7 = inlined_call_operand.vmem [shape: f32[1,256], index: 7, kind: input, shape index: {}]
  %s8 = inlined_call_operand.vmem [shape: f32[1,256], index: 8, kind: input, shape index: {}]
  %s9 = inlined_call_operand.hbm [shape: f32[2,4,256], index: 9, kind: output, shape index: {}]
  %s10 = sld [smem:[#allocation0]]
  $region69: #{tpu_custom_call.1} parent=0
    _
  %s12 = ssub.s32 1, %s10
  %s13 = scalar_select 0, %s12, %s10
  $region1: #{tpu_custom_call.1} parent=0
    #allocation3 [shape = 'u8[8192]{0}', space=vmem, size = 0x2000, scoped, tag = 'output window, operand 0']
    #allocation4 [shape = 's32[2]{0}', space=sflag, size = 0x8, scoped, tag = 'scoped memory for tpu_custom_call.1']
    %14 = vsyncpa [#allocation4], 0
    %s15 = scalar_lea.sflag [#allocation4], 1
    %16 = vsyncpa %s15, 0
    loop: start=0, step=1, limit=4
    $region2: #{tpu_custom_call.1} parent=1 // loop_pre_header
      _
    $region3: #{tpu_custom_call.1} parent=1 // loop_header
      %s18 = sphi 0, %s22
      %p19 = scmp.ge.s32.totalorder %s18, 4
      %s28 = sphi 0, %s30
      %s31 = sphi 0, %s28
      %s32 = sphi 0, %s31
      %s48 = sphi 0, %s32
      %s52 = sphi 0, %s52
      %s54 = sphi 0, %s52
      %s55 = sphi 0, %s54
      %s69 = sphi 0, %s55
      %s73 = sphi 0, %s73
      %s75 = sphi 0, %s73
      %s76 = sphi 0, %s75
      %s90 = sphi 0, %s76
      %s94 = sphi 0, %s94
      %s96 = sphi 0, %s94
      %s97 = sphi 0, %s96
      %s111 = sphi 0, %s97
      %s115 = sphi 0, %s115
      %s117 = sphi 0, %s115
      %s118 = sphi 0, %s117
      %s132 = sphi 0, %s118
      %s136 = sphi 0, %s136
      %s138 = sphi 0, %s136
      %s139 = sphi 0, %s138
      %s153 = sphi 0, %s139
      %s157 = sphi 0, %s157
      %s159 = sphi 0, %s157
      %s160 = sphi 0, %s159
      %s174 = sphi 0, %s160
      %s178 = sphi 0, %s178
      %s180 = sphi 0, %s178
      %s181 = sphi 0, %s180
      %s195 = sphi 0, %s181
      %s199 = sphi 0, %s199
      %s201 = sphi 0, %s199
      %s202 = sphi 0, %s201
      %s216 = sphi 0, %s202
      %s222 = sphi 0, %s224
      %s225 = sphi 0, %s222
      %s226 = sphi 0, %s225
      %s242 = sphi 0, %s226
    $region4: #{tpu_custom_call.1} parent=1 // loop_header_branch
      %21 = sbr.rel (%p19) target = $region8
    $region5: #{tpu_custom_call.1} parent=1 // loop_body
      %s23 = ssub.s32 %s18, 1
      %s24 = ssub.s32 %s18, 2
      %s25 = sadd.s32 %s18, 1
      %s26 = ssub.s32 %s18, %s25
      %p27 = scmp.eq.s32.totalorder %s26, 0
      %s29 = sadd.s32 %s28, 1
      %s30 = scalar_select %p27, %s28, %s29
      %p33 = pneg %p27
      %p34 = scmp.eq.s32.totalorder %s18, 1
      %p35 = por %p33, %p34
      %p36 = scmp.ne.s32.totalorder %s28, %s31
      %p37 = scmp.eq.s32.totalorder %s18, 0
      %p38 = por %p36, %p37
      %p39 = scmp.ne.s32.totalorder %s28, %s31
      %p40 = scmp.eq.s32.totalorder %s23, 1
      %p41 = por %p39, %p40
      %p42 = scmp.ne.s32.totalorder %s31, %s32
      %p43 = scmp.eq.s32.totalorder %s23, 0
      %p44 = por %p42, %p43
      %p45 = scmp.ne.s32.totalorder %s31, %s32
      %p46 = scmp.eq.s32.totalorder %s24, 1
      %p47 = por %p45, %p46
      %p49 = scmp.ne.s32.totalorder %s32, %s48
      %p50 = scmp.eq.s32.totalorder %s24, 0
      %p51 = por %p49, %p50
      %s53 = sadd.s32 %s52, 1
      %p56 = scmp.eq.s32.totalorder %s18, 1
      %p57 = scmp.ne.s32.totalorder %s52, %s54
      %p58 = scmp.eq.s32.totalorder %s18, 0
      %p59 = por %p57, %p58
      %p60 = scmp.ne.s32.totalorder %s52, %s54
      %p61 = scmp.eq.s32.totalorder %s23, 1
      %p62 = por %p60, %p61
      %p63 = scmp.ne.s32.totalorder %s54, %s55
      %p64 = scmp.eq.s32.totalorder %s23, 0
      %p65 = por %p63, %p64
      %p66 = scmp.ne.s32.totalorder %s54, %s55
      %p67 = scmp.eq.s32.totalorder %s24, 1
      %p68 = por %p66, %p67
      %p70 = scmp.ne.s32.totalorder %s55, %s69
      %p71 = scmp.eq.s32.totalorder %s24, 0
      %p72 = por %p70, %p71
      %s74 = sadd.s32 %s73, 1
      %p77 = scmp.eq.s32.totalorder %s18, 1
      %p78 = scmp.ne.s32.totalorder %s73, %s75
      %p79 = scmp.eq.s32.totalorder %s18, 0
      %p80 = por %p78, %p79
      %p81 = scmp.ne.s32.totalorder %s73, %s75
      %p82 = scmp.eq.s32.totalorder %s23, 1
      %p83 = por %p81, %p82
      %p84 = scmp.ne.s32.totalorder %s75, %s76
      %p85 = scmp.eq.s32.totalorder %s23, 0
      %p86 = por %p84, %p85
      %p87 = scmp.ne.s32.totalorder %s75, %s76
      %p88 = scmp.eq.s32.totalorder %s24, 1
      %p89 = por %p87, %p88
      %p91 = scmp.ne.s32.totalorder %s76, %s90
      %p92 = scmp.eq.s32.totalorder %s24, 0
      %p93 = por %p91, %p92
      %s95 = sadd.s32 %s94, 1
      %p98 = scmp.eq.s32.totalorder %s18, 1
      %p99 = scmp.ne.s32.totalorder %s94, %s96
      %p100 = scmp.eq.s32.totalorder %s18, 0
      %p101 = por %p99, %p100
      %p102 = scmp.ne.s32.totalorder %s94, %s96
      %p103 = scmp.eq.s32.totalorder %s23, 1
      %p104 = por %p102, %p103
      %p105 = scmp.ne.s32.totalorder %s96, %s97
      %p106 = scmp.eq.s32.totalorder %s23, 0
      %p107 = por %p105, %p106
      %p108 = scmp.ne.s32.totalorder %s96, %s97
      %p109 = scmp.eq.s32.totalorder %s24, 1
      %p110 = por %p108, %p109
      %p112 = scmp.ne.s32.totalorder %s97, %s111
      %p113 = scmp.eq.s32.totalorder %s24, 0
      %p114 = por %p112, %p113
      %s116 = sadd.s32 %s115, 1
      %p119 = scmp.eq.s32.totalorder %s18, 1
      %p120 = scmp.ne.s32.totalorder %s115, %s117
      %p121 = scmp.eq.s32.totalorder %s18, 0
      %p122 = por %p120, %p121
      %p123 = scmp.ne.s32.totalorder %s115, %s117
      %p124 = scmp.eq.s32.totalorder %s23, 1
      %p125 = por %p123, %p124
      %p126 = scmp.ne.s32.totalorder %s117, %s118
      %p127 = scmp.eq.s32.totalorder %s23, 0
      %p128 = por %p126, %p127
      %p129 = scmp.ne.s32.totalorder %s117, %s118
      %p130 = scmp.eq.s32.totalorder %s24, 1
      %p131 = por %p129, %p130
      %p133 = scmp.ne.s32.totalorder %s118, %s132
      %p134 = scmp.eq.s32.totalorder %s24, 0
      %p135 = por %p133, %p134
      %s137 = sadd.s32 %s136, 1
      %p140 = scmp.eq.s32.totalorder %s18, 1
      %p141 = scmp.ne.s32.totalorder %s136, %s138
      %p142 = scmp.eq.s32.totalorder %s18, 0
      %p143 = por %p141, %p142
      %p144 = scmp.ne.s32.totalorder %s136, %s138
      %p145 = scmp.eq.s32.totalorder %s23, 1
      %p146 = por %p144, %p145
      %p147 = scmp.ne.s32.totalorder %s138, %s139
      %p148 = scmp.eq.s32.totalorder %s23, 0
      %p149 = por %p147, %p148
      %p150 = scmp.ne.s32.totalorder %s138, %s139
      %p151 = scmp.eq.s32.totalorder %s24, 1
      %p152 = por %p150, %p151
      %p154 = scmp.ne.s32.totalorder %s139, %s153
      %p155 = scmp.eq.s32.totalorder %s24, 0
      %p156 = por %p154, %p155
      %s158 = sadd.s32 %s157, 1
      %p161 = scmp.eq.s32.totalorder %s18, 1
      %p162 = scmp.ne.s32.totalorder %s157, %s159
      %p163 = scmp.eq.s32.totalorder %s18, 0
      %p164 = por %p162, %p163
      %p165 = scmp.ne.s32.totalorder %s157, %s159
      %p166 = scmp.eq.s32.totalorder %s23, 1
      %p167 = por %p165, %p166
      %p168 = scmp.ne.s32.totalorder %s159, %s160
      %p169 = scmp.eq.s32.totalorder %s23, 0
      %p170 = por %p168, %p169
      %p171 = scmp.ne.s32.totalorder %s159, %s160
      %p172 = scmp.eq.s32.totalorder %s24, 1
      %p173 = por %p171, %p172
      %p175 = scmp.ne.s32.totalorder %s160, %s174
      %p176 = scmp.eq.s32.totalorder %s24, 0
      %p177 = por %p175, %p176
      %s179 = sadd.s32 %s178, 1
      %p182 = scmp.eq.s32.totalorder %s18, 1
      %p183 = scmp.ne.s32.totalorder %s178, %s180
      %p184 = scmp.eq.s32.totalorder %s18, 0
      %p185 = por %p183, %p184
      %p186 = scmp.ne.s32.totalorder %s178, %s180
      %p187 = scmp.eq.s32.totalorder %s23, 1
      %p188 = por %p186, %p187
      %p189 = scmp.ne.s32.totalorder %s180, %s181
      %p190 = scmp.eq.s32.totalorder %s23, 0
      %p191 = por %p189, %p190
      %p192 = scmp.ne.s32.totalorder %s180, %s181
      %p193 = scmp.eq.s32.totalorder %s24, 1
      %p194 = por %p192, %p193
      %p196 = scmp.ne.s32.totalorder %s181, %s195
      %p197 = scmp.eq.s32.totalorder %s24, 0
      %p198 = por %p196, %p197
      %s200 = sadd.s32 %s199, 1
      %p203 = scmp.eq.s32.totalorder %s18, 1
      %p204 = scmp.ne.s32.totalorder %s199, %s201
      %p205 = scmp.eq.s32.totalorder %s18, 0
      %p206 = por %p204, %p205
      %p207 = scmp.ne.s32.totalorder %s199, %s201
      %p208 = scmp.eq.s32.totalorder %s23, 1
      %p209 = por %p207, %p208
      %p210 = scmp.ne.s32.totalorder %s201, %s202
      %p211 = scmp.eq.s32.totalorder %s23, 0
      %p212 = por %p210, %p211
      %p213 = scmp.ne.s32.totalorder %s201, %s202
      %p214 = scmp.eq.s32.totalorder %s24, 1
      %p215 = por %p213, %p214
      %p217 = scmp.ne.s32.totalorder %s202, %s216
      %p218 = scmp.eq.s32.totalorder %s24, 0
      %p219 = por %p217, %p218
      %s220 = ssub.s32 %s18, %s25
      %p221 = scmp.eq.s32.totalorder %s220, 0
      %s223 = sadd.s32 %s222, 1
      %s224 = scalar_select %p221, %s222, %s223
      %p227 = pneg %p221
      %p228 = scmp.eq.s32.totalorder %s18, 1
      %p229 = por %p227, %p228
      %p230 = scmp.ne.s32.totalorder %s222, %s225
      %p231 = scmp.eq.s32.totalorder %s18, 0
      %p232 = por %p230, %p231
      %p233 = scmp.ne.s32.totalorder %s222, %s225
      %p234 = scmp.eq.s32.totalorder %s23, 1
      %p235 = por %p233, %p234
      %p236 = scmp.ne.s32.totalorder %s225, %s226
      %p237 = scmp.eq.s32.totalorder %s23, 0
      %p238 = por %p236, %p237
      %p239 = scmp.ne.s32.totalorder %s225, %s226
      %p240 = scmp.eq.s32.totalorder %s24, 1
      %p241 = por %p239, %p240
      %p243 = scmp.ne.s32.totalorder %s226, %s242
      %p244 = scmp.eq.s32.totalorder %s24, 0
      %p245 = por %p243, %p244
      %p246 = scmp.le.s32.totalorder 1, %s18
      %p247 = scmp.lt.s32.totalorder %s18, 3
      %p248 = pnand %p246, %p247
      %p249 = pneg %p248
      // Predicated region
      $region9: #{tpu_custom_call.1} parent=5 // pred_check
        _
      $region10: #{tpu_custom_call.1} parent=5 // pred_check_branch
        %251 = sbr.rel (%p248) target = $region12
      $region11: #{tpu_custom_call.1} parent=5 // pred_region
        %s252 = ssub.s32 %s18, 1
        // Predicated region
        $region13: #{tpu_custom_call.1} parent=11 // pred_check
          %p253 = pneg %p65
        $region14: #{tpu_custom_call.1} parent=11 // pred_check_branch
          %255 = sbr.rel (%p253) target = $region16
        $region15: #{tpu_custom_call.1} parent=11 // pred_region
          _
        $region16: #{tpu_custom_call.1} parent=11 // pred_fallthru
          _
        // Predicated region
        $region17: #{tpu_custom_call.1} parent=11 // pred_check
          %p256 = pneg %p86
        $region18: #{tpu_custom_call.1} parent=11 // pred_check_branch
          %258 = sbr.rel (%p256) target = $region20
        $region19: #{tpu_custom_call.1} parent=11 // pred_region
          _
        $region20: #{tpu_custom_call.1} parent=11 // pred_fallthru
          _
        // Predicated region
        $region21: #{tpu_custom_call.1} parent=11 // pred_check
          %p259 = pneg %p107
        $region22: #{tpu_custom_call.1} parent=11 // pred_check_branch
          %261 = sbr.rel (%p259) target = $region24
        $region23: #{tpu_custom_call.1} parent=11 // pred_region
          _
        $region24: #{tpu_custom_call.1} parent=11 // pred_fallthru
          _
        // Predicated region
        $region25: #{tpu_custom_call.1} parent=11 // pred_check
          %p262 = pneg %p128
        $region26: #{tpu_custom_call.1} parent=11 // pred_check_branch
          %264 = sbr.rel (%p262) target = $region28
        $region27: #{tpu_custom_call.1} parent=11 // pred_region
          _
        $region28: #{tpu_custom_call.1} parent=11 // pred_fallthru
          _
        // Predicated region
        $region29: #{tpu_custom_call.1} parent=11 // pred_check
          %p265 = pneg %p149
        $region30: #{tpu_custom_call.1} parent=11 // pred_check_branch
          %267 = sbr.rel (%p265) target = $region32
        $region31: #{tpu_custom_call.1} parent=11 // pred_region
          _
        $region32: #{tpu_custom_call.1} parent=11 // pred_fallthru
          _
        // Predicated region
        $region33: #{tpu_custom_call.1} parent=11 // pred_check
          %p268 = pneg %p170
        $region34: #{tpu_custom_call.1} parent=11 // pred_check_branch
          %270 = sbr.rel (%p268) target = $region36
        $region35: #{tpu_custom_call.1} parent=11 // pred_region
          _
        $region36: #{tpu_custom_call.1} parent=11 // pred_fallthru
          _
        // Predicated region
        $region37: #{tpu_custom_call.1} parent=11 // pred_check
          %p271 = pneg %p191
        $region38: #{tpu_custom_call.1} parent=11 // pred_check_branch
          %273 = sbr.rel (%p271) target = $region40
        $region39: #{tpu_custom_call.1} parent=11 // pred_region
          _
        $region40: #{tpu_custom_call.1} parent=11 // pred_fallthru
          _
        // Predicated region
        $region41: #{tpu_custom_call.1} parent=11 // pred_check
          %p274 = pneg %p212
        $region42: #{tpu_custom_call.1} parent=11 // pred_check_branch
          %276 = sbr.rel (%p274) target = $region44
        $region43: #{tpu_custom_call.1} parent=11 // pred_region
          _
        $region44: #{tpu_custom_call.1} parent=11 // pred_fallthru
          _
      $region12: #{tpu_custom_call.1} parent=5 // pred_fallthru
        _
      %p277 = scmp.lt.s32.totalorder %s18, 2
      // Predicated region
      $region45: #{tpu_custom_call.1} parent=5 // pred_check
        %p278 = pneg %p277
      $region46: #{tpu_custom_call.1} parent=5 // pred_check_branch
        %280 = sbr.rel (%p278) target = $region48
      $region47: #{tpu_custom_call.1} parent=5 // pred_region
        // Predicated region
        $region49: #{tpu_custom_call.1} parent=47 // pred_check
          %p281 = pneg %p38
        $region50: #{tpu_custom_call.1} parent=47 // pred_check_branch
          %283 = sbr.rel (%p281) target = $region52
        $region51: #{tpu_custom_call.1} parent=47 // pred_region
          %p284 = scmp.lt.s32.totalorder %s18, 1
          %s285 = scalar_select %p284, %s18, 1
          %s286 = smul.addr %s285, 2
          %s287 = smul.addr %s286, 4
          %s288 = scalar_lea.vmem %s0, %s287
        $region52: #{tpu_custom_call.1} parent=47 // pred_fallthru
          _
      $region48: #{tpu_custom_call.1} parent=5 // pred_fallthru
        _
      %p289 = scmp.le.s32.totalorder 1, %s18
      %p290 = scmp.lt.s32.totalorder %s18, 3
      %p291 = pnand %p289, %p290
      %p292 = pneg %p291
      // Predicated region
      $region53: #{tpu_custom_call.1} parent=5 // pred_check
        _
      $region54: #{tpu_custom_call.1} parent=5 // pred_check_branch
        %294 = sbr.rel (%p291) target = $region56
      $region55: #{tpu_custom_call.1} parent=5 // pred_region
        %s295 = ssub.s32 %s18, 1
        %p296 = scmp.lt.s32.totalorder %s23, 1
        %s297 = scalar_select %p296, %s23, 1
        %s298 = smul.addr %s297, 2
        %s299 = smul.addr %s298, 4
        %s300 = scalar_lea.vmem %s0, %s299
        %p301 = pneg %p44
        %p302 = pneg %p41
        %p303 = pneg %p65
        %p304 = pneg %p62
        %p305 = pneg %p86
        %p306 = pneg %p83
        %p307 = pneg %p107
        %p308 = pneg %p104
        %p309 = pneg %p128
        %p310 = pneg %p125
        %p311 = pneg %p149
        %p312 = pneg %p146
        %p313 = pneg %p170
        %p314 = pneg %p167
        %p315 = pneg %p191
        %p316 = pneg %p188
        %p317 = pneg %p212
        %p318 = pneg %p209
        %p319 = pneg %p238
        %p320 = pneg %p235
        %s321 = sand.u32 %s225, 1
        %s322 = scalar_lea.sflag [#allocation4], %s321
        %s323 = sand.u32 %s225, 1
        %s324 = smul.addr %s323, 8
        %s325 = scalar_lea.vmem [#allocation3], %s324
        %p326 = scmp.lt.s32.totalorder %s23, 1
        %s327 = scalar_select %p326, %s23, 1
        %s328 = smul.addr %s327, 2
        %s329 = smul.addr %s328, 4
        %s330 = scalar_lea.vmem %s0, %s329
        %vm331 = vcmask 1041408
        %vm332 = vcmask 1043458
        %vm333 = vmor %vm332, %vm331
        %vm334 = vcmask 1045508
        %vm335 = vmor %vm334, %vm333
        %vm336 = vcmask 138246
        %vm337 = vmor %vm336, %vm335
        %338 = vst.msk [vmem:[#allocation2] sm:$0xff] %vm337, 0.0
        %v339 = vld [vmem:[%s7] sm:$0x3]
        %v340 = vld [vmem:[%s8] sm:$0x3]
        %v341 = vld [vmem:[%s330] sm:$0xff]
        %v342 = vld [vmem:[%s1] sm:$0x3]
        %v343 = vld [vmem:[%s2] sm:$0x3]
        %345 = vset.pattern.permute.xlu0 0
        %346 = vperm.xlu0 %345, %v343
        %v347 = vpop.permute.xlu0 %346
        %v350 = vcombine.high %v341, %v341
        %vm351 = vcmask 31744
        %v353 = vsel %vm351, %v342, 0
        %vm355 = vcmask 1043456
        %v356 = vsel %vm355, %v341, 0
        %v358 = vsel %vm355, %v350, 0
        %360 = vmatprep.subr.mxu0 %v358
        %361 = vmatpush1.msra.mxu0 %v356
        %362 = vmatprep.subr.mxu0 0.0
        %363 = vmatpush1.msra.mxu0 0.0
        %364 = vmatprep.subr.mxu0 0.0
        %365 = vmatpush1.msra.mxu0 0.0
        %366 = vmatprep.subr.mxu0 0.0
        %367 = vmatpush1.msra.mxu0 0.0
        %368 = vmatprep.subr.mxu0 0.0
        %369 = vmatpush1.msra.mxu0 0.0
        %370 = vmatprep.subr.mxu0 0.0
        %371 = vmatpush1.msra.mxu0 0.0
        %372 = vmatprep.subr.mxu0 0.0
        %373 = vmatpush1.msra.mxu0 0.0
        %374 = vmatprep.subr.mxu0 0.0
        %375 = vmatpush1.msra.mxu0 0.0
        %376 = vmatprep.subr.mxu0 0.0
        %377 = vmatpush1.msra.mxu0 0.0
        %378 = vmatprep.subr.mxu0 0.0
        %379 = vmatpush1.msra.mxu0 0.0
        %380 = vmatprep.subr.mxu0 0.0
        %381 = vmatpush1.msra.mxu0 0.0
        %382 = vmatprep.subr.mxu0 0.0
        %383 = vmatpush1.msra.mxu0 0.0
        %384 = vmatprep.subr.mxu0 0.0
        %385 = vmatpush1.msra.mxu0 0.0
        %386 = vmatprep.subr.mxu0 0.0
        %387 = vmatpush1.msra.mxu0 0.0
        %388 = vmatprep.subr.mxu0 0.0
        %389 = vmatpush1.msra.mxu0 0.0
        %390 = vmatprep.subr.mxu0 0.0
        %391 = vmatpush1.msra.mxu0 0.0
        %392 = vmatprep.subr.mxu0 0.0
        %393 = vmatpush1.msra.mxu0 0.0
        %394 = vmatprep.subr.mxu0 0.0
        %395 = vmatpush1.msra.mxu0 0.0
        %396 = vmatprep.subr.mxu0 0.0
        %397 = vmatpush1.msra.mxu0 0.0
        %398 = vmatprep.subr.mxu0 0.0
        %399 = vmatpush1.msra.mxu0 0.0
        %400 = vmatprep.subr.mxu0 0.0
        %401 = vmatpush1.msra.mxu0 0.0
        %402 = vmatprep.subr.mxu0 0.0
        %403 = vmatpush1.msra.mxu0 0.0
        %404 = vmatprep.subr.mxu0 0.0
        %405 = vmatpush1.msra.mxu0 0.0
        %406 = vmatprep.subr.mxu0 0.0
        %407 = vmatpush1.msra.mxu0 0.0
        %408 = vmatprep.subr.mxu0 0.0
        %409 = vmatpush1.msra.mxu0 0.0
        %410 = vmatprep.subr.mxu0 0.0
        %411 = vmatpush1.msra.mxu0 0.0
        %412 = vmatprep.subr.mxu0 0.0
        %413 = vmatpush1.msra.mxu0 0.0
        %414 = vmatprep.subr.mxu0 0.0
        %415 = vmatpush1.msra.mxu0 0.0
        %416 = vmatprep.subr.mxu0 0.0
        %417 = vmatpush1.msra.mxu0 0.0
        %418 = vmatprep.subr.mxu0 0.0
        %419 = vmatpush1.msra.mxu0 0.0
        %420 = vmatprep.subr.mxu0 0.0
        %421 = vmatpush1.msra.mxu0 0.0
        %422 = vmatprep.subr.mxu0 0.0
        %423 = vmatpush1.msra.mxu0 0.0
        %424 = vmatprep.mubr.f32.mxu0 0.0
        %425 = vmatmul.mubr.f32.gmra.mrb[0].mxu0 %v353
        %v426 = vpop.f32.mrb[0].mxu0
        %v427 = vadd.f32 %v347, %v426
        %v428 = vpop.f32.mrb[0].mxu0
        %v429 = vadd.f32 %v347, %v428
        %430 = vdwg.mxu0
        %v431 = vmax.f32 %v427, 0.0
        %v432 = vmax.f32 %v429, 0.0
        %v435 = vcombine.low %v431, %v432
        %v437 = vunpack.c.l.s4 1983009808
        %v438 = vunpack.c.0.s8 %v437
        %v439 = vlaneseq
        %v440 = vshrl.u32 %v439, 7
        %v441 = vsub.s32 %v438, %v440
        %v442 = vrot.slane %v435, %v441
        %444 = vst [vmem:[#allocation2 + $0x2] sm:$0xf] %v442
        %v445 = vld [vmem:[#allocation2] sm:$0x3f]
        %v447 = vlaneseq
        %v448 = vshrl.u32 %v447, 7
        %v449 = vsub.s32 0, %v448
        %v450 = vrot.slane %v339, %v449
        %v451 = vlaneseq
        %v452 = vshrl.u32 %v451, 7
        %v453 = vsub.s32 1, %v452
        %v454 = vrot.slane %v339, %v453
        %v455 = vcombine.low %v450, %v454
        %v457 = vunpack.c.l.s4 1983009808
        %v458 = vunpack.c.0.s8 %v457
        %v459 = vlaneseq
        %v460 = vshrl.u32 %v459, 7
        %v461 = vsub.s32 %v458, %v460
        %v462 = vrot.slane %v455, %v461
        %463 = vrot.lane.b32.xlu0 %v462, 111
        %v464 = vpop.permute.xlu0 %463
        %v465 = vrot.slane %v464, 6
        %vm466 = vcmask 908288
        %v467 = vsel %vm466, %v465, %v464
        %v469 = vmul.f32 %v445, %v467
        %v470 = vld [vmem:[%s3] sm:$0x3]
        %s471 = scalar_lea.vmem %s3, 2
        %v472 = vld [vmem:[%s471] sm:$0x3]
        %v474 = vcombine.high %v445, %v445
        %v476 = vunpack.c.l.s4 1983009808
        %v477 = vunpack.c.0.s8 %v476
        %v478 = vlaneseq
        %v479 = vshrl.u32 %v478, 7
        %v480 = vsub.s32 %v477, %v479
        %v481 = vrot.slane %v445, %v480
        %v483 = vunpack.c.l.s4 1983009808
        %v484 = vunpack.c.0.s8 %v483
        %v485 = vlaneseq
        %v486 = vshrl.u32 %v485, 7
        %v487 = vsub.s32 %v484, %v486
        %v488 = vrot.slane %v474, %v487
        %v489 = vcombine.high %v481, %v481
        %490 = vrot.lane.b32.xlu0 %v481, 16
        %v491 = vpop.permute.xlu0 %490
        %492 = vrot.lane.b32.xlu0 %v489, 16
        %v493 = vpop.permute.xlu0 %492
        %494 = vrot.lane.b32.xlu0 %v488, 16
        %v495 = vpop.permute.xlu0 %494
        %vm496 = vcmask 130048
        %v497 = vsel %vm496, %v491, %v493
        %v498 = vsel %vm496, %v493, %v495
        %vm499 = vcmask 15360
        %v501 = vsel %vm499, %v472, 0
        %v503 = vsel %vm331, %v497, 0
        %v505 = vsel %vm331, %v498, 0
        %507 = vmatprep.subr.mxu0 %v505
        %508 = vmatpush1.msra.mxu0 %v503
        %509 = vmatprep.subr.mxu0 0.0
        %510 = vmatpush1.msra.mxu0 0.0
        %511 = vmatprep.subr.mxu0 0.0
        %512 = vmatpush1.msra.mxu0 0.0
        %513 = vmatprep.subr.mxu0 0.0
        %514 = vmatpush1.msra.mxu0 0.0
        %515 = vmatprep.subr.mxu0 0.0
        %516 = vmatpush1.msra.mxu0 0.0
        %517 = vmatprep.subr.mxu0 0.0
        %518 = vmatpush1.msra.mxu0 0.0
        %519 = vmatprep.subr.mxu0 0.0
        %520 = vmatpush1.msra.mxu0 0.0
        %521 = vmatprep.subr.mxu0 0.0
        %522 = vmatpush1.msra.mxu0 0.0
        %523 = vmatprep.subr.mxu0 0.0
        %524 = vmatpush1.msra.mxu0 0.0
        %525 = vmatprep.subr.mxu0 0.0
        %526 = vmatpush1.msra.mxu0 0.0
        %527 = vmatprep.subr.mxu0 0.0
        %528 = vmatpush1.msra.mxu0 0.0
        %529 = vmatprep.subr.mxu0 0.0
        %530 = vmatpush1.msra.mxu0 0.0
        %531 = vmatprep.subr.mxu0 0.0
        %532 = vmatpush1.msra.mxu0 0.0
        %533 = vmatprep.subr.mxu0 0.0
        %534 = vmatpush1.msra.mxu0 0.0
        %535 = vmatprep.subr.mxu0 0.0
        %536 = vmatpush1.msra.mxu0 0.0
        %537 = vmatprep.subr.mxu0 0.0
        %538 = vmatpush1.msra.mxu0 0.0
        %539 = vmatprep.subr.mxu0 0.0
        %540 = vmatpush1.msra.mxu0 0.0
        %541 = vmatprep.subr.mxu0 0.0
        %542 = vmatpush1.msra.mxu0 0.0
        %543 = vmatprep.subr.mxu0 0.0
        %544 = vmatpush1.msra.mxu0 0.0
        %545 = vmatprep.subr.mxu0 0.0
        %546 = vmatpush1.msra.mxu0 0.0
        %547 = vmatprep.subr.mxu0 0.0
        %548 = vmatpush1.msra.mxu0 0.0
        %549 = vmatprep.subr.mxu0 0.0
        %550 = vmatpush1.msra.mxu0 0.0
        %551 = vmatprep.subr.mxu0 0.0
        %552 = vmatpush1.msra.mxu0 0.0
        %553 = vmatprep.subr.mxu0 0.0
        %554 = vmatpush1.msra.mxu0 0.0
        %555 = vmatprep.subr.mxu0 0.0
        %556 = vmatpush1.msra.mxu0 0.0
        %557 = vmatprep.subr.mxu0 0.0
        %558 = vmatpush1.msra.mxu0 0.0
        %559 = vmatprep.subr.mxu0 0.0
        %560 = vmatpush1.msra.mxu0 0.0
        %561 = vmatprep.subr.mxu0 0.0
        %562 = vmatpush1.msra.mxu0 0.0
        %563 = vmatprep.subr.mxu0 0.0
        %564 = vmatpush1.msra.mxu0 0.0
        %565 = vmatprep.subr.mxu0 0.0
        %566 = vmatpush1.msra.mxu0 0.0
        %567 = vmatprep.subr.mxu0 0.0
        %568 = vmatpush1.msra.mxu0 0.0
        %569 = vmatprep.subr.mxu0 0.0
        %570 = vmatpush1.msra.mxu0 0.0
        %571 = vmatprep.mubr.f32.mxu0 0.0
        %572 = vmatmul.mubr.f32.gmra.mrb[0].mxu0 %v501
        %v573 = vpop.f32.mrb[0].mxu0
        %v574 = vadd.f32 0.0, %v573
        %v575 = vpop.f32.mrb[0].mxu0
        %v576 = vadd.f32 0.0, %v575
        %577 = vdwg.mxu0
        %v579 = vcombine.high %v469, %v469
        %v581 = vunpack.c.l.s4 1983009808
        %v582 = vunpack.c.0.s8 %v581
        %v583 = vlaneseq
        %v584 = vshrl.u32 %v583, 7
        %v585 = vsub.s32 %v582, %v584
        %v586 = vrot.slane %v469, %v585
        %v588 = vunpack.c.l.s4 1983009808
        %v589 = vunpack.c.0.s8 %v588
        %v590 = vlaneseq
        %v591 = vshrl.u32 %v590, 7
        %v592 = vsub.s32 %v589, %v591
        %v593 = vrot.slane %v579, %v592
        %v594 = vcombine.high %v586, %v586
        %595 = vrot.lane.b32.xlu0 %v586, 17
        %v596 = vpop.permute.xlu0 %595
        %597 = vrot.lane.b32.xlu0 %v594, 17
        %v598 = vpop.permute.xlu0 %597
        %599 = vrot.lane.b32.xlu0 %v593, 17
        %v600 = vpop.permute.xlu0 %599
        %vm601 = vcmask 138240
        %v602 = vsel %vm601, %v596, %v598
        %v603 = vsel %vm601, %v598, %v600
        %v605 = vsel %vm499, %v470, 0
        %v607 = vsel %vm331, %v602, 0
        %v609 = vsel %vm331, %v603, 0
        %611 = vmatprep.subr.mxu0 %v609
        %612 = vmatpush1.msra.mxu0 %v607
        %613 = vmatprep.subr.mxu0 0.0
        %614 = vmatpush1.msra.mxu0 0.0
        %615 = vmatprep.subr.mxu0 0.0
        %616 = vmatpush1.msra.mxu0 0.0
        %617 = vmatprep.subr.mxu0 0.0
        %618 = vmatpush1.msra.mxu0 0.0
        %619 = vmatprep.subr.mxu0 0.0
        %620 = vmatpush1.msra.mxu0 0.0
        %621 = vmatprep.subr.mxu0 0.0
        %622 = vmatpush1.msra.mxu0 0.0
        %623 = vmatprep.subr.mxu0 0.0
        %624 = vmatpush1.msra.mxu0 0.0
        %625 = vmatprep.subr.mxu0 0.0
        %626 = vmatpush1.msra.mxu0 0.0
        %627 = vmatprep.subr.mxu0 0.0
        %628 = vmatpush1.msra.mxu0 0.0
        %629 = vmatprep.subr.mxu0 0.0
        %630 = vmatpush1.msra.mxu0 0.0
        %631 = vmatprep.subr.mxu0 0.0
        %632 = vmatpush1.msra.mxu0 0.0
        %633 = vmatprep.subr.mxu0 0.0
        %634 = vmatpush1.msra.mxu0 0.0
        %635 = vmatprep.subr.mxu0 0.0
        %636 = vmatpush1.msra.mxu0 0.0
        %637 = vmatprep.subr.mxu0 0.0
        %638 = vmatpush1.msra.mxu0 0.0
        %639 = vmatprep.subr.mxu0 0.0
        %640 = vmatpush1.msra.mxu0 0.0
        %641 = vmatprep.subr.mxu0 0.0
        %642 = vmatpush1.msra.mxu0 0.0
        %643 = vmatprep.subr.mxu0 0.0
        %644 = vmatpush1.msra.mxu0 0.0
        %645 = vmatprep.subr.mxu0 0.0
        %646 = vmatpush1.msra.mxu0 0.0
        %647 = vmatprep.subr.mxu0 0.0
        %648 = vmatpush1.msra.mxu0 0.0
        %649 = vmatprep.subr.mxu0 0.0
        %650 = vmatpush1.msra.mxu0 0.0
        %651 = vmatprep.subr.mxu0 0.0
        %652 = vmatpush1.msra.mxu0 0.0
        %653 = vmatprep.subr.mxu0 0.0
        %654 = vmatpush1.msra.mxu0 0.0
        %655 = vmatprep.subr.mxu0 0.0
        %656 = vmatpush1.msra.mxu0 0.0
        %657 = vmatprep.subr.mxu0 0.0
        %658 = vmatpush1.msra.mxu0 0.0
        %659 = vmatprep.subr.mxu0 0.0
        %660 = vmatpush1.msra.mxu0 0.0
        %661 = vmatprep.subr.mxu0 0.0
        %662 = vmatpush1.msra.mxu0 0.0
        %663 = vmatprep.subr.mxu0 0.0
        %664 = vmatpush1.msra.mxu0 0.0
        %665 = vmatprep.subr.mxu0 0.0
        %666 = vmatpush1.msra.mxu0 0.0
        %667 = vmatprep.subr.mxu0 0.0
        %668 = vmatpush1.msra.mxu0 0.0
        %669 = vmatprep.subr.mxu0 0.0
        %670 = vmatpush1.msra.mxu0 0.0
        %671 = vmatprep.subr.mxu0 0.0
        %672 = vmatpush1.msra.mxu0 0.0
        %673 = vmatprep.subr.mxu0 0.0
        %674 = vmatpush1.msra.mxu0 0.0
        %675 = vmatprep.mubr.f32.mxu0 0.0
        %676 = vmatmul.mubr.f32.gmra.mrb[0].mxu0 %v605
        %v677 = vpop.f32.mrb[0].mxu0
        %v678 = vadd.f32 %v574, %v677
        %v679 = vpop.f32.mrb[0].mxu0
        %v680 = vadd.f32 %v576, %v679
        %681 = vdwg.mxu0
        %v682 = vld [vmem:[#allocation2] sm:$0x3f]
        %v684 = vlaneseq
        %v685 = vshrl.u32 %v684, 7
        %v686 = vsub.s32 0, %v685
        %v687 = vrot.slane %v340, %v686
        %v688 = vlaneseq
        %v689 = vshrl.u32 %v688, 7
        %v690 = vsub.s32 1, %v689
        %v691 = vrot.slane %v340, %v690
        %v692 = vcombine.low %v687, %v691
        %v694 = vunpack.c.l.s4 1983009808
        %v695 = vunpack.c.0.s8 %v694
        %v696 = vlaneseq
        %v697 = vshrl.u32 %v696, 7
        %v698 = vsub.s32 %v695, %v697
        %v699 = vrot.slane %v692, %v698
        %700 = vrot.lane.b32.xlu0 %v699, 113
        %v701 = vpop.permute.xlu0 %700
        %v702 = vrot.slane %v701, 6
        %vm703 = vcmask 924672
        %v704 = vsel %vm703, %v702, %v701
        %v706 = vmul.f32 %v682, %v704
        %s707 = scalar_lea.vmem %s3, 4
        %v708 = vld [vmem:[%s707] sm:$0x3]
        %v710 = vcombine.high %v706, %v706
        %v712 = vunpack.c.l.s4 1983009808
        %v713 = vunpack.c.0.s8 %v712
        %v714 = vlaneseq
        %v715 = vshrl.u32 %v714, 7
        %v716 = vsub.s32 %v713, %v715
        %v717 = vrot.slane %v706, %v716
        %v719 = vunpack.c.l.s4 1983009808
        %v720 = vunpack.c.0.s8 %v719
        %v721 = vlaneseq
        %v722 = vshrl.u32 %v721, 7
        %v723 = vsub.s32 %v720, %v722
        %v724 = vrot.slane %v710, %v723
        %v725 = vcombine.high %v717, %v717
        %726 = vrot.lane.b32.xlu0 %v717, 15
        %v727 = vpop.permute.xlu0 %726
        %728 = vrot.lane.b32.xlu0 %v725, 15
        %v729 = vpop.permute.xlu0 %728
        %730 = vrot.lane.b32.xlu0 %v724, 15
        %v731 = vpop.permute.xlu0 %730
        %vm732 = vcmask 121856
        %v733 = vsel %vm732, %v727, %v729
        %v734 = vsel %vm732, %v729, %v731
        %v736 = vsel %vm499, %v708, 0
        %v738 = vsel %vm331, %v733, 0
        %v740 = vsel %vm331, %v734, 0
        %742 = vmatprep.subr.mxu0 %v740
        %743 = vmatpush1.msra.mxu0 %v738
        %744 = vmatprep.subr.mxu0 0.0
        %745 = vmatpush1.msra.mxu0 0.0
        %746 = vmatprep.subr.mxu0 0.0
        %747 = vmatpush1.msra.mxu0 0.0
        %748 = vmatprep.subr.mxu0 0.0
        %749 = vmatpush1.msra.mxu0 0.0
        %750 = vmatprep.subr.mxu0 0.0
        %751 = vmatpush1.msra.mxu0 0.0
        %752 = vmatprep.subr.mxu0 0.0
        %753 = vmatpush1.msra.mxu0 0.0
        %754 = vmatprep.subr.mxu0 0.0
        %755 = vmatpush1.msra.mxu0 0.0
        %756 = vmatprep.subr.mxu0 0.0
        %757 = vmatpush1.msra.mxu0 0.0
        %758 = vmatprep.subr.mxu0 0.0
        %759 = vmatpush1.msra.mxu0 0.0
        %760 = vmatprep.subr.mxu0 0.0
        %761 = vmatpush1.msra.mxu0 0.0
        %762 = vmatprep.subr.mxu0 0.0
        %763 = vmatpush1.msra.mxu0 0.0
        %764 = vmatprep.subr.mxu0 0.0
        %765 = vmatpush1.msra.mxu0 0.0
        %766 = vmatprep.subr.mxu0 0.0
        %767 = vmatpush1.msra.mxu0 0.0
        %768 = vmatprep.subr.mxu0 0.0
        %769 = vmatpush1.msra.mxu0 0.0
        %770 = vmatprep.subr.mxu0 0.0
        %771 = vmatpush1.msra.mxu0 0.0
        %772 = vmatprep.subr.mxu0 0.0
        %773 = vmatpush1.msra.mxu0 0.0
        %774 = vmatprep.subr.mxu0 0.0
        %775 = vmatpush1.msra.mxu0 0.0
        %776 = vmatprep.subr.mxu0 0.0
        %777 = vmatpush1.msra.mxu0 0.0
        %778 = vmatprep.subr.mxu0 0.0
        %779 = vmatpush1.msra.mxu0 0.0
        %780 = vmatprep.subr.mxu0 0.0
        %781 = vmatpush1.msra.mxu0 0.0
        %782 = vmatprep.subr.mxu0 0.0
        %783 = vmatpush1.msra.mxu0 0.0
        %784 = vmatprep.subr.mxu0 0.0
        %785 = vmatpush1.msra.mxu0 0.0
        %786 = vmatprep.subr.mxu0 0.0
        %787 = vmatpush1.msra.mxu0 0.0
        %788 = vmatprep.subr.mxu0 0.0
        %789 = vmatpush1.msra.mxu0 0.0
        %790 = vmatprep.subr.mxu0 0.0
        %791 = vmatpush1.msra.mxu0 0.0
        %792 = vmatprep.subr.mxu0 0.0
        %793 = vmatpush1.msra.mxu0 0.0
        %794 = vmatprep.subr.mxu0 0.0
        %795 = vmatpush1.msra.mxu0 0.0
        %796 = vmatprep.subr.mxu0 0.0
        %797 = vmatpush1.msra.mxu0 0.0
        %798 = vmatprep.subr.mxu0 0.0
        %799 = vmatpush1.msra.mxu0 0.0
        %800 = vmatprep.subr.mxu0 0.0
        %801 = vmatpush1.msra.mxu0 0.0
        %802 = vmatprep.subr.mxu0 0.0
        %803 = vmatpush1.msra.mxu0 0.0
        %804 = vmatprep.subr.mxu0 0.0
        %805 = vmatpush1.msra.mxu0 0.0
        %806 = vmatprep.mubr.f32.mxu0 0.0
        %807 = vmatmul.mubr.f32.gmra.mrb[0].mxu0 %v736
        %v808 = vpop.f32.mrb[0].mxu0
        %v809 = vadd.f32 0.0, %v808
        %v810 = vpop.f32.mrb[0].mxu0
        %v811 = vadd.f32 0.0, %v810
        %812 = vdwg.mxu0
        %v813 = vadd.f32 %v678, %v809
        %v814 = vadd.f32 %v680, %v811
        %v815 = vld [vmem:[#allocation2] sm:$0x3f]
        %816 = vrot.lane.b32.xlu0 %v462, 127
        %v817 = vpop.permute.xlu0 %816
        %v818 = vrot.slane %v817, 6
        %vm819 = vcmask 1039360
        %v820 = vsel %vm819, %v818, %v817
        %v822 = vmul.f32 %v815, %v820
        %s823 = scalar_lea.vmem %s3, 6
        %v824 = vld [vmem:[%s823] sm:$0x3]
        %v826 = vcombine.high %v822, %v822
        %v828 = vunpack.c.l.s4 1983009808
        %v829 = vunpack.c.0.s8 %v828
        %v830 = vlaneseq
        %v831 = vshrl.u32 %v830, 7
        %v832 = vsub.s32 %v829, %v831
        %v833 = vrot.slane %v822, %v832
        %v835 = vunpack.c.l.s4 1983009808
        %v836 = vunpack.c.0.s8 %v835
        %v837 = vlaneseq
        %v838 = vshrl.u32 %v837, 7
        %v839 = vsub.s32 %v836, %v838
        %v840 = vrot.slane %v826, %v839
        %v841 = vcombine.high %v833, %v833
        %842 = vrot.lane.b32.xlu0 %v833, 1
        %v843 = vpop.permute.xlu0 %842
        %844 = vrot.lane.b32.xlu0 %v841, 1
        %v845 = vpop.permute.xlu0 %844
        %846 = vrot.lane.b32.xlu0 %v840, 1
        %v847 = vpop.permute.xlu0 %846
        %vm848 = vcmask 7168
        %v849 = vsel %vm848, %v843, %v845
        %v850 = vsel %vm848, %v845, %v847
        %v852 = vsel %vm499, %v824, 0
        %v854 = vsel %vm331, %v849, 0
        %v856 = vsel %vm331, %v850, 0
        %858 = vmatprep.subr.mxu0 %v856
        %859 = vmatpush1.msra.mxu0 %v854
        %860 = vmatprep.subr.mxu0 0.0
        %861 = vmatpush1.msra.mxu0 0.0
        %862 = vmatprep.subr.mxu0 0.0
        %863 = vmatpush1.msra.mxu0 0.0
        %864 = vmatprep.subr.mxu0 0.0
        %865 = vmatpush1.msra.mxu0 0.0
        %866 = vmatprep.subr.mxu0 0.0
        %867 = vmatpush1.msra.mxu0 0.0
        %868 = vmatprep.subr.mxu0 0.0
        %869 = vmatpush1.msra.mxu0 0.0
        %870 = vmatprep.subr.mxu0 0.0
        %871 = vmatpush1.msra.mxu0 0.0
        %872 = vmatprep.subr.mxu0 0.0
        %873 = vmatpush1.msra.mxu0 0.0
        %874 = vmatprep.subr.mxu0 0.0
        %875 = vmatpush1.msra.mxu0 0.0
        %876 = vmatprep.subr.mxu0 0.0
        %877 = vmatpush1.msra.mxu0 0.0
        %878 = vmatprep.subr.mxu0 0.0
        %879 = vmatpush1.msra.mxu0 0.0
        %880 = vmatprep.subr.mxu0 0.0
        %881 = vmatpush1.msra.mxu0 0.0
        %882 = vmatprep.subr.mxu0 0.0
        %883 = vmatpush1.msra.mxu0 0.0
        %884 = vmatprep.subr.mxu0 0.0
        %885 = vmatpush1.msra.mxu0 0.0
        %886 = vmatprep.subr.mxu0 0.0
        %887 = vmatpush1.msra.mxu0 0.0
        %888 = vmatprep.subr.mxu0 0.0
        %889 = vmatpush1.msra.mxu0 0.0
        %890 = vmatprep.subr.mxu0 0.0
        %891 = vmatpush1.msra.mxu0 0.0
        %892 = vmatprep.subr.mxu0 0.0
        %893 = vmatpush1.msra.mxu0 0.0
        %894 = vmatprep.subr.mxu0 0.0
        %895 = vmatpush1.msra.mxu0 0.0
        %896 = vmatprep.subr.mxu0 0.0
        %897 = vmatpush1.msra.mxu0 0.0
        %898 = vmatprep.subr.mxu0 0.0
        %899 = vmatpush1.msra.mxu0 0.0
        %900 = vmatprep.subr.mxu0 0.0
        %901 = vmatpush1.msra.mxu0 0.0
        %902 = vmatprep.subr.mxu0 0.0
        %903 = vmatpush1.msra.mxu0 0.0
        %904 = vmatprep.subr.mxu0 0.0
        %905 = vmatpush1.msra.mxu0 0.0
        %906 = vmatprep.subr.mxu0 0.0
        %907 = vmatpush1.msra.mxu0 0.0
        %908 = vmatprep.subr.mxu0 0.0
        %909 = vmatpush1.msra.mxu0 0.0
        %910 = vmatprep.subr.mxu0 0.0
        %911 = vmatpush1.msra.mxu0 0.0
        %912 = vmatprep.subr.mxu0 0.0
        %913 = vmatpush1.msra.mxu0 0.0
        %914 = vmatprep.subr.mxu0 0.0
        %915 = vmatpush1.msra.mxu0 0.0
        %916 = vmatprep.subr.mxu0 0.0
        %917 = vmatpush1.msra.mxu0 0.0
        %918 = vmatprep.subr.mxu0 0.0
        %919 = vmatpush1.msra.mxu0 0.0
        %920 = vmatprep.subr.mxu0 0.0
        %921 = vmatpush1.msra.mxu0 0.0
        %922 = vmatprep.mubr.f32.mxu0 0.0
        %923 = vmatmul.mubr.f32.gmra.mrb[0].mxu0 %v852
        %v924 = vpop.f32.mrb[0].mxu0
        %v925 = vadd.f32 0.0, %v924
        %v926 = vpop.f32.mrb[0].mxu0
        %v927 = vadd.f32 0.0, %v926
        %928 = vdwg.mxu0
        %v929 = vadd.f32 %v813, %v925
        %v930 = vadd.f32 %v814, %v927
        %v931 = vld [vmem:[#allocation2 + $0x2] sm:$0xf]
        %s932 = scalar_lea.vmem %s3, 8
        %v933 = vld [vmem:[%s932] sm:$0x3]
        %v936 = vunpack.c.l.s4 1983009808
        %v937 = vunpack.c.0.s8 %v936
        %v938 = vlaneseq
        %v939 = vshrl.u32 %v938, 7
        %v940 = vsub.s32 %v937, %v939
        %v941 = vrot.slane %v931, %v940
        %v942 = vcombine.high %v941, %v941
        %v944 = vsel %vm499, %v933, 0
        %v946 = vsel %vm331, %v941, 0
        %v948 = vsel %vm331, %v942, 0
        %950 = vmatprep.subr.mxu0 %v948
        %951 = vmatpush1.msra.mxu0 %v946
        %952 = vmatprep.subr.mxu0 0.0
        %953 = vmatpush1.msra.mxu0 0.0
        %954 = vmatprep.subr.mxu0 0.0
        %955 = vmatpush1.msra.mxu0 0.0
        %956 = vmatprep.subr.mxu0 0.0
        %957 = vmatpush1.msra.mxu0 0.0
        %958 = vmatprep.subr.mxu0 0.0
        %959 = vmatpush1.msra.mxu0 0.0
        %960 = vmatprep.subr.mxu0 0.0
        %961 = vmatpush1.msra.mxu0 0.0
        %962 = vmatprep.subr.mxu0 0.0
        %963 = vmatpush1.msra.mxu0 0.0
        %964 = vmatprep.subr.mxu0 0.0
        %965 = vmatpush1.msra.mxu0 0.0
        %966 = vmatprep.subr.mxu0 0.0
        %967 = vmatpush1.msra.mxu0 0.0
        %968 = vmatprep.subr.mxu0 0.0
        %969 = vmatpush1.msra.mxu0 0.0
        %970 = vmatprep.subr.mxu0 0.0
        %971 = vmatpush1.msra.mxu0 0.0
        %972 = vmatprep.subr.mxu0 0.0
        %973 = vmatpush1.msra.mxu0 0.0
        %974 = vmatprep.subr.mxu0 0.0
        %975 = vmatpush1.msra.mxu0 0.0
        %976 = vmatprep.subr.mxu0 0.0
        %977 = vmatpush1.msra.mxu0 0.0
        %978 = vmatprep.subr.mxu0 0.0
        %979 = vmatpush1.msra.mxu0 0.0
        %980 = vmatprep.subr.mxu0 0.0
        %981 = vmatpush1.msra.mxu0 0.0
        %982 = vmatprep.subr.mxu0 0.0
        %983 = vmatpush1.msra.mxu0 0.0
        %984 = vmatprep.subr.mxu0 0.0
        %985 = vmatpush1.msra.mxu0 0.0
        %986 = vmatprep.subr.mxu0 0.0
        %987 = vmatpush1.msra.mxu0 0.0
        %988 = vmatprep.subr.mxu0 0.0
        %989 = vmatpush1.msra.mxu0 0.0
        %990 = vmatprep.subr.mxu0 0.0
        %991 = vmatpush1.msra.mxu0 0.0
        %992 = vmatprep.subr.mxu0 0.0
        %993 = vmatpush1.msra.mxu0 0.0
        %994 = vmatprep.subr.mxu0 0.0
        %995 = vmatpush1.msra.mxu0 0.0
        %996 = vmatprep.subr.mxu0 0.0
        %997 = vmatpush1.msra.mxu0 0.0
        %998 = vmatprep.subr.mxu0 0.0
        %999 = vmatpush1.msra.mxu0 0.0
        %1000 = vmatprep.subr.mxu0 0.0
        %1001 = vmatpush1.msra.mxu0 0.0
        %1002 = vmatprep.subr.mxu0 0.0
        %1003 = vmatpush1.msra.mxu0 0.0
        %1004 = vmatprep.subr.mxu0 0.0
        %1005 = vmatpush1.msra.mxu0 0.0
        %1006 = vmatprep.subr.mxu0 0.0
        %1007 = vmatpush1.msra.mxu0 0.0
        %1008 = vmatprep.subr.mxu0 0.0
        %1009 = vmatpush1.msra.mxu0 0.0
        %1010 = vmatprep.subr.mxu0 0.0
        %1011 = vmatpush1.msra.mxu0 0.0
        %1012 = vmatprep.subr.mxu0 0.0
        %1013 = vmatpush1.msra.mxu0 0.0
        %1014 = vmatprep.mubr.f32.mxu0 0.0
        %1015 = vmatmul.mubr.f32.gmra.mrb[0].mxu0 %v944
        %v1016 = vpop.f32.mrb[0].mxu0
        %v1017 = vadd.f32 0.0, %v1016
        %v1018 = vpop.f32.mrb[0].mxu0
        %v1019 = vadd.f32 0.0, %v1018
        %1020 = vdwg.mxu0
        %v1021 = vadd.f32 %v929, %v1017
        %v1022 = vadd.f32 %v930, %v1019
        %v1023 = vld [vmem:[#allocation2 + $0x2] sm:$0x3f]
        %1024 = vrot.lane.b32.xlu0 %v699, 1
        %v1025 = vpop.permute.xlu0 %1024
        %v1026 = vrot.slane %v1025, 6
        %v1027 = vsel %vm848, %v1026, %v1025
        %v1029 = vmul.f32 %v1023, %v1027
        %s1030 = scalar_lea.vmem %s3, 10
        %v1031 = vld [vmem:[%s1030] sm:$0x3]
        %v1033 = vcombine.high %v1029, %v1029
        %v1035 = vunpack.c.l.s4 1983009808
        %v1036 = vunpack.c.0.s8 %v1035
        %v1037 = vlaneseq
        %v1038 = vshrl.u32 %v1037, 7
        %v1039 = vsub.s32 %v1036, %v1038
        %v1040 = vrot.slane %v1029, %v1039
        %v1042 = vunpack.c.l.s4 1983009808
        %v1043 = vunpack.c.0.s8 %v1042
        %v1044 = vlaneseq
        %v1045 = vshrl.u32 %v1044, 7
        %v1046 = vsub.s32 %v1043, %v1045
        %v1047 = vrot.slane %v1033, %v1046
        %v1048 = vcombine.high %v1040, %v1040
        %1049 = vrot.lane.b32.xlu0 %v1040, 127
        %v1050 = vpop.permute.xlu0 %1049
        %1051 = vrot.lane.b32.xlu0 %v1048, 127
        %v1052 = vpop.permute.xlu0 %1051
        %1053 = vrot.lane.b32.xlu0 %v1047, 127
        %v1054 = vpop.permute.xlu0 %1053
        %v1055 = vsel %vm819, %v1050, %v1052
        %v1056 = vsel %vm819, %v1052, %v1054
        %v1058 = vsel %vm499, %v1031, 0
        %v1060 = vsel %vm331, %v1055, 0
        %v1062 = vsel %vm331, %v1056, 0
        %1064 = vmatprep.subr.mxu0 %v1062
        %1065 = vmatpush1.msra.mxu0 %v1060
        %1066 = vmatprep.subr.mxu0 0.0
        %1067 = vmatpush1.msra.mxu0 0.0
        %1068 = vmatprep.subr.mxu0 0.0
        %1069 = vmatpush1.msra.mxu0 0.0
        %1070 = vmatprep.subr.mxu0 0.0
        %1071 = vmatpush1.msra.mxu0 0.0
        %1072 = vmatprep.subr.mxu0 0.0
        %1073 = vmatpush1.msra.mxu0 0.0
        %1074 = vmatprep.subr.mxu0 0.0
        %1075 = vmatpush1.msra.mxu0 0.0
        %1076 = vmatprep.subr.mxu0 0.0
        %1077 = vmatpush1.msra.mxu0 0.0
        %1078 = vmatprep.subr.mxu0 0.0
        %1079 = vmatpush1.msra.mxu0 0.0
        %1080 = vmatprep.subr.mxu0 0.0
        %1081 = vmatpush1.msra.mxu0 0.0
        %1082 = vmatprep.subr.mxu0 0.0
        %1083 = vmatpush1.msra.mxu0 0.0
        %1084 = vmatprep.subr.mxu0 0.0
        %1085 = vmatpush1.msra.mxu0 0.0
        %1086 = vmatprep.subr.mxu0 0.0
        %1087 = vmatpush1.msra.mxu0 0.0
        %1088 = vmatprep.subr.mxu0 0.0
        %1089 = vmatpush1.msra.mxu0 0.0
        %1090 = vmatprep.subr.mxu0 0.0
        %1091 = vmatpush1.msra.mxu0 0.0
        %1092 = vmatprep.subr.mxu0 0.0
        %1093 = vmatpush1.msra.mxu0 0.0
        %1094 = vmatprep.subr.mxu0 0.0
        %1095 = vmatpush1.msra.mxu0 0.0
        %1096 = vmatprep.subr.mxu0 0.0
        %1097 = vmatpush1.msra.mxu0 0.0
        %1098 = vmatprep.subr.mxu0 0.0
        %1099 = vmatpush1.msra.mxu0 0.0
        %1100 = vmatprep.subr.mxu0 0.0
        %1101 = vmatpush1.msra.mxu0 0.0
        %1102 = vmatprep.subr.mxu0 0.0
        %1103 = vmatpush1.msra.mxu0 0.0
        %1104 = vmatprep.subr.mxu0 0.0
        %1105 = vmatpush1.msra.mxu0 0.0
        %1106 = vmatprep.subr.mxu0 0.0
        %1107 = vmatpush1.msra.mxu0 0.0
        %1108 = vmatprep.subr.mxu0 0.0
        %1109 = vmatpush1.msra.mxu0 0.0
        %1110 = vmatprep.subr.mxu0 0.0
        %1111 = vmatpush1.msra.mxu0 0.0
        %1112 = vmatprep.subr.mxu0 0.0
        %1113 = vmatpush1.msra.mxu0 0.0
        %1114 = vmatprep.subr.mxu0 0.0
        %1115 = vmatpush1.msra.mxu0 0.0
        %1116 = vmatprep.subr.mxu0 0.0
        %1117 = vmatpush1.msra.mxu0 0.0
        %1118 = vmatprep.subr.mxu0 0.0
        %1119 = vmatpush1.msra.mxu0 0.0
        %1120 = vmatprep.subr.mxu0 0.0
        %1121 = vmatpush1.msra.mxu0 0.0
        %1122 = vmatprep.subr.mxu0 0.0
        %1123 = vmatpush1.msra.mxu0 0.0
        %1124 = vmatprep.subr.mxu0 0.0
        %1125 = vmatpush1.msra.mxu0 0.0
        %1126 = vmatprep.subr.mxu0 0.0
        %1127 = vmatpush1.msra.mxu0 0.0
        %1128 = vmatprep.mubr.f32.mxu0 0.0
        %1129 = vmatmul.mubr.f32.gmra.mrb[0].mxu0 %v1058
        %v1130 = vpop.f32.mrb[0].mxu0
        %v1131 = vadd.f32 0.0, %v1130
        %v1132 = vpop.f32.mrb[0].mxu0
        %v1133 = vadd.f32 0.0, %v1132
        %1134 = vdwg.mxu0
        %v1135 = vadd.f32 %v1021, %v1131
        %v1136 = vadd.f32 %v1022, %v1133
        %v1137 = vld [vmem:[#allocation2 + $0x2] sm:$0x3f]
        %1138 = vrot.lane.b32.xlu0 %v462, 15
        %v1139 = vpop.permute.xlu0 %1138
        %v1140 = vrot.slane %v1139, 6
        %v1141 = vsel %vm732, %v1140, %v1139
        %v1143 = vmul.f32 %v1137, %v1141
        %s1144 = scalar_lea.vmem %s3, 12
        %v1145 = vld [vmem:[%s1144] sm:$0x3]
        %v1147 = vcombine.high %v1143, %v1143
        %v1149 = vunpack.c.l.s4 1983009808
        %v1150 = vunpack.c.0.s8 %v1149
        %v1151 = vlaneseq
        %v1152 = vshrl.u32 %v1151, 7
        %v1153 = vsub.s32 %v1150, %v1152
        %v1154 = vrot.slane %v1143, %v1153
        %v1156 = vunpack.c.l.s4 1983009808
        %v1157 = vunpack.c.0.s8 %v1156
        %v1158 = vlaneseq
        %v1159 = vshrl.u32 %v1158, 7
        %v1160 = vsub.s32 %v1157, %v1159
        %v1161 = vrot.slane %v1147, %v1160
        %v1162 = vcombine.high %v1154, %v1154
        %1163 = vrot.lane.b32.xlu0 %v1154, 113
        %v1164 = vpop.permute.xlu0 %1163
        %1165 = vrot.lane.b32.xlu0 %v1162, 113
        %v1166 = vpop.permute.xlu0 %1165
        %1167 = vrot.lane.b32.xlu0 %v1161, 113
        %v1168 = vpop.permute.xlu0 %1167
        %v1169 = vsel %vm703, %v1164, %v1166
        %v1170 = vsel %vm703, %v1166, %v1168
        %v1172 = vsel %vm499, %v1145, 0
        %v1174 = vsel %vm331, %v1169, 0
        %v1176 = vsel %vm331, %v1170, 0
        %1178 = vmatprep.subr.mxu0 %v1176
        %1179 = vmatpush1.msra.mxu0 %v1174
        %1180 = vmatprep.subr.mxu0 0.0
        %1181 = vmatpush1.msra.mxu0 0.0
        %1182 = vmatprep.subr.mxu0 0.0
        %1183 = vmatpush1.msra.mxu0 0.0
        %1184 = vmatprep.subr.mxu0 0.0
        %1185 = vmatpush1.msra.mxu0 0.0
        %1186 = vmatprep.subr.mxu0 0.0
        %1187 = vmatpush1.msra.mxu0 0.0
        %1188 = vmatprep.subr.mxu0 0.0
        %1189 = vmatpush1.msra.mxu0 0.0
        %1190 = vmatprep.subr.mxu0 0.0
        %1191 = vmatpush1.msra.mxu0 0.0
        %1192 = vmatprep.subr.mxu0 0.0
        %1193 = vmatpush1.msra.mxu0 0.0
        %1194 = vmatprep.subr.mxu0 0.0
        %1195 = vmatpush1.msra.mxu0 0.0
        %1196 = vmatprep.subr.mxu0 0.0
        %1197 = vmatpush1.msra.mxu0 0.0
        %1198 = vmatprep.subr.mxu0 0.0
        %1199 = vmatpush1.msra.mxu0 0.0
        %1200 = vmatprep.subr.mxu0 0.0
        %1201 = vmatpush1.msra.mxu0 0.0
        %1202 = vmatprep.subr.mxu0 0.0
        %1203 = vmatpush1.msra.mxu0 0.0
        %1204 = vmatprep.subr.mxu0 0.0
        %1205 = vmatpush1.msra.mxu0 0.0
        %1206 = vmatprep.subr.mxu0 0.0
        %1207 = vmatpush1.msra.mxu0 0.0
        %1208 = vmatprep.subr.mxu0 0.0
        %1209 = vmatpush1.msra.mxu0 0.0
        %1210 = vmatprep.subr.mxu0 0.0
        %1211 = vmatpush1.msra.mxu0 0.0
        %1212 = vmatprep.subr.mxu0 0.0
        %1213 = vmatpush1.msra.mxu0 0.0
        %1214 = vmatprep.subr.mxu0 0.0
        %1215 = vmatpush1.msra.mxu0 0.0
        %1216 = vmatprep.subr.mxu0 0.0
        %1217 = vmatpush1.msra.mxu0 0.0
        %1218 = vmatprep.subr.mxu0 0.0
        %1219 = vmatpush1.msra.mxu0 0.0
        %1220 = vmatprep.subr.mxu0 0.0
        %1221 = vmatpush1.msra.mxu0 0.0
        %1222 = vmatprep.subr.mxu0 0.0
        %1223 = vmatpush1.msra.mxu0 0.0
        %1224 = vmatprep.subr.mxu0 0.0
        %1225 = vmatpush1.msra.mxu0 0.0
        %1226 = vmatprep.subr.mxu0 0.0
        %1227 = vmatpush1.msra.mxu0 0.0
        %1228 = vmatprep.subr.mxu0 0.0
        %1229 = vmatpush1.msra.mxu0 0.0
        %1230 = vmatprep.subr.mxu0 0.0
        %1231 = vmatpush1.msra.mxu0 0.0
        %1232 = vmatprep.subr.mxu0 0.0
        %1233 = vmatpush1.msra.mxu0 0.0
        %1234 = vmatprep.subr.mxu0 0.0
        %1235 = vmatpush1.msra.mxu0 0.0
        %1236 = vmatprep.subr.mxu0 0.0
        %1237 = vmatpush1.msra.mxu0 0.0
        %1238 = vmatprep.subr.mxu0 0.0
        %1239 = vmatpush1.msra.mxu0 0.0
        %1240 = vmatprep.subr.mxu0 0.0
        %1241 = vmatpush1.msra.mxu0 0.0
        %1242 = vmatprep.mubr.f32.mxu0 0.0
        %1243 = vmatmul.mubr.f32.gmra.mrb[0].mxu0 %v1172
        %v1244 = vpop.f32.mrb[0].mxu0
        %v1245 = vadd.f32 0.0, %v1244
        %v1246 = vpop.f32.mrb[0].mxu0
        %v1247 = vadd.f32 0.0, %v1246
        %1248 = vdwg.mxu0
        %v1249 = vadd.f32 %v1135, %v1245
        %v1250 = vadd.f32 %v1136, %v1247
        %v1251 = vld [vmem:[#allocation2 + $0x2] sm:$0x3f]
        %s1252 = scalar_lea.vmem %s3, 14
        %v1253 = vld [vmem:[%s1252] sm:$0x3]
        %v1255 = vcombine.high %v1251, %v1251
        %v1257 = vunpack.c.l.s4 1983009808
        %v1258 = vunpack.c.0.s8 %v1257
        %v1259 = vlaneseq
        %v1260 = vshrl.u32 %v1259, 7
        %v1261 = vsub.s32 %v1258, %v1260
        %v1262 = vrot.slane %v1251, %v1261
        %v1264 = vunpack.c.l.s4 1983009808
        %v1265 = vunpack.c.0.s8 %v1264
        %v1266 = vlaneseq
        %v1267 = vshrl.u32 %v1266, 7
        %v1268 = vsub.s32 %v1265, %v1267
        %v1269 = vrot.slane %v1255, %v1268
        %v1270 = vcombine.high %v1262, %v1262
        %1271 = vrot.lane.b32.xlu0 %v1262, 112
        %v1272 = vpop.permute.xlu0 %1271
        %1273 = vrot.lane.b32.xlu0 %v1270, 112
        %v1274 = vpop.permute.xlu0 %1273
        %1275 = vrot.lane.b32.xlu0 %v1269, 112
        %v1276 = vpop.permute.xlu0 %1275
        %vm1277 = vcmask 916480
        %v1278 = vsel %vm1277, %v1272, %v1274
        %v1279 = vsel %vm1277, %v1274, %v1276
        %v1281 = vsel %vm499, %v1253, 0
        %v1283 = vsel %vm331, %v1278, 0
        %v1285 = vsel %vm331, %v1279, 0
        %1287 = vmatprep.subr.mxu0 %v1285
        %1288 = vmatpush1.msra.mxu0 %v1283
        %1289 = vmatprep.subr.mxu0 0.0
        %1290 = vmatpush1.msra.mxu0 0.0
        %1291 = vmatprep.subr.mxu0 0.0
        %1292 = vmatpush1.msra.mxu0 0.0
        %1293 = vmatprep.subr.mxu0 0.0
        %1294 = vmatpush1.msra.mxu0 0.0
        %1295 = vmatprep.subr.mxu0 0.0
        %1296 = vmatpush1.msra.mxu0 0.0
        %1297 = vmatprep.subr.mxu0 0.0
        %1298 = vmatpush1.msra.mxu0 0.0
        %1299 = vmatprep.subr.mxu0 0.0
        %1300 = vmatpush1.msra.mxu0 0.0
        %1301 = vmatprep.subr.mxu0 0.0
        %1302 = vmatpush1.msra.mxu0 0.0
        %1303 = vmatprep.subr.mxu0 0.0
        %1304 = vmatpush1.msra.mxu0 0.0
        %1305 = vmatprep.subr.mxu0 0.0
        %1306 = vmatpush1.msra.mxu0 0.0
        %1307 = vmatprep.subr.mxu0 0.0
        %1308 = vmatpush1.msra.mxu0 0.0
        %1309 = vmatprep.subr.mxu0 0.0
        %1310 = vmatpush1.msra.mxu0 0.0
        %1311 = vmatprep.subr.mxu0 0.0
        %1312 = vmatpush1.msra.mxu0 0.0
        %1313 = vmatprep.subr.mxu0 0.0
        %1314 = vmatpush1.msra.mxu0 0.0
        %1315 = vmatprep.subr.mxu0 0.0
        %1316 = vmatpush1.msra.mxu0 0.0
        %1317 = vmatprep.subr.mxu0 0.0
        %1318 = vmatpush1.msra.mxu0 0.0
        %1319 = vmatprep.subr.mxu0 0.0
        %1320 = vmatpush1.msra.mxu0 0.0
        %1321 = vmatprep.subr.mxu0 0.0
        %1322 = vmatpush1.msra.mxu0 0.0
        %1323 = vmatprep.subr.mxu0 0.0
        %1324 = vmatpush1.msra.mxu0 0.0
        %1325 = vmatprep.subr.mxu0 0.0
        %1326 = vmatpush1.msra.mxu0 0.0
        %1327 = vmatprep.subr.mxu0 0.0
        %1328 = vmatpush1.msra.mxu0 0.0
        %1329 = vmatprep.subr.mxu0 0.0
        %1330 = vmatpush1.msra.mxu0 0.0
        %1331 = vmatprep.subr.mxu0 0.0
        %1332 = vmatpush1.msra.mxu0 0.0
        %1333 = vmatprep.subr.mxu0 0.0
        %1334 = vmatpush1.msra.mxu0 0.0
        %1335 = vmatprep.subr.mxu0 0.0
        %1336 = vmatpush1.msra.mxu0 0.0
        %1337 = vmatprep.subr.mxu0 0.0
        %1338 = vmatpush1.msra.mxu0 0.0
        %1339 = vmatprep.subr.mxu0 0.0
        %1340 = vmatpush1.msra.mxu0 0.0
        %1341 = vmatprep.subr.mxu0 0.0
        %1342 = vmatpush1.msra.mxu0 0.0
        %1343 = vmatprep.subr.mxu0 0.0
        %1344 = vmatpush1.msra.mxu0 0.0
        %1345 = vmatprep.subr.mxu0 0.0
        %1346 = vmatpush1.msra.mxu0 0.0
        %1347 = vmatprep.subr.mxu0 0.0
        %1348 = vmatpush1.msra.mxu0 0.0
        %1349 = vmatprep.subr.mxu0 0.0
        %1350 = vmatpush1.msra.mxu0 0.0
        %1351 = vmatprep.mubr.f32.mxu0 0.0
        %1352 = vmatmul.mubr.f32.gmra.mrb[0].mxu0 %v1281
        %v1353 = vpop.f32.mrb[0].mxu0
        %v1354 = vadd.f32 0.0, %v1353
        %v1355 = vpop.f32.mrb[0].mxu0
        %v1356 = vadd.f32 0.0, %v1355
        %1357 = vdwg.mxu0
        %v1358 = vadd.f32 %v1249, %v1354
        %v1359 = vadd.f32 %v1250, %v1356
        %v1360 = vld [vmem:[#allocation2 + $0x2] sm:$0x3f]
        %1361 = vrot.lane.b32.xlu0 %v699, 17
        %v1362 = vpop.permute.xlu0 %1361
        %v1363 = vrot.slane %v1362, 6
        %v1364 = vsel %vm601, %v1363, %v1362
        %v1366 = vmul.f32 %v1360, %v1364
        %s1367 = scalar_lea.vmem %s3, 16
        %v1368 = vld [vmem:[%s1367] sm:$0x3]
        %v1370 = vcombine.high %v1366, %v1366
        %v1372 = vunpack.c.l.s4 1983009808
        %v1373 = vunpack.c.0.s8 %v1372
        %v1374 = vlaneseq
        %v1375 = vshrl.u32 %v1374, 7
        %v1376 = vsub.s32 %v1373, %v1375
        %v1377 = vrot.slane %v1366, %v1376
        %v1379 = vunpack.c.l.s4 1983009808
        %v1380 = vunpack.c.0.s8 %v1379
        %v1381 = vlaneseq
        %v1382 = vshrl.u32 %v1381, 7
        %v1383 = vsub.s32 %v1380, %v1382
        %v1384 = vrot.slane %v1370, %v1383
        %v1385 = vcombine.high %v1377, %v1377
        %1386 = vrot.lane.b32.xlu0 %v1377, 111
        %v1387 = vpop.permute.xlu0 %1386
        %1388 = vrot.lane.b32.xlu0 %v1385, 111
        %v1389 = vpop.permute.xlu0 %1388
        %1390 = vrot.lane.b32.xlu0 %v1384, 111
        %v1391 = vpop.permute.xlu0 %1390
        %v1392 = vsel %vm466, %v1387, %v1389
        %v1393 = vsel %vm466, %v1389, %v1391
        %v1395 = vsel %vm499, %v1368, 0
        %v1397 = vsel %vm331, %v1392, 0
        %v1399 = vsel %vm331, %v1393, 0
        %1401 = vmatprep.subr.mxu0 %v1399
        %1402 = vmatpush1.msra.mxu0 %v1397
        %1403 = vmatprep.subr.mxu0 0.0
        %1404 = vmatpush1.msra.mxu0 0.0
        %1405 = vmatprep.subr.mxu0 0.0
        %1406 = vmatpush1.msra.mxu0 0.0
        %1407 = vmatprep.subr.mxu0 0.0
        %1408 = vmatpush1.msra.mxu0 0.0
        %1409 = vmatprep.subr.mxu0 0.0
        %1410 = vmatpush1.msra.mxu0 0.0
        %1411 = vmatprep.subr.mxu0 0.0
        %1412 = vmatpush1.msra.mxu0 0.0
        %1413 = vmatprep.subr.mxu0 0.0
        %1414 = vmatpush1.msra.mxu0 0.0
        %1415 = vmatprep.subr.mxu0 0.0
        %1416 = vmatpush1.msra.mxu0 0.0
        %1417 = vmatprep.subr.mxu0 0.0
        %1418 = vmatpush1.msra.mxu0 0.0
        %1419 = vmatprep.subr.mxu0 0.0
        %1420 = vmatpush1.msra.mxu0 0.0
        %1421 = vmatprep.subr.mxu0 0.0
        %1422 = vmatpush1.msra.mxu0 0.0
        %1423 = vmatprep.subr.mxu0 0.0
        %1424 = vmatpush1.msra.mxu0 0.0
        %1425 = vmatprep.subr.mxu0 0.0
        %1426 = vmatpush1.msra.mxu0 0.0
        %1427 = vmatprep.subr.mxu0 0.0
        %1428 = vmatpush1.msra.mxu0 0.0
        %1429 = vmatprep.subr.mxu0 0.0
        %1430 = vmatpush1.msra.mxu0 0.0
        %1431 = vmatprep.subr.mxu0 0.0
        %1432 = vmatpush1.msra.mxu0 0.0
        %1433 = vmatprep.subr.mxu0 0.0
        %1434 = vmatpush1.msra.mxu0 0.0
        %1435 = vmatprep.subr.mxu0 0.0
        %1436 = vmatpush1.msra.mxu0 0.0
        %1437 = vmatprep.subr.mxu0 0.0
        %1438 = vmatpush1.msra.mxu0 0.0
        %1439 = vmatprep.subr.mxu0 0.0
        %1440 = vmatpush1.msra.mxu0 0.0
        %1441 = vmatprep.subr.mxu0 0.0
        %1442 = vmatpush1.msra.mxu0 0.0
        %1443 = vmatprep.subr.mxu0 0.0
        %1444 = vmatpush1.msra.mxu0 0.0
        %1445 = vmatprep.subr.mxu0 0.0
        %1446 = vmatpush1.msra.mxu0 0.0
        %1447 = vmatprep.subr.mxu0 0.0
        %1448 = vmatpush1.msra.mxu0 0.0
        %1449 = vmatprep.subr.mxu0 0.0
        %1450 = vmatpush1.msra.mxu0 0.0
        %1451 = vmatprep.subr.mxu0 0.0
        %1452 = vmatpush1.msra.mxu0 0.0
        %1453 = vmatprep.subr.mxu0 0.0
        %1454 = vmatpush1.msra.mxu0 0.0
        %1455 = vmatprep.subr.mxu0 0.0
        %1456 = vmatpush1.msra.mxu0 0.0
        %1457 = vmatprep.subr.mxu0 0.0
        %1458 = vmatpush1.msra.mxu0 0.0
        %1459 = vmatprep.subr.mxu0 0.0
        %1460 = vmatpush1.msra.mxu0 0.0
        %1461 = vmatprep.subr.mxu0 0.0
        %1462 = vmatpush1.msra.mxu0 0.0
        %1463 = vmatprep.subr.mxu0 0.0
        %1464 = vmatpush1.msra.mxu0 0.0
        %1465 = vmatprep.mubr.f32.mxu0 0.0
        %1466 = vmatmul.mubr.f32.gmra.mrb[0].mxu0 %v1395
        %v1467 = vpop.f32.mrb[0].mxu0
        %v1468 = vadd.f32 0.0, %v1467
        %v1469 = vpop.f32.mrb[0].mxu0
        %v1470 = vadd.f32 0.0, %v1469
        %1471 = vdwg.mxu0
        %v1472 = vadd.f32 %v1358, %v1468
        %v1473 = vadd.f32 %v1359, %v1470
        %v1474 = vld [vmem:[%s4] sm:$0x3]
        %1476 = vset.pattern.permute.xlu0 0
        %1477 = vperm.xlu0 %1476, %v1474
        %v1478 = vpop.permute.xlu0 %1477
        %v1480 = vadd.f32 %v1472, %v1478
        %v1481 = vadd.f32 %v1473, %v1478
        %v1482 = vmax.f32 %v1480, 0.0
        %v1483 = vmax.f32 %v1481, 0.0
        %v1484 = vld [vmem:[%s5] sm:$0xf]
        %v1486 = vsel %vm499, %v1484, 0
        %v1489 = vsel %vm331, %v1482, 0
        %v1492 = vsel %vm331, %v1483, 0
        %1494 = vmatprep.subr.mxu0 %v1492
        %1495 = vmatpush1.msra.mxu0 %v1489
        %1496 = vmatprep.subr.mxu0 0.0
        %1497 = vmatpush1.msra.mxu0 0.0
        %1498 = vmatprep.subr.mxu0 0.0
        %1499 = vmatpush1.msra.mxu0 0.0
        %1500 = vmatprep.subr.mxu0 0.0
        %1501 = vmatpush1.msra.mxu0 0.0
        %1502 = vmatprep.subr.mxu0 0.0
        %1503 = vmatpush1.msra.mxu0 0.0
        %1504 = vmatprep.subr.mxu0 0.0
        %1505 = vmatpush1.msra.mxu0 0.0
        %1506 = vmatprep.subr.mxu0 0.0
        %1507 = vmatpush1.msra.mxu0 0.0
        %1508 = vmatprep.subr.mxu0 0.0
        %1509 = vmatpush1.msra.mxu0 0.0
        %1510 = vmatprep.subr.mxu0 0.0
        %1511 = vmatpush1.msra.mxu0 0.0
        %1512 = vmatprep.subr.mxu0 0.0
        %1513 = vmatpush1.msra.mxu0 0.0
        %1514 = vmatprep.subr.mxu0 0.0
        %1515 = vmatpush1.msra.mxu0 0.0
        %1516 = vmatprep.subr.mxu0 0.0
        %1517 = vmatpush1.msra.mxu0 0.0
        %1518 = vmatprep.subr.mxu0 0.0
        %1519 = vmatpush1.msra.mxu0 0.0
        %1520 = vmatprep.subr.mxu0 0.0
        %1521 = vmatpush1.msra.mxu0 0.0
        %1522 = vmatprep.subr.mxu0 0.0
        %1523 = vmatpush1.msra.mxu0 0.0
        %1524 = vmatprep.subr.mxu0 0.0
        %1525 = vmatpush1.msra.mxu0 0.0
        %1526 = vmatprep.subr.mxu0 0.0
        %1527 = vmatpush1.msra.mxu0 0.0
        %1528 = vmatprep.subr.mxu0 0.0
        %1529 = vmatpush1.msra.mxu0 0.0
        %1530 = vmatprep.subr.mxu0 0.0
        %1531 = vmatpush1.msra.mxu0 0.0
        %1532 = vmatprep.subr.mxu0 0.0
        %1533 = vmatpush1.msra.mxu0 0.0
        %1534 = vmatprep.subr.mxu0 0.0
        %1535 = vmatpush1.msra.mxu0 0.0
        %1536 = vmatprep.subr.mxu0 0.0
        %1537 = vmatpush1.msra.mxu0 0.0
        %1538 = vmatprep.subr.mxu0 0.0
        %1539 = vmatpush1.msra.mxu0 0.0
        %1540 = vmatprep.subr.mxu0 0.0
        %1541 = vmatpush1.msra.mxu0 0.0
        %1542 = vmatprep.subr.mxu0 0.0
        %1543 = vmatpush1.msra.mxu0 0.0
        %1544 = vmatprep.subr.mxu0 0.0
        %1545 = vmatpush1.msra.mxu0 0.0
        %1546 = vmatprep.subr.mxu0 0.0
        %1547 = vmatpush1.msra.mxu0 0.0
        %1548 = vmatprep.subr.mxu0 0.0
        %1549 = vmatpush1.msra.mxu0 0.0
        %1550 = vmatprep.subr.mxu0 0.0
        %1551 = vmatpush1.msra.mxu0 0.0
        %1552 = vmatprep.subr.mxu0 0.0
        %1553 = vmatpush1.msra.mxu0 0.0
        %1554 = vmatprep.subr.mxu0 0.0
        %1555 = vmatpush1.msra.mxu0 0.0
        %1556 = vmatprep.subr.mxu0 0.0
        %1557 = vmatpush1.msra.mxu0 0.0
        %1558 = vmatprep.mubr.f32.mxu0 0.0
        %1559 = vmatmul.mubr.f32.gmra.mrb[0].mxu0 %v1486
        %v1560 = vpop.f32.mrb[0].mxu0
        %v1561 = vadd.f32 0.0, %v1560
        %v1562 = vpop.f32.mrb[0].mxu0
        %v1563 = vadd.f32 0.0, %v1562
        %1564 = vdwg.mxu0
        %v1567 = vcombine.low %v1561, %v1563
        %v1569 = vadd.f32 %v341, %v1567
        %v1570 = vld [vmem:[%s6] sm:$0xf]
        %1572 = vset.pattern.permute.xlu0 0
        %1573 = vperm.xlu0 %1572, %v1570
        %v1574 = vpop.permute.xlu0 %1573
        %v1576 = vunpack.c.l.s4 839922192
        %v1577 = vunpack.c.0.s8 %v1576
        %v1578 = vlaneseq
        %v1579 = vshrl.u32 %v1578, 7
        %v1580 = vsub.s32 %v1577, %v1579
        %v1581 = vrot.slane %v1574, %v1580
        %v1583 = vadd.f32 %v1569, %v1581
        %s1584 = scalar_lea.vmem %s1, 2
        %v1585 = vld [vmem:[%s1584] sm:$0x3]
        %s1586 = scalar_lea.vmem %s2, 2
        %v1587 = vld [vmem:[%s1586] sm:$0x3]
        %1589 = vset.pattern.permute.xlu0 0
        %1590 = vperm.xlu0 %1589, %v1587
        %v1591 = vpop.permute.xlu0 %1590
        %v1594 = vcombine.high %v1583, %v1583
        %v1596 = vsel %vm351, %v1585, 0
        %v1598 = vsel %vm355, %v1583, 0
        %v1600 = vsel %vm355, %v1594, 0
        %1602 = vmatprep.subr.mxu0 %v1600
        %1603 = vmatpush1.msra.mxu0 %v1598
        %1604 = vmatprep.subr.mxu0 0.0
        %1605 = vmatpush1.msra.mxu0 0.0
        %1606 = vmatprep.subr.mxu0 0.0
        %1607 = vmatpush1.msra.mxu0 0.0
        %1608 = vmatprep.subr.mxu0 0.0
        %1609 = vmatpush1.msra.mxu0 0.0
        %1610 = vmatprep.subr.mxu0 0.0
        %1611 = vmatpush1.msra.mxu0 0.0
        %1612 = vmatprep.subr.mxu0 0.0
        %1613 = vmatpush1.msra.mxu0 0.0
        %1614 = vmatprep.subr.mxu0 0.0
        %1615 = vmatpush1.msra.mxu0 0.0
        %1616 = vmatprep.subr.mxu0 0.0
        %1617 = vmatpush1.msra.mxu0 0.0
        %1618 = vmatprep.subr.mxu0 0.0
        %1619 = vmatpush1.msra.mxu0 0.0
        %1620 = vmatprep.subr.mxu0 0.0
        %1621 = vmatpush1.msra.mxu0 0.0
        %1622 = vmatprep.subr.mxu0 0.0
        %1623 = vmatpush1.msra.mxu0 0.0
        %1624 = vmatprep.subr.mxu0 0.0
        %1625 = vmatpush1.msra.mxu0 0.0
        %1626 = vmatprep.subr.mxu0 0.0
        %1627 = vmatpush1.msra.mxu0 0.0
        %1628 = vmatprep.subr.mxu0 0.0
        %1629 = vmatpush1.msra.mxu0 0.0
        %1630 = vmatprep.subr.mxu0 0.0
        %1631 = vmatpush1.msra.mxu0 0.0
        %1632 = vmatprep.subr.mxu0 0.0
        %1633 = vmatpush1.msra.mxu0 0.0
        %1634 = vmatprep.subr.mxu0 0.0
        %1635 = vmatpush1.msra.mxu0 0.0
        %1636 = vmatprep.subr.mxu0 0.0
        %1637 = vmatpush1.msra.mxu0 0.0
        %1638 = vmatprep.subr.mxu0 0.0
        %1639 = vmatpush1.msra.mxu0 0.0
        %1640 = vmatprep.subr.mxu0 0.0
        %1641 = vmatpush1.msra.mxu0 0.0
        %1642 = vmatprep.subr.mxu0 0.0
        %1643 = vmatpush1.msra.mxu0 0.0
        %1644 = vmatprep.subr.mxu0 0.0
        %1645 = vmatpush1.msra.mxu0 0.0
        %1646 = vmatprep.subr.mxu0 0.0
        %1647 = vmatpush1.msra.mxu0 0.0
        %1648 = vmatprep.subr.mxu0 0.0
        %1649 = vmatpush1.msra.mxu0 0.0
        %1650 = vmatprep.subr.mxu0 0.0
        %1651 = vmatpush1.msra.mxu0 0.0
        %1652 = vmatprep.subr.mxu0 0.0
        %1653 = vmatpush1.msra.mxu0 0.0
        %1654 = vmatprep.subr.mxu0 0.0
        %1655 = vmatpush1.msra.mxu0 0.0
        %1656 = vmatprep.subr.mxu0 0.0
        %1657 = vmatpush1.msra.mxu0 0.0
        %1658 = vmatprep.subr.mxu0 0.0
        %1659 = vmatpush1.msra.mxu0 0.0
        %1660 = vmatprep.subr.mxu0 0.0
        %1661 = vmatpush1.msra.mxu0 0.0
        %1662 = vmatprep.subr.mxu0 0.0
        %1663 = vmatpush1.msra.mxu0 0.0
        %1664 = vmatprep.subr.mxu0 0.0
        %1665 = vmatpush1.msra.mxu0 0.0
        %1666 = vmatprep.mubr.f32.mxu0 0.0
        %1667 = vmatmul.mubr.f32.gmra.mrb[0].mxu0 %v1596
        %v1668 = vpop.f32.mrb[0].mxu0
        %v1669 = vadd.f32 %v1591, %v1668
        %v1670 = vpop.f32.mrb[0].mxu0
        %v1671 = vadd.f32 %v1591, %v1670
        %1672 = vdwg.mxu0
        %v1673 = vmax.f32 %v1669, 0.0
        %v1674 = vmax.f32 %v1671, 0.0
        %v1677 = vcombine.low %v1673, %v1674
        %v1679 = vunpack.c.l.s4 1983009808
        %v1680 = vunpack.c.0.s8 %v1679
        %v1681 = vlaneseq
        %v1682 = vshrl.u32 %v1681, 7
        %v1683 = vsub.s32 %v1680, %v1682
        %v1684 = vrot.slane %v1677, %v1683
        %1686 = vst [vmem:[#allocation2 + $0x2] sm:$0xf] %v1684
        %v1687 = vld [vmem:[#allocation2] sm:$0x3f]
        %v1688 = vmul.f32 %v1687, %v467
        %s1689 = scalar_lea.vmem %s3, 18
        %v1690 = vld [vmem:[%s1689] sm:$0x3]
        %s1691 = scalar_lea.vmem %s3, 20
        %v1692 = vld [vmem:[%s1691] sm:$0x3]
        %v1694 = vcombine.high %v1687, %v1687
        %v1696 = vunpack.c.l.s4 1983009808
        %v1697 = vunpack.c.0.s8 %v1696
        %v1698 = vlaneseq
        %v1699 = vshrl.u32 %v1698, 7
        %v1700 = vsub.s32 %v1697, %v1699
        %v1701 = vrot.slane %v1687, %v1700
        %v1703 = vunpack.c.l.s4 1983009808
        %v1704 = vunpack.c.0.s8 %v1703
        %v1705 = vlaneseq
        %v1706 = vshrl.u32 %v1705, 7
        %v1707 = vsub.s32 %v1704, %v1706
        %v1708 = vrot.slane %v1694, %v1707
        %v1709 = vcombine.high %v1701, %v1701
        %1710 = vrot.lane.b32.xlu0 %v1701, 16
        %v1711 = vpop.permute.xlu0 %1710
        %1712 = vrot.lane.b32.xlu0 %v1709, 16
        %v1713 = vpop.permute.xlu0 %1712
        %1714 = vrot.lane.b32.xlu0 %v1708, 16
        %v1715 = vpop.permute.xlu0 %1714
        %v1716 = vsel %vm496, %v1711, %v1713
        %v1717 = vsel %vm496, %v1713, %v1715
        %v1719 = vsel %vm499, %v1692, 0
        %v1721 = vsel %vm331, %v1716, 0
        %v1723 = vsel %vm331, %v1717, 0
        %1725 = vmatprep.subr.mxu0 %v1723
        %1726 = vmatpush1.msra.mxu0 %v1721
        %1727 = vmatprep.subr.mxu0 0.0
        %1728 = vmatpush1.msra.mxu0 0.0
        %1729 = vmatprep.subr.mxu0 0.0
        %1730 = vmatpush1.msra.mxu0 0.0
        %1731 = vmatprep.subr.mxu0 0.0
        %1732 = vmatpush1.msra.mxu0 0.0
        %1733 = vmatprep.subr.mxu0 0.0
        %1734 = vmatpush1.msra.mxu0 0.0
        %1735 = vmatprep.subr.mxu0 0.0
        %1736 = vmatpush1.msra.mxu0 0.0
        %1737 = vmatprep.subr.mxu0 0.0
        %1738 = vmatpush1.msra.mxu0 0.0
        %1739 = vmatprep.subr.mxu0 0.0
        %1740 = vmatpush1.msra.mxu0 0.0
        %1741 = vmatprep.subr.mxu0 0.0
        %1742 = vmatpush1.msra.mxu0 0.0
        %1743 = vmatprep.subr.mxu0 0.0
        %1744 = vmatpush1.msra.mxu0 0.0
        %1745 = vmatprep.subr.mxu0 0.0
        %1746 = vmatpush1.msra.mxu0 0.0
        %1747 = vmatprep.subr.mxu0 0.0
        %1748 = vmatpush1.msra.mxu0 0.0
        %1749 = vmatprep.subr.mxu0 0.0
        %1750 = vmatpush1.msra.mxu0 0.0
        %1751 = vmatprep.subr.mxu0 0.0
        %1752 = vmatpush1.msra.mxu0 0.0
        %1753 = vmatprep.subr.mxu0 0.0
        %1754 = vmatpush1.msra.mxu0 0.0
        %1755 = vmatprep.subr.mxu0 0.0
        %1756 = vmatpush1.msra.mxu0 0.0
        %1757 = vmatprep.subr.mxu0 0.0
        %1758 = vmatpush1.msra.mxu0 0.0
        %1759 = vmatprep.subr.mxu0 0.0
        %1760 = vmatpush1.msra.mxu0 0.0
        %1761 = vmatprep.subr.mxu0 0.0
        %1762 = vmatpush1.msra.mxu0 0.0
        %1763 = vmatprep.subr.mxu0 0.0
        %1764 = vmatpush1.msra.mxu0 0.0
        %1765 = vmatprep.subr.mxu0 0.0
        %1766 = vmatpush1.msra.mxu0 0.0
        %1767 = vmatprep.subr.mxu0 0.0
        %1768 = vmatpush1.msra.mxu0 0.0
        %1769 = vmatprep.subr.mxu0 0.0
        %1770 = vmatpush1.msra.mxu0 0.0
        %1771 = vmatprep.subr.mxu0 0.0
        %1772 = vmatpush1.msra.mxu0 0.0
        %1773 = vmatprep.subr.mxu0 0.0
        %1774 = vmatpush1.msra.mxu0 0.0
        %1775 = vmatprep.subr.mxu0 0.0
        %1776 = vmatpush1.msra.mxu0 0.0
        %1777 = vmatprep.subr.mxu0 0.0
        %1778 = vmatpush1.msra.mxu0 0.0
        %1779 = vmatprep.subr.mxu0 0.0
        %1780 = vmatpush1.msra.mxu0 0.0
        %1781 = vmatprep.subr.mxu0 0.0
        %1782 = vmatpush1.msra.mxu0 0.0
        %1783 = vmatprep.subr.mxu0 0.0
        %1784 = vmatpush1.msra.mxu0 0.0
        %1785 = vmatprep.subr.mxu0 0.0
        %1786 = vmatpush1.msra.mxu0 0.0
        %1787 = vmatprep.subr.mxu0 0.0
        %1788 = vmatpush1.msra.mxu0 0.0
        %1789 = vmatprep.mubr.f32.mxu0 0.0
        %1790 = vmatmul.mubr.f32.gmra.mrb[0].mxu0 %v1719
        %v1791 = vpop.f32.mrb[0].mxu0
        %v1792 = vadd.f32 0.0, %v1791
        %v1793 = vpop.f32.mrb[0].mxu0
        %v1794 = vadd.f32 0.0, %v1793
        %1795 = vdwg.mxu0
        %v1797 = vcombine.high %v1688, %v1688
        %v1799 = vunpack.c.l.s4 1983009808
        %v1800 = vunpack.c.0.s8 %v1799
        %v1801 = vlaneseq
        %v1802 = vshrl.u32 %v1801, 7
        %v1803 = vsub.s32 %v1800, %v1802
        %v1804 = vrot.slane %v1688, %v1803
        %v1806 = vunpack.c.l.s4 1983009808
        %v1807 = vunpack.c.0.s8 %v1806
        %v1808 = vlaneseq
        %v1809 = vshrl.u32 %v1808, 7
        %v1810 = vsub.s32 %v1807, %v1809
        %v1811 = vrot.slane %v1797, %v1810
        %v1812 = vcombine.high %v1804, %v1804
        %1813 = vrot.lane.b32.xlu0 %v1804, 17
        %v1814 = vpop.permute.xlu0 %1813
        %1815 = vrot.lane.b32.xlu0 %v1812, 17
        %v1816 = vpop.permute.xlu0 %1815
        %1817 = vrot.lane.b32.xlu0 %v1811, 17
        %v1818 = vpop.permute.xlu0 %1817
        %v1819 = vsel %vm601, %v1814, %v1816
        %v1820 = vsel %vm601, %v1816, %v1818
        %v1822 = vsel %vm499, %v1690, 0
        %v1824 = vsel %vm331, %v1819, 0
        %v1826 = vsel %vm331, %v1820, 0
        %1828 = vmatprep.subr.mxu0 %v1826
        %1829 = vmatpush1.msra.mxu0 %v1824
        %1830 = vmatprep.subr.mxu0 0.0
        %1831 = vmatpush1.msra.mxu0 0.0
        %1832 = vmatprep.subr.mxu0 0.0
        %1833 = vmatpush1.msra.mxu0 0.0
        %1834 = vmatprep.subr.mxu0 0.0
        %1835 = vmatpush1.msra.mxu0 0.0
        %1836 = vmatprep.subr.mxu0 0.0
        %1837 = vmatpush1.msra.mxu0 0.0
        %1838 = vmatprep.subr.mxu0 0.0
        %1839 = vmatpush1.msra.mxu0 0.0
        %1840 = vmatprep.subr.mxu0 0.0
        %1841 = vmatpush1.msra.mxu0 0.0
        %1842 = vmatprep.subr.mxu0 0.0
        %1843 = vmatpush1.msra.mxu0 0.0
        %1844 = vmatprep.subr.mxu0 0.0
        %1845 = vmatpush1.msra.mxu0 0.0
        %1846 = vmatprep.subr.mxu0 0.0
        %1847 = vmatpush1.msra.mxu0 0.0
        %1848 = vmatprep.subr.mxu0 0.0
        %1849 = vmatpush1.msra.mxu0 0.0
        %1850 = vmatprep.subr.mxu0 0.0
        %1851 = vmatpush1.msra.mxu0 0.0
        %1852 = vmatprep.subr.mxu0 0.0
        %1853 = vmatpush1.msra.mxu0 0.0
        %1854 = vmatprep.subr.mxu0 0.0
        %1855 = vmatpush1.msra.mxu0 0.0
        %1856 = vmatprep.subr.mxu0 0.0
        %1857 = vmatpush1.msra.mxu0 0.0
        %1858 = vmatprep.subr.mxu0 0.0
        %1859 = vmatpush1.msra.mxu0 0.0
        %1860 = vmatprep.subr.mxu0 0.0
        %1861 = vmatpush1.msra.mxu0 0.0
        %1862 = vmatprep.subr.mxu0 0.0
        %1863 = vmatpush1.msra.mxu0 0.0
        %1864 = vmatprep.subr.mxu0 0.0
        %1865 = vmatpush1.msra.mxu0 0.0
        %1866 = vmatprep.subr.mxu0 0.0
        %1867 = vmatpush1.msra.mxu0 0.0
        %1868 = vmatprep.subr.mxu0 0.0
        %1869 = vmatpush1.msra.mxu0 0.0
        %1870 = vmatprep.subr.mxu0 0.0
        %1871 = vmatpush1.msra.mxu0 0.0
        %1872 = vmatprep.subr.mxu0 0.0
        %1873 = vmatpush1.msra.mxu0 0.0
        %1874 = vmatprep.subr.mxu0 0.0
        %1875 = vmatpush1.msra.mxu0 0.0
        %1876 = vmatprep.subr.mxu0 0.0
        %1877 = vmatpush1.msra.mxu0 0.0
        %1878 = vmatprep.subr.mxu0 0.0
        %1879 = vmatpush1.msra.mxu0 0.0
        %1880 = vmatprep.subr.mxu0 0.0
        %1881 = vmatpush1.msra.mxu0 0.0
        %1882 = vmatprep.subr.mxu0 0.0
        %1883 = vmatpush1.msra.mxu0 0.0
        %1884 = vmatprep.subr.mxu0 0.0
        %1885 = vmatpush1.msra.mxu0 0.0
        %1886 = vmatprep.subr.mxu0 0.0
        %1887 = vmatpush1.msra.mxu0 0.0
        %1888 = vmatprep.subr.mxu0 0.0
        %1889 = vmatpush1.msra.mxu0 0.0
        %1890 = vmatprep.subr.mxu0 0.0
        %1891 = vmatpush1.msra.mxu0 0.0
        %1892 = vmatprep.mubr.f32.mxu0 0.0
        %1893 = vmatmul.mubr.f32.gmra.mrb[0].mxu0 %v1822
        %v1894 = vpop.f32.mrb[0].mxu0
        %v1895 = vadd.f32 %v1792, %v1894
        %v1896 = vpop.f32.mrb[0].mxu0
        %v1897 = vadd.f32 %v1794, %v1896
        %1898 = vdwg.mxu0
        %v1899 = vld [vmem:[#allocation2] sm:$0x3f]
        %v1900 = vmul.f32 %v1899, %v704
        %s1901 = scalar_lea.vmem %s3, 22
        %v1902 = vld [vmem:[%s1901] sm:$0x3]
        %v1904 = vcombine.high %v1900, %v1900
        %v1906 = vunpack.c.l.s4 1983009808
        %v1907 = vunpack.c.0.s8 %v1906
        %v1908 = vlaneseq
        %v1909 = vshrl.u32 %v1908, 7
        %v1910 = vsub.s32 %v1907, %v1909
        %v1911 = vrot.slane %v1900, %v1910
        %v1913 = vunpack.c.l.s4 1983009808
        %v1914 = vunpack.c.0.s8 %v1913
        %v1915 = vlaneseq
        %v1916 = vshrl.u32 %v1915, 7
        %v1917 = vsub.s32 %v1914, %v1916
        %v1918 = vrot.slane %v1904, %v1917
        %v1919 = vcombine.high %v1911, %v1911
        %1920 = vrot.lane.b32.xlu0 %v1911, 15
        %v1921 = vpop.permute.xlu0 %1920
        %1922 = vrot.lane.b32.xlu0 %v1919, 15
        %v1923 = vpop.permute.xlu0 %1922
        %1924 = vrot.lane.b32.xlu0 %v1918, 15
        %v1925 = vpop.permute.xlu0 %1924
        %v1926 = vsel %vm732, %v1921, %v1923
        %v1927 = vsel %vm732, %v1923, %v1925
        %v1929 = vsel %vm499, %v1902, 0
        %v1931 = vsel %vm331, %v1926, 0
        %v1933 = vsel %vm331, %v1927, 0
        %1935 = vmatprep.subr.mxu0 %v1933
        %1936 = vmatpush1.msra.mxu0 %v1931
        %1937 = vmatprep.subr.mxu0 0.0
        %1938 = vmatpush1.msra.mxu0 0.0
        %1939 = vmatprep.subr.mxu0 0.0
        %1940 = vmatpush1.msra.mxu0 0.0
        %1941 = vmatprep.subr.mxu0 0.0
        %1942 = vmatpush1.msra.mxu0 0.0
        %1943 = vmatprep.subr.mxu0 0.0
        %1944 = vmatpush1.msra.mxu0 0.0
        %1945 = vmatprep.subr.mxu0 0.0
        %1946 = vmatpush1.msra.mxu0 0.0
        %1947 = vmatprep.subr.mxu0 0.0
        %1948 = vmatpush1.msra.mxu0 0.0
        %1949 = vmatprep.subr.mxu0 0.0
        %1950 = vmatpush1.msra.mxu0 0.0
        %1951 = vmatprep.subr.mxu0 0.0
        %1952 = vmatpush1.msra.mxu0 0.0
        %1953 = vmatprep.subr.mxu0 0.0
        %1954 = vmatpush1.msra.mxu0 0.0
        %1955 = vmatprep.subr.mxu0 0.0
        %1956 = vmatpush1.msra.mxu0 0.0
        %1957 = vmatprep.subr.mxu0 0.0
        %1958 = vmatpush1.msra.mxu0 0.0
        %1959 = vmatprep.subr.mxu0 0.0
        %1960 = vmatpush1.msra.mxu0 0.0
        %1961 = vmatprep.subr.mxu0 0.0
        %1962 = vmatpush1.msra.mxu0 0.0
        %1963 = vmatprep.subr.mxu0 0.0
        %1964 = vmatpush1.msra.mxu0 0.0
        %1965 = vmatprep.subr.mxu0 0.0
        %1966 = vmatpush1.msra.mxu0 0.0
        %1967 = vmatprep.subr.mxu0 0.0
        %1968 = vmatpush1.msra.mxu0 0.0
        %1969 = vmatprep.subr.mxu0 0.0
        %1970 = vmatpush1.msra.mxu0 0.0
        %1971 = vmatprep.subr.mxu0 0.0
        %1972 = vmatpush1.msra.mxu0 0.0
        %1973 = vmatprep.subr.mxu0 0.0
        %1974 = vmatpush1.msra.mxu0 0.0
        %1975 = vmatprep.subr.mxu0 0.0
        %1976 = vmatpush1.msra.mxu0 0.0
        %1977 = vmatprep.subr.mxu0 0.0
        %1978 = vmatpush1.msra.mxu0 0.0
        %1979 = vmatprep.subr.mxu0 0.0
        %1980 = vmatpush1.msra.mxu0 0.0
        %1981 = vmatprep.subr.mxu0 0.0
        %1982 = vmatpush1.msra.mxu0 0.0
        %1983 = vmatprep.subr.mxu0 0.0
        %1984 = vmatpush1.msra.mxu0 0.0
        %1985 = vmatprep.subr.mxu0 0.0
        %1986 = vmatpush1.msra.mxu0 0.0
        %1987 = vmatprep.subr.mxu0 0.0
        %1988 = vmatpush1.msra.mxu0 0.0
        %1989 = vmatprep.subr.mxu0 0.0
        %1990 = vmatpush1.msra.mxu0 0.0
        %1991 = vmatprep.subr.mxu0 0.0
        %1992 = vmatpush1.msra.mxu0 0.0
        %1993 = vmatprep.subr.mxu0 0.0
        %1994 = vmatpush1.msra.mxu0 0.0
        %1995 = vmatprep.subr.mxu0 0.0
        %1996 = vmatpush1.msra.mxu0 0.0
        %1997 = vmatprep.subr.mxu0 0.0
        %1998 = vmatpush1.msra.mxu0 0.0
        %1999 = vmatprep.mubr.f32.mxu0 0.0
        %2000 = vmatmul.mubr.f32.gmra.mrb[0].mxu0 %v1929
        %v2001 = vpop.f32.mrb[0].mxu0
        %v2002 = vadd.f32 0.0, %v2001
        %v2003 = vpop.f32.mrb[0].mxu0
        %v2004 = vadd.f32 0.0, %v2003
        %2005 = vdwg.mxu0
        %v2006 = vadd.f32 %v1895, %v2002
        %v2007 = vadd.f32 %v1897, %v2004
        %v2008 = vld [vmem:[#allocation2] sm:$0x3f]
        %v2009 = vmul.f32 %v2008, %v820
        %s2010 = scalar_lea.vmem %s3, 24
        %v2011 = vld [vmem:[%s2010] sm:$0x3]
        %v2013 = vcombine.high %v2009, %v2009
        %v2015 = vunpack.c.l.s4 1983009808
        %v2016 = vunpack.c.0.s8 %v2015
        %v2017 = vlaneseq
        %v2018 = vshrl.u32 %v2017, 7
        %v2019 = vsub.s32 %v2016, %v2018
        %v2020 = vrot.slane %v2009, %v2019
        %v2022 = vunpack.c.l.s4 1983009808
        %v2023 = vunpack.c.0.s8 %v2022
        %v2024 = vlaneseq
        %v2025 = vshrl.u32 %v2024, 7
        %v2026 = vsub.s32 %v2023, %v2025
        %v2027 = vrot.slane %v2013, %v2026
        %v2028 = vcombine.high %v2020, %v2020
        %2029 = vrot.lane.b32.xlu0 %v2020, 1
        %v2030 = vpop.permute.xlu0 %2029
        %2031 = vrot.lane.b32.xlu0 %v2028, 1
        %v2032 = vpop.permute.xlu0 %2031
        %2033 = vrot.lane.b32.xlu0 %v2027, 1
        %v2034 = vpop.permute.xlu0 %2033
        %v2035 = vsel %vm848, %v2030, %v2032
        %v2036 = vsel %vm848, %v2032, %v2034
        %v2038 = vsel %vm499, %v2011, 0
        %v2040 = vsel %vm331, %v2035, 0
        %v2042 = vsel %vm331, %v2036, 0
        %2044 = vmatprep.subr.mxu0 %v2042
        %2045 = vmatpush1.msra.mxu0 %v2040
        %2046 = vmatprep.subr.mxu0 0.0
        %2047 = vmatpush1.msra.mxu0 0.0
        %2048 = vmatprep.subr.mxu0 0.0
        %2049 = vmatpush1.msra.mxu0 0.0
        %2050 = vmatprep.subr.mxu0 0.0
        %2051 = vmatpush1.msra.mxu0 0.0
        %2052 = vmatprep.subr.mxu0 0.0
        %2053 = vmatpush1.msra.mxu0 0.0
        %2054 = vmatprep.subr.mxu0 0.0
        %2055 = vmatpush1.msra.mxu0 0.0
        %2056 = vmatprep.subr.mxu0 0.0
        %2057 = vmatpush1.msra.mxu0 0.0
        %2058 = vmatprep.subr.mxu0 0.0
        %2059 = vmatpush1.msra.mxu0 0.0
        %2060 = vmatprep.subr.mxu0 0.0
        %2061 = vmatpush1.msra.mxu0 0.0
        %2062 = vmatprep.subr.mxu0 0.0
        %2063 = vmatpush1.msra.mxu0 0.0
        %2064 = vmatprep.subr.mxu0 0.0
        %2065 = vmatpush1.msra.mxu0 0.0
        %2066 = vmatprep.subr.mxu0 0.0
        %2067 = vmatpush1.msra.mxu0 0.0
        %2068 = vmatprep.subr.mxu0 0.0
        %2069 = vmatpush1.msra.mxu0 0.0
        %2070 = vmatprep.subr.mxu0 0.0
        %2071 = vmatpush1.msra.mxu0 0.0
        %2072 = vmatprep.subr.mxu0 0.0
        %2073 = vmatpush1.msra.mxu0 0.0
        %2074 = vmatprep.subr.mxu0 0.0
        %2075 = vmatpush1.msra.mxu0 0.0
        %2076 = vmatprep.subr.mxu0 0.0
        %2077 = vmatpush1.msra.mxu0 0.0
        %2078 = vmatprep.subr.mxu0 0.0
        %2079 = vmatpush1.msra.mxu0 0.0
        %2080 = vmatprep.subr.mxu0 0.0
        %2081 = vmatpush1.msra.mxu0 0.0
        %2082 = vmatprep.subr.mxu0 0.0
        %2083 = vmatpush1.msra.mxu0 0.0
        %2084 = vmatprep.subr.mxu0 0.0
        %2085 = vmatpush1.msra.mxu0 0.0
        %2086 = vmatprep.subr.mxu0 0.0
        %2087 = vmatpush1.msra.mxu0 0.0
        %2088 = vmatprep.subr.mxu0 0.0
        %2089 = vmatpush1.msra.mxu0 0.0
        %2090 = vmatprep.subr.mxu0 0.0
        %2091 = vmatpush1.msra.mxu0 0.0
        %2092 = vmatprep.subr.mxu0 0.0
        %2093 = vmatpush1.msra.mxu0 0.0
        %2094 = vmatprep.subr.mxu0 0.0
        %2095 = vmatpush1.msra.mxu0 0.0
        %2096 = vmatprep.subr.mxu0 0.0
        %2097 = vmatpush1.msra.mxu0 0.0
        %2098 = vmatprep.subr.mxu0 0.0
        %2099 = vmatpush1.msra.mxu0 0.0
        %2100 = vmatprep.subr.mxu0 0.0
        %2101 = vmatpush1.msra.mxu0 0.0
        %2102 = vmatprep.subr.mxu0 0.0
        %2103 = vmatpush1.msra.mxu0 0.0
        %2104 = vmatprep.subr.mxu0 0.0
        %2105 = vmatpush1.msra.mxu0 0.0
        %2106 = vmatprep.subr.mxu0 0.0
        %2107 = vmatpush1.msra.mxu0 0.0
        %2108 = vmatprep.mubr.f32.mxu0 0.0
        %2109 = vmatmul.mubr.f32.gmra.mrb[0].mxu0 %v2038
        %v2110 = vpop.f32.mrb[0].mxu0
        %v2111 = vadd.f32 0.0, %v2110
        %v2112 = vpop.f32.mrb[0].mxu0
        %v2113 = vadd.f32 0.0, %v2112
        %2114 = vdwg.mxu0
        %v2115 = vadd.f32 %v2006, %v2111
        %v2116 = vadd.f32 %v2007, %v2113
        %v2117 = vld [vmem:[#allocation2 + $0x2] sm:$0xf]
        %s2118 = scalar_lea.vmem %s3, 26
        %v2119 = vld [vmem:[%s2118] sm:$0x3]
        %v2122 = vunpack.c.l.s4 1983009808
        %v2123 = vunpack.c.0.s8 %v2122
        %v2124 = vlaneseq
        %v2125 = vshrl.u32 %v2124, 7
        %v2126 = vsub.s32 %v2123, %v2125
        %v2127 = vrot.slane %v2117, %v2126
        %v2128 = vcombine.high %v2127, %v2127
        %v2130 = vsel %vm499, %v2119, 0
        %v2132 = vsel %vm331, %v2127, 0
        %v2134 = vsel %vm331, %v2128, 0
        %2136 = vmatprep.subr.mxu0 %v2134
        %2137 = vmatpush1.msra.mxu0 %v2132
        %2138 = vmatprep.subr.mxu0 0.0
        %2139 = vmatpush1.msra.mxu0 0.0
        %2140 = vmatprep.subr.mxu0 0.0
        %2141 = vmatpush1.msra.mxu0 0.0
        %2142 = vmatprep.subr.mxu0 0.0
        %2143 = vmatpush1.msra.mxu0 0.0
        %2144 = vmatprep.subr.mxu0 0.0
        %2145 = vmatpush1.msra.mxu0 0.0
        %2146 = vmatprep.subr.mxu0 0.0
        %2147 = vmatpush1.msra.mxu0 0.0
        %2148 = vmatprep.subr.mxu0 0.0
        %2149 = vmatpush1.msra.mxu0 0.0
        %2150 = vmatprep.subr.mxu0 0.0
        %2151 = vmatpush1.msra.mxu0 0.0
        %2152 = vmatprep.subr.mxu0 0.0
        %2153 = vmatpush1.msra.mxu0 0.0
        %2154 = vmatprep.subr.mxu0 0.0
        %2155 = vmatpush1.msra.mxu0 0.0
        %2156 = vmatprep.subr.mxu0 0.0
        %2157 = vmatpush1.msra.mxu0 0.0
        %2158 = vmatprep.subr.mxu0 0.0
        %2159 = vmatpush1.msra.mxu0 0.0
        %2160 = vmatprep.subr.mxu0 0.0
        %2161 = vmatpush1.msra.mxu0 0.0
        %2162 = vmatprep.subr.mxu0 0.0
        %2163 = vmatpush1.msra.mxu0 0.0
        %2164 = vmatprep.subr.mxu0 0.0
        %2165 = vmatpush1.msra.mxu0 0.0
        %2166 = vmatprep.subr.mxu0 0.0
        %2167 = vmatpush1.msra.mxu0 0.0
        %2168 = vmatprep.subr.mxu0 0.0
        %2169 = vmatpush1.msra.mxu0 0.0
        %2170 = vmatprep.subr.mxu0 0.0
        %2171 = vmatpush1.msra.mxu0 0.0
        %2172 = vmatprep.subr.mxu0 0.0
        %2173 = vmatpush1.msra.mxu0 0.0
        %2174 = vmatprep.subr.mxu0 0.0
        %2175 = vmatpush1.msra.mxu0 0.0
        %2176 = vmatprep.subr.mxu0 0.0
        %2177 = vmatpush1.msra.mxu0 0.0
        %2178 = vmatprep.subr.mxu0 0.0
        %2179 = vmatpush1.msra.mxu0 0.0
        %2180 = vmatprep.subr.mxu0 0.0
        %2181 = vmatpush1.msra.mxu0 0.0
        %2182 = vmatprep.subr.mxu0 0.0
        %2183 = vmatpush1.msra.mxu0 0.0
        %2184 = vmatprep.subr.mxu0 0.0
        %2185 = vmatpush1.msra.mxu0 0.0
        %2186 = vmatprep.subr.mxu0 0.0
        %2187 = vmatpush1.msra.mxu0 0.0
        %2188 = vmatprep.subr.mxu0 0.0
        %2189 = vmatpush1.msra.mxu0 0.0
        %2190 = vmatprep.subr.mxu0 0.0
        %2191 = vmatpush1.msra.mxu0 0.0
        %2192 = vmatprep.subr.mxu0 0.0
        %2193 = vmatpush1.msra.mxu0 0.0
        %2194 = vmatprep.subr.mxu0 0.0
        %2195 = vmatpush1.msra.mxu0 0.0
        %2196 = vmatprep.subr.mxu0 0.0
        %2197 = vmatpush1.msra.mxu0 0.0
        %2198 = vmatprep.subr.mxu0 0.0
        %2199 = vmatpush1.msra.mxu0 0.0
        %2200 = vmatprep.mubr.f32.mxu0 0.0
        %2201 = vmatmul.mubr.f32.gmra.mrb[0].mxu0 %v2130
        %v2202 = vpop.f32.mrb[0].mxu0
        %v2203 = vadd.f32 0.0, %v2202
        %v2204 = vpop.f32.mrb[0].mxu0
        %v2205 = vadd.f32 0.0, %v2204
        %2206 = vdwg.mxu0
        %v2207 = vadd.f32 %v2115, %v2203
        %v2208 = vadd.f32 %v2116, %v2205
        %v2209 = vld [vmem:[#allocation2 + $0x2] sm:$0x3f]
        %v2210 = vmul.f32 %v2209, %v1027
        %s2211 = scalar_lea.vmem %s3, 28
        %v2212 = vld [vmem:[%s2211] sm:$0x3]
        %v2214 = vcombine.high %v2210, %v2210
        %v2216 = vunpack.c.l.s4 1983009808
        %v2217 = vunpack.c.0.s8 %v2216
        %v2218 = vlaneseq
        %v2219 = vshrl.u32 %v2218, 7
        %v2220 = vsub.s32 %v2217, %v2219
        %v2221 = vrot.slane %v2210, %v2220
        %v2223 = vunpack.c.l.s4 1983009808
        %v2224 = vunpack.c.0.s8 %v2223
        %v2225 = vlaneseq
        %v2226 = vshrl.u32 %v2225, 7
        %v2227 = vsub.s32 %v2224, %v2226
        %v2228 = vrot.slane %v2214, %v2227
        %v2229 = vcombine.high %v2221, %v2221
        %2230 = vrot.lane.b32.xlu0 %v2221, 127
        %v2231 = vpop.permute.xlu0 %2230
        %2232 = vrot.lane.b32.xlu0 %v2229, 127
        %v2233 = vpop.permute.xlu0 %2232
        %2234 = vrot.lane.b32.xlu0 %v2228, 127
        %v2235 = vpop.permute.xlu0 %2234
        %v2236 = vsel %vm819, %v2231, %v2233
        %v2237 = vsel %vm819, %v2233, %v2235
        %v2239 = vsel %vm499, %v2212, 0
        %v2241 = vsel %vm331, %v2236, 0
        %v2243 = vsel %vm331, %v2237, 0
        %2245 = vmatprep.subr.mxu0 %v2243
        %2246 = vmatpush1.msra.mxu0 %v2241
        %2247 = vmatprep.subr.mxu0 0.0
        %2248 = vmatpush1.msra.mxu0 0.0
        %2249 = vmatprep.subr.mxu0 0.0
        %2250 = vmatpush1.msra.mxu0 0.0
        %2251 = vmatprep.subr.mxu0 0.0
        %2252 = vmatpush1.msra.mxu0 0.0
        %2253 = vmatprep.subr.mxu0 0.0
        %2254 = vmatpush1.msra.mxu0 0.0
        %2255 = vmatprep.subr.mxu0 0.0
        %2256 = vmatpush1.msra.mxu0 0.0
        %2257 = vmatprep.subr.mxu0 0.0
        %2258 = vmatpush1.msra.mxu0 0.0
        %2259 = vmatprep.subr.mxu0 0.0
        %2260 = vmatpush1.msra.mxu0 0.0
        %2261 = vmatprep.subr.mxu0 0.0
        %2262 = vmatpush1.msra.mxu0 0.0
        %2263 = vmatprep.subr.mxu0 0.0
        %2264 = vmatpush1.msra.mxu0 0.0
        %2265 = vmatprep.subr.mxu0 0.0
        %2266 = vmatpush1.msra.mxu0 0.0
        %2267 = vmatprep.subr.mxu0 0.0
        %2268 = vmatpush1.msra.mxu0 0.0
        %2269 = vmatprep.subr.mxu0 0.0
        %2270 = vmatpush1.msra.mxu0 0.0
        %2271 = vmatprep.subr.mxu0 0.0
        %2272 = vmatpush1.msra.mxu0 0.0
        %2273 = vmatprep.subr.mxu0 0.0
        %2274 = vmatpush1.msra.mxu0 0.0
        %2275 = vmatprep.subr.mxu0 0.0
        %2276 = vmatpush1.msra.mxu0 0.0
        %2277 = vmatprep.subr.mxu0 0.0
        %2278 = vmatpush1.msra.mxu0 0.0
        %2279 = vmatprep.subr.mxu0 0.0
        %2280 = vmatpush1.msra.mxu0 0.0
        %2281 = vmatprep.subr.mxu0 0.0
        %2282 = vmatpush1.msra.mxu0 0.0
        %2283 = vmatprep.subr.mxu0 0.0
        %2284 = vmatpush1.msra.mxu0 0.0
        %2285 = vmatprep.subr.mxu0 0.0
        %2286 = vmatpush1.msra.mxu0 0.0
        %2287 = vmatprep.subr.mxu0 0.0
        %2288 = vmatpush1.msra.mxu0 0.0
        %2289 = vmatprep.subr.mxu0 0.0
        %2290 = vmatpush1.msra.mxu0 0.0
        %2291 = vmatprep.subr.mxu0 0.0
        %2292 = vmatpush1.msra.mxu0 0.0
        %2293 = vmatprep.subr.mxu0 0.0
        %2294 = vmatpush1.msra.mxu0 0.0
        %2295 = vmatprep.subr.mxu0 0.0
        %2296 = vmatpush1.msra.mxu0 0.0
        %2297 = vmatprep.subr.mxu0 0.0
        %2298 = vmatpush1.msra.mxu0 0.0
        %2299 = vmatprep.subr.mxu0 0.0
        %2300 = vmatpush1.msra.mxu0 0.0
        %2301 = vmatprep.subr.mxu0 0.0
        %2302 = vmatpush1.msra.mxu0 0.0
        %2303 = vmatprep.subr.mxu0 0.0
        %2304 = vmatpush1.msra.mxu0 0.0
        %2305 = vmatprep.subr.mxu0 0.0
        %2306 = vmatpush1.msra.mxu0 0.0
        %2307 = vmatprep.subr.mxu0 0.0
        %2308 = vmatpush1.msra.mxu0 0.0
        %2309 = vmatprep.mubr.f32.mxu0 0.0
        %2310 = vmatmul.mubr.f32.gmra.mrb[0].mxu0 %v2239
        %v2311 = vpop.f32.mrb[0].mxu0
        %v2312 = vadd.f32 0.0, %v2311
        %v2313 = vpop.f32.mrb[0].mxu0
        %v2314 = vadd.f32 0.0, %v2313
        %2315 = vdwg.mxu0
        %v2316 = vadd.f32 %v2207, %v2312
        %v2317 = vadd.f32 %v2208, %v2314
        %v2318 = vld [vmem:[#allocation2 + $0x2] sm:$0x3f]
        %v2319 = vmul.f32 %v2318, %v1141
        %s2320 = scalar_lea.vmem %s3, 30
        %v2321 = vld [vmem:[%s2320] sm:$0x3]
        %v2323 = vcombine.high %v2319, %v2319
        %v2325 = vunpack.c.l.s4 1983009808
        %v2326 = vunpack.c.0.s8 %v2325
        %v2327 = vlaneseq
        %v2328 = vshrl.u32 %v2327, 7
        %v2329 = vsub.s32 %v2326, %v2328
        %v2330 = vrot.slane %v2319, %v2329
        %v2332 = vunpack.c.l.s4 1983009808
        %v2333 = vunpack.c.0.s8 %v2332
        %v2334 = vlaneseq
        %v2335 = vshrl.u32 %v2334, 7
        %v2336 = vsub.s32 %v2333, %v2335
        %v2337 = vrot.slane %v2323, %v2336
        %v2338 = vcombine.high %v2330, %v2330
        %2339 = vrot.lane.b32.xlu0 %v2330, 113
        %v2340 = vpop.permute.xlu0 %2339
        %2341 = vrot.lane.b32.xlu0 %v2338, 113
        %v2342 = vpop.permute.xlu0 %2341
        %2343 = vrot.lane.b32.xlu0 %v2337, 113
        %v2344 = vpop.permute.xlu0 %2343
        %v2345 = vsel %vm703, %v2340, %v2342
        %v2346 = vsel %vm703, %v2342, %v2344
        %v2348 = vsel %vm499, %v2321, 0
        %v2350 = vsel %vm331, %v2345, 0
        %v2352 = vsel %vm331, %v2346, 0
        %2354 = vmatprep.subr.mxu0 %v2352
        %2355 = vmatpush1.msra.mxu0 %v2350
        %2356 = vmatprep.subr.mxu0 0.0
        %2357 = vmatpush1.msra.mxu0 0.0
        %2358 = vmatprep.subr.mxu0 0.0
        %2359 = vmatpush1.msra.mxu0 0.0
        %2360 = vmatprep.subr.mxu0 0.0
        %2361 = vmatpush1.msra.mxu0 0.0
        %2362 = vmatprep.subr.mxu0 0.0
        %2363 = vmatpush1.msra.mxu0 0.0
        %2364 = vmatprep.subr.mxu0 0.0
        %2365 = vmatpush1.msra.mxu0 0.0
        %2366 = vmatprep.subr.mxu0 0.0
        %2367 = vmatpush1.msra.mxu0 0.0
        %2368 = vmatprep.subr.mxu0 0.0
        %2369 = vmatpush1.msra.mxu0 0.0
        %2370 = vmatprep.subr.mxu0 0.0
        %2371 = vmatpush1.msra.mxu0 0.0
        %2372 = vmatprep.subr.mxu0 0.0
        %2373 = vmatpush1.msra.mxu0 0.0
        %2374 = vmatprep.subr.mxu0 0.0
        %2375 = vmatpush1.msra.mxu0 0.0
        %2376 = vmatprep.subr.mxu0 0.0
        %2377 = vmatpush1.msra.mxu0 0.0
        %2378 = vmatprep.subr.mxu0 0.0
        %2379 = vmatpush1.msra.mxu0 0.0
        %2380 = vmatprep.subr.mxu0 0.0
        %2381 = vmatpush1.msra.mxu0 0.0
        %2382 = vmatprep.subr.mxu0 0.0
        %2383 = vmatpush1.msra.mxu0 0.0
        %2384 = vmatprep.subr.mxu0 0.0
        %2385 = vmatpush1.msra.mxu0 0.0
        %2386 = vmatprep.subr.mxu0 0.0
        %2387 = vmatpush1.msra.mxu0 0.0
        %2388 = vmatprep.subr.mxu0 0.0
        %2389 = vmatpush1.msra.mxu0 0.0
        %2390 = vmatprep.subr.mxu0 0.0
        %2391 = vmatpush1.msra.mxu0 0.0
        %2392 = vmatprep.subr.mxu0 0.0
        %2393 = vmatpush1.msra.mxu0 0.0
        %2394 = vmatprep.subr.mxu0 0.0
        %2395 = vmatpush1.msra.mxu0 0.0
        %2396 = vmatprep.subr.mxu0 0.0
        %2397 = vmatpush1.msra.mxu0 0.0
        %2398 = vmatprep.subr.mxu0 0.0
        %2399 = vmatpush1.msra.mxu0 0.0
        %2400 = vmatprep.subr.mxu0 0.0
        %2401 = vmatpush1.msra.mxu0 0.0
        %2402 = vmatprep.subr.mxu0 0.0
        %2403 = vmatpush1.msra.mxu0 0.0
        %2404 = vmatprep.subr.mxu0 0.0
        %2405 = vmatpush1.msra.mxu0 0.0
        %2406 = vmatprep.subr.mxu0 0.0
        %2407 = vmatpush1.msra.mxu0 0.0
        %2408 = vmatprep.subr.mxu0 0.0
        %2409 = vmatpush1.msra.mxu0 0.0
        %2410 = vmatprep.subr.mxu0 0.0
        %2411 = vmatpush1.msra.mxu0 0.0
        %2412 = vmatprep.subr.mxu0 0.0
        %2413 = vmatpush1.msra.mxu0 0.0
        %2414 = vmatprep.subr.mxu0 0.0
        %2415 = vmatpush1.msra.mxu0 0.0
        %2416 = vmatprep.subr.mxu0 0.0
        %2417 = vmatpush1.msra.mxu0 0.0
        %2418 = vmatprep.mubr.f32.mxu0 0.0
        %2419 = vmatmul.mubr.f32.gmra.mrb[0].mxu0 %v2348
        %v2420 = vpop.f32.mrb[0].mxu0
        %v2421 = vadd.f32 0.0, %v2420
        %v2422 = vpop.f32.mrb[0].mxu0
        %v2423 = vadd.f32 0.0, %v2422
        %2424 = vdwg.mxu0
        %v2425 = vadd.f32 %v2316, %v2421
        %v2426 = vadd.f32 %v2317, %v2423
        %v2427 = vld [vmem:[#allocation2 + $0x2] sm:$0x3f]
        %s2428 = scalar_lea.vmem %s3, 32
        %v2429 = vld [vmem:[%s2428] sm:$0x3]
        %v2431 = vcombine.high %v2427, %v2427
        %v2433 = vunpack.c.l.s4 1983009808
        %v2434 = vunpack.c.0.s8 %v2433
        %v2435 = vlaneseq
        %v2436 = vshrl.u32 %v2435, 7
        %v2437 = vsub.s32 %v2434, %v2436
        %v2438 = vrot.slane %v2427, %v2437
        %v2440 = vunpack.c.l.s4 1983009808
        %v2441 = vunpack.c.0.s8 %v2440
        %v2442 = vlaneseq
        %v2443 = vshrl.u32 %v2442, 7
        %v2444 = vsub.s32 %v2441, %v2443
        %v2445 = vrot.slane %v2431, %v2444
        %v2446 = vcombine.high %v2438, %v2438
        %2447 = vrot.lane.b32.xlu0 %v2438, 112
        %v2448 = vpop.permute.xlu0 %2447
        %2449 = vrot.lane.b32.xlu0 %v2446, 112
        %v2450 = vpop.permute.xlu0 %2449
        %2451 = vrot.lane.b32.xlu0 %v2445, 112
        %v2452 = vpop.permute.xlu0 %2451
        %v2453 = vsel %vm1277, %v2448, %v2450
        %v2454 = vsel %vm1277, %v2450, %v2452
        %v2456 = vsel %vm499, %v2429, 0
        %v2458 = vsel %vm331, %v2453, 0
        %v2460 = vsel %vm331, %v2454, 0
        %2462 = vmatprep.subr.mxu0 %v2460
        %2463 = vmatpush1.msra.mxu0 %v2458
        %2464 = vmatprep.subr.mxu0 0.0
        %2465 = vmatpush1.msra.mxu0 0.0
        %2466 = vmatprep.subr.mxu0 0.0
        %2467 = vmatpush1.msra.mxu0 0.0
        %2468 = vmatprep.subr.mxu0 0.0
        %2469 = vmatpush1.msra.mxu0 0.0
        %2470 = vmatprep.subr.mxu0 0.0
        %2471 = vmatpush1.msra.mxu0 0.0
        %2472 = vmatprep.subr.mxu0 0.0
        %2473 = vmatpush1.msra.mxu0 0.0
        %2474 = vmatprep.subr.mxu0 0.0
        %2475 = vmatpush1.msra.mxu0 0.0
        %2476 = vmatprep.subr.mxu0 0.0
        %2477 = vmatpush1.msra.mxu0 0.0
        %2478 = vmatprep.subr.mxu0 0.0
        %2479 = vmatpush1.msra.mxu0 0.0
        %2480 = vmatprep.subr.mxu0 0.0
        %2481 = vmatpush1.msra.mxu0 0.0
        %2482 = vmatprep.subr.mxu0 0.0
        %2483 = vmatpush1.msra.mxu0 0.0
        %2484 = vmatprep.subr.mxu0 0.0
        %2485 = vmatpush1.msra.mxu0 0.0
        %2486 = vmatprep.subr.mxu0 0.0
        %2487 = vmatpush1.msra.mxu0 0.0
        %2488 = vmatprep.subr.mxu0 0.0
        %2489 = vmatpush1.msra.mxu0 0.0
        %2490 = vmatprep.subr.mxu0 0.0
        %2491 = vmatpush1.msra.mxu0 0.0
        %2492 = vmatprep.subr.mxu0 0.0
        %2493 = vmatpush1.msra.mxu0 0.0
        %2494 = vmatprep.subr.mxu0 0.0
        %2495 = vmatpush1.msra.mxu0 0.0
        %2496 = vmatprep.subr.mxu0 0.0
        %2497 = vmatpush1.msra.mxu0 0.0
        %2498 = vmatprep.subr.mxu0 0.0
        %2499 = vmatpush1.msra.mxu0 0.0
        %2500 = vmatprep.subr.mxu0 0.0
        %2501 = vmatpush1.msra.mxu0 0.0
        %2502 = vmatprep.subr.mxu0 0.0
        %2503 = vmatpush1.msra.mxu0 0.0
        %2504 = vmatprep.subr.mxu0 0.0
        %2505 = vmatpush1.msra.mxu0 0.0
        %2506 = vmatprep.subr.mxu0 0.0
        %2507 = vmatpush1.msra.mxu0 0.0
        %2508 = vmatprep.subr.mxu0 0.0
        %2509 = vmatpush1.msra.mxu0 0.0
        %2510 = vmatprep.subr.mxu0 0.0
        %2511 = vmatpush1.msra.mxu0 0.0
        %2512 = vmatprep.subr.mxu0 0.0
        %2513 = vmatpush1.msra.mxu0 0.0
        %2514 = vmatprep.subr.mxu0 0.0
        %2515 = vmatpush1.msra.mxu0 0.0
        %2516 = vmatprep.subr.mxu0 0.0
        %2517 = vmatpush1.msra.mxu0 0.0
        %2518 = vmatprep.subr.mxu0 0.0
        %2519 = vmatpush1.msra.mxu0 0.0
        %2520 = vmatprep.subr.mxu0 0.0
        %2521 = vmatpush1.msra.mxu0 0.0
        %2522 = vmatprep.subr.mxu0 0.0
        %2523 = vmatpush1.msra.mxu0 0.0
        %2524 = vmatprep.subr.mxu0 0.0
        %2525 = vmatpush1.msra.mxu0 0.0
        %2526 = vmatprep.mubr.f32.mxu0 0.0
        %2527 = vmatmul.mubr.f32.gmra.mrb[0].mxu0 %v2456
        %v2528 = vpop.f32.mrb[0].mxu0
        %v2529 = vadd.f32 0.0, %v2528
        %v2530 = vpop.f32.mrb[0].mxu0
        %v2531 = vadd.f32 0.0, %v2530
        %2532 = vdwg.mxu0
        %v2533 = vadd.f32 %v2425, %v2529
        %v2534 = vadd.f32 %v2426, %v2531
        %v2535 = vld [vmem:[#allocation2 + $0x2] sm:$0x3f]
        %v2536 = vmul.f32 %v2535, %v1364
        %s2537 = scalar_lea.vmem %s3, 34
        %v2538 = vld [vmem:[%s2537] sm:$0x3]
        %v2540 = vcombine.high %v2536, %v2536
        %v2542 = vunpack.c.l.s4 1983009808
        %v2543 = vunpack.c.0.s8 %v2542
        %v2544 = vlaneseq
        %v2545 = vshrl.u32 %v2544, 7
        %v2546 = vsub.s32 %v2543, %v2545
        %v2547 = vrot.slane %v2536, %v2546
        %v2549 = vunpack.c.l.s4 1983009808
        %v2550 = vunpack.c.0.s8 %v2549
        %v2551 = vlaneseq
        %v2552 = vshrl.u32 %v2551, 7
        %v2553 = vsub.s32 %v2550, %v2552
        %v2554 = vrot.slane %v2540, %v2553
        %v2555 = vcombine.high %v2547, %v2547
        %2556 = vrot.lane.b32.xlu0 %v2547, 111
        %v2557 = vpop.permute.xlu0 %2556
        %2558 = vrot.lane.b32.xlu0 %v2555, 111
        %v2559 = vpop.permute.xlu0 %2558
        %2560 = vrot.lane.b32.xlu0 %v2554, 111
        %v2561 = vpop.permute.xlu0 %2560
        %v2562 = vsel %vm466, %v2557, %v2559
        %v2563 = vsel %vm466, %v2559, %v2561
        %v2565 = vsel %vm499, %v2538, 0
        %v2567 = vsel %vm331, %v2562, 0
        %v2569 = vsel %vm331, %v2563, 0
        %2571 = vmatprep.subr.mxu0 %v2569
        %2572 = vmatpush1.msra.mxu0 %v2567
        %2573 = vmatprep.subr.mxu0 0.0
        %2574 = vmatpush1.msra.mxu0 0.0
        %2575 = vmatprep.subr.mxu0 0.0
        %2576 = vmatpush1.msra.mxu0 0.0
        %2577 = vmatprep.subr.mxu0 0.0
        %2578 = vmatpush1.msra.mxu0 0.0
        %2579 = vmatprep.subr.mxu0 0.0
        %2580 = vmatpush1.msra.mxu0 0.0
        %2581 = vmatprep.subr.mxu0 0.0
        %2582 = vmatpush1.msra.mxu0 0.0
        %2583 = vmatprep.subr.mxu0 0.0
        %2584 = vmatpush1.msra.mxu0 0.0
        %2585 = vmatprep.subr.mxu0 0.0
        %2586 = vmatpush1.msra.mxu0 0.0
        %2587 = vmatprep.subr.mxu0 0.0
        %2588 = vmatpush1.msra.mxu0 0.0
        %2589 = vmatprep.subr.mxu0 0.0
        %2590 = vmatpush1.msra.mxu0 0.0
        %2591 = vmatprep.subr.mxu0 0.0
        %2592 = vmatpush1.msra.mxu0 0.0
        %2593 = vmatprep.subr.mxu0 0.0
        %2594 = vmatpush1.msra.mxu0 0.0
        %2595 = vmatprep.subr.mxu0 0.0
        %2596 = vmatpush1.msra.mxu0 0.0
        %2597 = vmatprep.subr.mxu0 0.0
        %2598 = vmatpush1.msra.mxu0 0.0
        %2599 = vmatprep.subr.mxu0 0.0
        %2600 = vmatpush1.msra.mxu0 0.0
        %2601 = vmatprep.subr.mxu0 0.0
        %2602 = vmatpush1.msra.mxu0 0.0
        %2603 = vmatprep.subr.mxu0 0.0
        %2604 = vmatpush1.msra.mxu0 0.0
        %2605 = vmatprep.subr.mxu0 0.0
        %2606 = vmatpush1.msra.mxu0 0.0
        %2607 = vmatprep.subr.mxu0 0.0
        %2608 = vmatpush1.msra.mxu0 0.0
        %2609 = vmatprep.subr.mxu0 0.0
        %2610 = vmatpush1.msra.mxu0 0.0
        %2611 = vmatprep.subr.mxu0 0.0
        %2612 = vmatpush1.msra.mxu0 0.0
        %2613 = vmatprep.subr.mxu0 0.0
        %2614 = vmatpush1.msra.mxu0 0.0
        %2615 = vmatprep.subr.mxu0 0.0
        %2616 = vmatpush1.msra.mxu0 0.0
        %2617 = vmatprep.subr.mxu0 0.0
        %2618 = vmatpush1.msra.mxu0 0.0
        %2619 = vmatprep.subr.mxu0 0.0
        %2620 = vmatpush1.msra.mxu0 0.0
        %2621 = vmatprep.subr.mxu0 0.0
        %2622 = vmatpush1.msra.mxu0 0.0
        %2623 = vmatprep.subr.mxu0 0.0
        %2624 = vmatpush1.msra.mxu0 0.0
        %2625 = vmatprep.subr.mxu0 0.0
        %2626 = vmatpush1.msra.mxu0 0.0
        %2627 = vmatprep.subr.mxu0 0.0
        %2628 = vmatpush1.msra.mxu0 0.0
        %2629 = vmatprep.subr.mxu0 0.0
        %2630 = vmatpush1.msra.mxu0 0.0
        %2631 = vmatprep.subr.mxu0 0.0
        %2632 = vmatpush1.msra.mxu0 0.0
        %2633 = vmatprep.subr.mxu0 0.0
        %2634 = vmatpush1.msra.mxu0 0.0
        %2635 = vmatprep.mubr.f32.mxu0 0.0
        %2636 = vmatmul.mubr.f32.gmra.mrb[0].mxu0 %v2565
        %v2637 = vpop.f32.mrb[0].mxu0
        %v2638 = vadd.f32 0.0, %v2637
        %v2639 = vpop.f32.mrb[0].mxu0
        %v2640 = vadd.f32 0.0, %v2639
        %2641 = vdwg.mxu0
        %v2642 = vadd.f32 %v2533, %v2638
        %v2643 = vadd.f32 %v2534, %v2640
        %s2644 = scalar_lea.vmem %s4, 2
        %v2645 = vld [vmem:[%s2644] sm:$0x3]
        %2647 = vset.pattern.permute.xlu0 0
        %2648 = vperm.xlu0 %2647, %v2645
        %v2649 = vpop.permute.xlu0 %2648
        %v2651 = vadd.f32 %v2642, %v2649
        %v2652 = vadd.f32 %v2643, %v2649
        %v2653 = vmax.f32 %v2651, 0.0
        %v2654 = vmax.f32 %v2652, 0.0
        %s2655 = scalar_lea.vmem %s5, 4
        %v2656 = vld [vmem:[%s2655] sm:$0xf]
        %v2658 = vsel %vm499, %v2656, 0
        %v2661 = vsel %vm331, %v2653, 0
        %v2664 = vsel %vm331, %v2654, 0
        %2666 = vmatprep.subr.mxu0 %v2664
        %2667 = vmatpush1.msra.mxu0 %v2661
        %2668 = vmatprep.subr.mxu0 0.0
        %2669 = vmatpush1.msra.mxu0 0.0
        %2670 = vmatprep.subr.mxu0 0.0
        %2671 = vmatpush1.msra.mxu0 0.0
        %2672 = vmatprep.subr.mxu0 0.0
        %2673 = vmatpush1.msra.mxu0 0.0
        %2674 = vmatprep.subr.mxu0 0.0
        %2675 = vmatpush1.msra.mxu0 0.0
        %2676 = vmatprep.subr.mxu0 0.0
        %2677 = vmatpush1.msra.mxu0 0.0
        %2678 = vmatprep.subr.mxu0 0.0
        %2679 = vmatpush1.msra.mxu0 0.0
        %2680 = vmatprep.subr.mxu0 0.0
        %2681 = vmatpush1.msra.mxu0 0.0
        %2682 = vmatprep.subr.mxu0 0.0
        %2683 = vmatpush1.msra.mxu0 0.0
        %2684 = vmatprep.subr.mxu0 0.0
        %2685 = vmatpush1.msra.mxu0 0.0
        %2686 = vmatprep.subr.mxu0 0.0
        %2687 = vmatpush1.msra.mxu0 0.0
        %2688 = vmatprep.subr.mxu0 0.0
        %2689 = vmatpush1.msra.mxu0 0.0
        %2690 = vmatprep.subr.mxu0 0.0
        %2691 = vmatpush1.msra.mxu0 0.0
        %2692 = vmatprep.subr.mxu0 0.0
        %2693 = vmatpush1.msra.mxu0 0.0
        %2694 = vmatprep.subr.mxu0 0.0
        %2695 = vmatpush1.msra.mxu0 0.0
        %2696 = vmatprep.subr.mxu0 0.0
        %2697 = vmatpush1.msra.mxu0 0.0
        %2698 = vmatprep.subr.mxu0 0.0
        %2699 = vmatpush1.msra.mxu0 0.0
        %2700 = vmatprep.subr.mxu0 0.0
        %2701 = vmatpush1.msra.mxu0 0.0
        %2702 = vmatprep.subr.mxu0 0.0
        %2703 = vmatpush1.msra.mxu0 0.0
        %2704 = vmatprep.subr.mxu0 0.0
        %2705 = vmatpush1.msra.mxu0 0.0
        %2706 = vmatprep.subr.mxu0 0.0
        %2707 = vmatpush1.msra.mxu0 0.0
        %2708 = vmatprep.subr.mxu0 0.0
        %2709 = vmatpush1.msra.mxu0 0.0
        %2710 = vmatprep.subr.mxu0 0.0
        %2711 = vmatpush1.msra.mxu0 0.0
        %2712 = vmatprep.subr.mxu0 0.0
        %2713 = vmatpush1.msra.mxu0 0.0
        %2714 = vmatprep.subr.mxu0 0.0
        %2715 = vmatpush1.msra.mxu0 0.0
        %2716 = vmatprep.subr.mxu0 0.0
        %2717 = vmatpush1.msra.mxu0 0.0
        %2718 = vmatprep.subr.mxu0 0.0
        %2719 = vmatpush1.msra.mxu0 0.0
        %2720 = vmatprep.subr.mxu0 0.0
        %2721 = vmatpush1.msra.mxu0 0.0
        %2722 = vmatprep.subr.mxu0 0.0
        %2723 = vmatpush1.msra.mxu0 0.0
        %2724 = vmatprep.subr.mxu0 0.0
        %2725 = vmatpush1.msra.mxu0 0.0
        %2726 = vmatprep.subr.mxu0 0.0
        %2727 = vmatpush1.msra.mxu0 0.0
        %2728 = vmatprep.subr.mxu0 0.0
        %2729 = vmatpush1.msra.mxu0 0.0
        %2730 = vmatprep.mubr.f32.mxu0 0.0
        %2731 = vmatmul.mubr.f32.gmra.mrb[0].mxu0 %v2658
        %v2732 = vpop.f32.mrb[0].mxu0
        %v2733 = vadd.f32 0.0, %v2732
        %v2734 = vpop.f32.mrb[0].mxu0
        %v2735 = vadd.f32 0.0, %v2734
        %2736 = vdwg.mxu0
        %v2739 = vcombine.low %v2733, %v2735
        %v2741 = vadd.f32 %v1583, %v2739
        %s2742 = scalar_lea.vmem %s6, 4
        %v2743 = vld [vmem:[%s2742] sm:$0xf]
        %2745 = vset.pattern.permute.xlu0 0
        %2746 = vperm.xlu0 %2745, %v2743
        %v2747 = vpop.permute.xlu0 %2746
        %v2749 = vunpack.c.l.s4 839922192
        %v2750 = vunpack.c.0.s8 %v2749
        %v2751 = vlaneseq
        %v2752 = vshrl.u32 %v2751, 7
        %v2753 = vsub.s32 %v2750, %v2752
        %v2754 = vrot.slane %v2747, %v2753
        %v2756 = vadd.f32 %v2741, %v2754
        %s2757 = scalar_lea.vmem %s1, 4
        %v2758 = vld [vmem:[%s2757] sm:$0x3]
        %s2759 = scalar_lea.vmem %s2, 4
        %v2760 = vld [vmem:[%s2759] sm:$0x3]
        %2762 = vset.pattern.permute.xlu0 0
        %2763 = vperm.xlu0 %2762, %v2760
        %v2764 = vpop.permute.xlu0 %2763
        %v2767 = vcombine.high %v2756, %v2756
        %v2769 = vsel %vm351, %v2758, 0
        %v2771 = vsel %vm355, %v2756, 0
        %v2773 = vsel %vm355, %v2767, 0
        %2775 = vmatprep.subr.mxu0 %v2773
        %2776 = vmatpush1.msra.mxu0 %v2771
        %2777 = vmatprep.subr.mxu0 0.0
        %2778 = vmatpush1.msra.mxu0 0.0
        %2779 = vmatprep.subr.mxu0 0.0
        %2780 = vmatpush1.msra.mxu0 0.0
        %2781 = vmatprep.subr.mxu0 0.0
        %2782 = vmatpush1.msra.mxu0 0.0
        %2783 = vmatprep.subr.mxu0 0.0
        %2784 = vmatpush1.msra.mxu0 0.0
        %2785 = vmatprep.subr.mxu0 0.0
        %2786 = vmatpush1.msra.mxu0 0.0
        %2787 = vmatprep.subr.mxu0 0.0
        %2788 = vmatpush1.msra.mxu0 0.0
        %2789 = vmatprep.subr.mxu0 0.0
        %2790 = vmatpush1.msra.mxu0 0.0
        %2791 = vmatprep.subr.mxu0 0.0
        %2792 = vmatpush1.msra.mxu0 0.0
        %2793 = vmatprep.subr.mxu0 0.0
        %2794 = vmatpush1.msra.mxu0 0.0
        %2795 = vmatprep.subr.mxu0 0.0
        %2796 = vmatpush1.msra.mxu0 0.0
        %2797 = vmatprep.subr.mxu0 0.0
        %2798 = vmatpush1.msra.mxu0 0.0
        %2799 = vmatprep.subr.mxu0 0.0
        %2800 = vmatpush1.msra.mxu0 0.0
        %2801 = vmatprep.subr.mxu0 0.0
        %2802 = vmatpush1.msra.mxu0 0.0
        %2803 = vmatprep.subr.mxu0 0.0
        %2804 = vmatpush1.msra.mxu0 0.0
        %2805 = vmatprep.subr.mxu0 0.0
        %2806 = vmatpush1.msra.mxu0 0.0
        %2807 = vmatprep.subr.mxu0 0.0
        %2808 = vmatpush1.msra.mxu0 0.0
        %2809 = vmatprep.subr.mxu0 0.0
        %2810 = vmatpush1.msra.mxu0 0.0
        %2811 = vmatprep.subr.mxu0 0.0
        %2812 = vmatpush1.msra.mxu0 0.0
        %2813 = vmatprep.subr.mxu0 0.0
        %2814 = vmatpush1.msra.mxu0 0.0
        %2815 = vmatprep.subr.mxu0 0.0
        %2816 = vmatpush1.msra.mxu0 0.0
        %2817 = vmatprep.subr.mxu0 0.0
        %2818 = vmatpush1.msra.mxu0 0.0
        %2819 = vmatprep.subr.mxu0 0.0
        %2820 = vmatpush1.msra.mxu0 0.0
        %2821 = vmatprep.subr.mxu0 0.0
        %2822 = vmatpush1.msra.mxu0 0.0
        %2823 = vmatprep.subr.mxu0 0.0
        %2824 = vmatpush1.msra.mxu0 0.0
        %2825 = vmatprep.subr.mxu0 0.0
        %2826 = vmatpush1.msra.mxu0 0.0
        %2827 = vmatprep.subr.mxu0 0.0
        %2828 = vmatpush1.msra.mxu0 0.0
        %2829 = vmatprep.subr.mxu0 0.0
        %2830 = vmatpush1.msra.mxu0 0.0
        %2831 = vmatprep.subr.mxu0 0.0
        %2832 = vmatpush1.msra.mxu0 0.0
        %2833 = vmatprep.subr.mxu0 0.0
        %2834 = vmatpush1.msra.mxu0 0.0
        %2835 = vmatprep.subr.mxu0 0.0
        %2836 = vmatpush1.msra.mxu0 0.0
        %2837 = vmatprep.subr.mxu0 0.0
        %2838 = vmatpush1.msra.mxu0 0.0
        %2839 = vmatprep.mubr.f32.mxu0 0.0
        %2840 = vmatmul.mubr.f32.gmra.mrb[0].mxu0 %v2769
        %v2841 = vpop.f32.mrb[0].mxu0
        %v2842 = vadd.f32 %v2764, %v2841
        %v2843 = vpop.f32.mrb[0].mxu0
        %v2844 = vadd.f32 %v2764, %v2843
        %2845 = vdwg.mxu0
        %v2846 = vmax.f32 %v2842, 0.0
        %v2847 = vmax.f32 %v2844, 0.0
        %v2850 = vcombine.low %v2846, %v2847
        %v2852 = vunpack.c.l.s4 1983009808
        %v2853 = vunpack.c.0.s8 %v2852
        %v2854 = vlaneseq
        %v2855 = vshrl.u32 %v2854, 7
        %v2856 = vsub.s32 %v2853, %v2855
        %v2857 = vrot.slane %v2850, %v2856
        %2859 = vst [vmem:[#allocation2 + $0x2] sm:$0xf] %v2857
        %v2860 = vld [vmem:[#allocation2] sm:$0x3f]
        %v2861 = vmul.f32 %v2860, %v467
        %s2862 = scalar_lea.vmem %s3, 36
        %v2863 = vld [vmem:[%s2862] sm:$0x3]
        %s2864 = scalar_lea.vmem %s3, 38
        %v2865 = vld [vmem:[%s2864] sm:$0x3]
        %v2867 = vcombine.high %v2860, %v2860
        %v2869 = vunpack.c.l.s4 1983009808
        %v2870 = vunpack.c.0.s8 %v2869
        %v2871 = vlaneseq
        %v2872 = vshrl.u32 %v2871, 7
        %v2873 = vsub.s32 %v2870, %v2872
        %v2874 = vrot.slane %v2860, %v2873
        %v2876 = vunpack.c.l.s4 1983009808
        %v2877 = vunpack.c.0.s8 %v2876
        %v2878 = vlaneseq
        %v2879 = vshrl.u32 %v2878, 7
        %v2880 = vsub.s32 %v2877, %v2879
        %v2881 = vrot.slane %v2867, %v2880
        %v2882 = vcombine.high %v2874, %v2874
        %2883 = vrot.lane.b32.xlu0 %v2874, 16
        %v2884 = vpop.permute.xlu0 %2883
        %2885 = vrot.lane.b32.xlu0 %v2882, 16
        %v2886 = vpop.permute.xlu0 %2885
        %2887 = vrot.lane.b32.xlu0 %v2881, 16
        %v2888 = vpop.permute.xlu0 %2887
        %v2889 = vsel %vm496, %v2884, %v2886
        %v2890 = vsel %vm496, %v2886, %v2888
        %v2892 = vsel %vm499, %v2865, 0
        %v2894 = vsel %vm331, %v2889, 0
        %v2896 = vsel %vm331, %v2890, 0
        %2898 = vmatprep.subr.mxu0 %v2896
        %2899 = vmatpush1.msra.mxu0 %v2894
        %2900 = vmatprep.subr.mxu0 0.0
        %2901 = vmatpush1.msra.mxu0 0.0
        %2902 = vmatprep.subr.mxu0 0.0
        %2903 = vmatpush1.msra.mxu0 0.0
        %2904 = vmatprep.subr.mxu0 0.0
        %2905 = vmatpush1.msra.mxu0 0.0
        %2906 = vmatprep.subr.mxu0 0.0
        %2907 = vmatpush1.msra.mxu0 0.0
        %2908 = vmatprep.subr.mxu0 0.0
        %2909 = vmatpush1.msra.mxu0 0.0
        %2910 = vmatprep.subr.mxu0 0.0
        %2911 = vmatpush1.msra.mxu0 0.0
        %2912 = vmatprep.subr.mxu0 0.0
        %2913 = vmatpush1.msra.mxu0 0.0
        %2914 = vmatprep.subr.mxu0 0.0
        %2915 = vmatpush1.msra.mxu0 0.0
        %2916 = vmatprep.subr.mxu0 0.0
        %2917 = vmatpush1.msra.mxu0 0.0
        %2918 = vmatprep.subr.mxu0 0.0
        %2919 = vmatpush1.msra.mxu0 0.0
        %2920 = vmatprep.subr.mxu0 0.0
        %2921 = vmatpush1.msra.mxu0 0.0
        %2922 = vmatprep.subr.mxu0 0.0
        %2923 = vmatpush1.msra.mxu0 0.0
        %2924 = vmatprep.subr.mxu0 0.0
        %2925 = vmatpush1.msra.mxu0 0.0
        %2926 = vmatprep.subr.mxu0 0.0
        %2927 = vmatpush1.msra.mxu0 0.0
        %2928 = vmatprep.subr.mxu0 0.0
        %2929 = vmatpush1.msra.mxu0 0.0
        %2930 = vmatprep.subr.mxu0 0.0
        %2931 = vmatpush1.msra.mxu0 0.0
        %2932 = vmatprep.subr.mxu0 0.0
        %2933 = vmatpush1.msra.mxu0 0.0
        %2934 = vmatprep.subr.mxu0 0.0
        %2935 = vmatpush1.msra.mxu0 0.0
        %2936 = vmatprep.subr.mxu0 0.0
        %2937 = vmatpush1.msra.mxu0 0.0
        %2938 = vmatprep.subr.mxu0 0.0
        %2939 = vmatpush1.msra.mxu0 0.0
        %2940 = vmatprep.subr.mxu0 0.0
        %2941 = vmatpush1.msra.mxu0 0.0
        %2942 = vmatprep.subr.mxu0 0.0
        %2943 = vmatpush1.msra.mxu0 0.0
        %2944 = vmatprep.subr.mxu0 0.0
        %2945 = vmatpush1.msra.mxu0 0.0
        %2946 = vmatprep.subr.mxu0 0.0
        %2947 = vmatpush1.msra.mxu0 0.0
        %2948 = vmatprep.subr.mxu0 0.0
        %2949 = vmatpush1.msra.mxu0 0.0
        %2950 = vmatprep.subr.mxu0 0.0
        %2951 = vmatpush1.msra.mxu0 0.0
        %2952 = vmatprep.subr.mxu0 0.0
        %2953 = vmatpush1.msra.mxu0 0.0
        %2954 = vmatprep.subr.mxu0 0.0
        %2955 = vmatpush1.msra.mxu0 0.0
        %2956 = vmatprep.subr.mxu0 0.0
        %2957 = vmatpush1.msra.mxu0 0.0
        %2958 = vmatprep.subr.mxu0 0.0
        %2959 = vmatpush1.msra.mxu0 0.0
        %2960 = vmatprep.subr.mxu0 0.0
        %2961 = vmatpush1.msra.mxu0 0.0
        %2962 = vmatprep.mubr.f32.mxu0 0.0
        %2963 = vmatmul.mubr.f32.gmra.mrb[0].mxu0 %v2892
        %v2964 = vpop.f32.mrb[0].mxu0
        %v2965 = vadd.f32 0.0, %v2964
        %v2966 = vpop.f32.mrb[0].mxu0
        %v2967 = vadd.f32 0.0, %v2966
        %2968 = vdwg.mxu0
        %v2970 = vcombine.high %v2861, %v2861
        %v2972 = vunpack.c.l.s4 1983009808
        %v2973 = vunpack.c.0.s8 %v2972
        %v2974 = vlaneseq
        %v2975 = vshrl.u32 %v2974, 7
        %v2976 = vsub.s32 %v2973, %v2975
        %v2977 = vrot.slane %v2861, %v2976
        %v2979 = vunpack.c.l.s4 1983009808
        %v2980 = vunpack.c.0.s8 %v2979
        %v2981 = vlaneseq
        %v2982 = vshrl.u32 %v2981, 7
        %v2983 = vsub.s32 %v2980, %v2982
        %v2984 = vrot.slane %v2970, %v2983
        %v2985 = vcombine.high %v2977, %v2977
        %2986 = vrot.lane.b32.xlu0 %v2977, 17
        %v2987 = vpop.permute.xlu0 %2986
        %2988 = vrot.lane.b32.xlu0 %v2985, 17
        %v2989 = vpop.permute.xlu0 %2988
        %2990 = vrot.lane.b32.xlu0 %v2984, 17
        %v2991 = vpop.permute.xlu0 %2990
        %v2992 = vsel %vm601, %v2987, %v2989
        %v2993 = vsel %vm601, %v2989, %v2991
        %v2995 = vsel %vm499, %v2863, 0
        %v2997 = vsel %vm331, %v2992, 0
        %v2999 = vsel %vm331, %v2993, 0
        %3001 = vmatprep.subr.mxu0 %v2999
        %3002 = vmatpush1.msra.mxu0 %v2997
        %3003 = vmatprep.subr.mxu0 0.0
        %3004 = vmatpush1.msra.mxu0 0.0
        %3005 = vmatprep.subr.mxu0 0.0
        %3006 = vmatpush1.msra.mxu0 0.0
        %3007 = vmatprep.subr.mxu0 0.0
        %3008 = vmatpush1.msra.mxu0 0.0
        %3009 = vmatprep.subr.mxu0 0.0
        %3010 = vmatpush1.msra.mxu0 0.0
        %3011 = vmatprep.subr.mxu0 0.0
        %3012 = vmatpush1.msra.mxu0 0.0
        %3013 = vmatprep.subr.mxu0 0.0
        %3014 = vmatpush1.msra.mxu0 0.0
        %3015 = vmatprep.subr.mxu0 0.0
        %3016 = vmatpush1.msra.mxu0 0.0
        %3017 = vmatprep.subr.mxu0 0.0
        %3018 = vmatpush1.msra.mxu0 0.0
        %3019 = vmatprep.subr.mxu0 0.0
        %3020 = vmatpush1.msra.mxu0 0.0
        %3021 = vmatprep.subr.mxu0 0.0
        %3022 = vmatpush1.msra.mxu0 0.0
        %3023 = vmatprep.subr.mxu0 0.0
        %3024 = vmatpush1.msra.mxu0 0.0
        %3025 = vmatprep.subr.mxu0 0.0
        %3026 = vmatpush1.msra.mxu0 0.0
        %3027 = vmatprep.subr.mxu0 0.0
        %3028 = vmatpush1.msra.mxu0 0.0
        %3029 = vmatprep.subr.mxu0 0.0
        %3030 = vmatpush1.msra.mxu0 0.0
        %3031 = vmatprep.subr.mxu0 0.0
        %3032 = vmatpush1.msra.mxu0 0.0
        %3033 = vmatprep.subr.mxu0 0.0
        %3034 = vmatpush1.msra.mxu0 0.0
        %3035 = vmatprep.subr.mxu0 0.0
        %3036 = vmatpush1.msra.mxu0 0.0
        %3037 = vmatprep.subr.mxu0 0.0
        %3038 = vmatpush1.msra.mxu0 0.0
        %3039 = vmatprep.subr.mxu0 0.0
        %3040 = vmatpush1.msra.mxu0 0.0
        %3041 = vmatprep.subr.mxu0 0.0
        %3042 = vmatpush1.msra.mxu0 0.0
        %3043 = vmatprep.subr.mxu0 0.0
        %3044 = vmatpush1.msra.mxu0 0.0
        %3045 = vmatprep.subr.mxu0 0.0
        %3046 = vmatpush1.msra.mxu0 0.0
        %3047 = vmatprep.subr.mxu0 0.0
        %3048 = vmatpush1.msra.mxu0 0.0
        %3049 = vmatprep.subr.mxu0 0.0
        %3050 = vmatpush1.msra.mxu0 0.0
        %3051 = vmatprep.subr.mxu0 0.0
        %3052 = vmatpush1.msra.mxu0 0.0
        %3053 = vmatprep.subr.mxu0 0.0
        %3054 = vmatpush1.msra.mxu0 0.0
        %3055 = vmatprep.subr.mxu0 0.0
        %3056 = vmatpush1.msra.mxu0 0.0
        %3057 = vmatprep.subr.mxu0 0.0
        %3058 = vmatpush1.msra.mxu0 0.0
        %3059 = vmatprep.subr.mxu0 0.0
        %3060 = vmatpush1.msra.mxu0 0.0
        %3061 = vmatprep.subr.mxu0 0.0
        %3062 = vmatpush1.msra.mxu0 0.0
        %3063 = vmatprep.subr.mxu0 0.0
        %3064 = vmatpush1.msra.mxu0 0.0
        %3065 = vmatprep.mubr.f32.mxu0 0.0
        %3066 = vmatmul.mubr.f32.gmra.mrb[0].mxu0 %v2995
        %v3067 = vpop.f32.mrb[0].mxu0
        %v3068 = vadd.f32 %v2965, %v3067
        %v3069 = vpop.f32.mrb[0].mxu0
        %v3070 = vadd.f32 %v2967, %v3069
        %3071 = vdwg.mxu0
        %v3072 = vld [vmem:[#allocation2] sm:$0x3f]
        %v3073 = vmul.f32 %v3072, %v704
        %s3074 = scalar_lea.vmem %s3, 40
        %v3075 = vld [vmem:[%s3074] sm:$0x3]
        %v3077 = vcombine.high %v3073, %v3073
        %v3079 = vunpack.c.l.s4 1983009808
        %v3080 = vunpack.c.0.s8 %v3079
        %v3081 = vlaneseq
        %v3082 = vshrl.u32 %v3081, 7
        %v3083 = vsub.s32 %v3080, %v3082
        %v3084 = vrot.slane %v3073, %v3083
        %v3086 = vunpack.c.l.s4 1983009808
        %v3087 = vunpack.c.0.s8 %v3086
        %v3088 = vlaneseq
        %v3089 = vshrl.u32 %v3088, 7
        %v3090 = vsub.s32 %v3087, %v3089
        %v3091 = vrot.slane %v3077, %v3090
        %v3092 = vcombine.high %v3084, %v3084
        %3093 = vrot.lane.b32.xlu0 %v3084, 15
        %v3094 = vpop.permute.xlu0 %3093
        %3095 = vrot.lane.b32.xlu0 %v3092, 15
        %v3096 = vpop.permute.xlu0 %3095
        %3097 = vrot.lane.b32.xlu0 %v3091, 15
        %v3098 = vpop.permute.xlu0 %3097
        %v3099 = vsel %vm732, %v3094, %v3096
        %v3100 = vsel %vm732, %v3096, %v3098
        %v3102 = vsel %vm499, %v3075, 0
        %v3104 = vsel %vm331, %v3099, 0
        %v3106 = vsel %vm331, %v3100, 0
        %3108 = vmatprep.subr.mxu0 %v3106
        %3109 = vmatpush1.msra.mxu0 %v3104
        %3110 = vmatprep.subr.mxu0 0.0
        %3111 = vmatpush1.msra.mxu0 0.0
        %3112 = vmatprep.subr.mxu0 0.0
        %3113 = vmatpush1.msra.mxu0 0.0
        %3114 = vmatprep.subr.mxu0 0.0
        %3115 = vmatpush1.msra.mxu0 0.0
        %3116 = vmatprep.subr.mxu0 0.0
        %3117 = vmatpush1.msra.mxu0 0.0
        %3118 = vmatprep.subr.mxu0 0.0
        %3119 = vmatpush1.msra.mxu0 0.0
        %3120 = vmatprep.subr.mxu0 0.0
        %3121 = vmatpush1.msra.mxu0 0.0
        %3122 = vmatprep.subr.mxu0 0.0
        %3123 = vmatpush1.msra.mxu0 0.0
        %3124 = vmatprep.subr.mxu0 0.0
        %3125 = vmatpush1.msra.mxu0 0.0
        %3126 = vmatprep.subr.mxu0 0.0
        %3127 = vmatpush1.msra.mxu0 0.0
        %3128 = vmatprep.subr.mxu0 0.0
        %3129 = vmatpush1.msra.mxu0 0.0
        %3130 = vmatprep.subr.mxu0 0.0
        %3131 = vmatpush1.msra.mxu0 0.0
        %3132 = vmatprep.subr.mxu0 0.0
        %3133 = vmatpush1.msra.mxu0 0.0
        %3134 = vmatprep.subr.mxu0 0.0
        %3135 = vmatpush1.msra.mxu0 0.0
        %3136 = vmatprep.subr.mxu0 0.0
        %3137 = vmatpush1.msra.mxu0 0.0
        %3138 = vmatprep.subr.mxu0 0.0
        %3139 = vmatpush1.msra.mxu0 0.0
        %3140 = vmatprep.subr.mxu0 0.0
        %3141 = vmatpush1.msra.mxu0 0.0
        %3142 = vmatprep.subr.mxu0 0.0
        %3143 = vmatpush1.msra.mxu0 0.0
        %3144 = vmatprep.subr.mxu0 0.0
        %3145 = vmatpush1.msra.mxu0 0.0
        %3146 = vmatprep.subr.mxu0 0.0
        %3147 = vmatpush1.msra.mxu0 0.0
        %3148 = vmatprep.subr.mxu0 0.0
        %3149 = vmatpush1.msra.mxu0 0.0
        %3150 = vmatprep.subr.mxu0 0.0
        %3151 = vmatpush1.msra.mxu0 0.0
        %3152 = vmatprep.subr.mxu0 0.0
        %3153 = vmatpush1.msra.mxu0 0.0
        %3154 = vmatprep.subr.mxu0 0.0
        %3155 = vmatpush1.msra.mxu0 0.0
        %3156 = vmatprep.subr.mxu0 0.0
        %3157 = vmatpush1.msra.mxu0 0.0
        %3158 = vmatprep.subr.mxu0 0.0
        %3159 = vmatpush1.msra.mxu0 0.0
        %3160 = vmatprep.subr.mxu0 0.0
        %3161 = vmatpush1.msra.mxu0 0.0
        %3162 = vmatprep.subr.mxu0 0.0
        %3163 = vmatpush1.msra.mxu0 0.0
        %3164 = vmatprep.subr.mxu0 0.0
        %3165 = vmatpush1.msra.mxu0 0.0
        %3166 = vmatprep.subr.mxu0 0.0
        %3167 = vmatpush1.msra.mxu0 0.0
        %3168 = vmatprep.subr.mxu0 0.0
        %3169 = vmatpush1.msra.mxu0 0.0
        %3170 = vmatprep.subr.mxu0 0.0
        %3171 = vmatpush1.msra.mxu0 0.0
        %3172 = vmatprep.mubr.f32.mxu0 0.0
        %3173 = vmatmul.mubr.f32.gmra.mrb[0].mxu0 %v3102
        %v3174 = vpop.f32.mrb[0].mxu0
        %v3175 = vadd.f32 0.0, %v3174
        %v3176 = vpop.f32.mrb[0].mxu0
        %v3177 = vadd.f32 0.0, %v3176
        %3178 = vdwg.mxu0
        %v3179 = vadd.f32 %v3068, %v3175
        %v3180 = vadd.f32 %v3070, %v3177
        %v3181 = vld [vmem:[#allocation2] sm:$0x3f]
        %v3182 = vmul.f32 %v3181, %v820
        %s3183 = scalar_lea.vmem %s3, 42
        %v3184 = vld [vmem:[%s3183] sm:$0x3]
        %v3186 = vcombine.high %v3182, %v3182
        %v3188 = vunpack.c.l.s4 1983009808
        %v3189 = vunpack.c.0.s8 %v3188
        %v3190 = vlaneseq
        %v3191 = vshrl.u32 %v3190, 7
        %v3192 = vsub.s32 %v3189, %v3191
        %v3193 = vrot.slane %v3182, %v3192
        %v3195 = vunpack.c.l.s4 1983009808
        %v3196 = vunpack.c.0.s8 %v3195
        %v3197 = vlaneseq
        %v3198 = vshrl.u32 %v3197, 7
        %v3199 = vsub.s32 %v3196, %v3198
        %v3200 = vrot.slane %v3186, %v3199
        %v3201 = vcombine.high %v3193, %v3193
        %3202 = vrot.lane.b32.xlu0 %v3193, 1
        %v3203 = vpop.permute.xlu0 %3202
        %3204 = vrot.lane.b32.xlu0 %v3201, 1
        %v3205 = vpop.permute.xlu0 %3204
        %3206 = vrot.lane.b32.xlu0 %v3200, 1
        %v3207 = vpop.permute.xlu0 %3206
        %v3208 = vsel %vm848, %v3203, %v3205
        %v3209 = vsel %vm848, %v3205, %v3207
        %v3211 = vsel %vm499, %v3184, 0
        %v3213 = vsel %vm331, %v3208, 0
        %v3215 = vsel %vm331, %v3209, 0
        %3217 = vmatprep.subr.mxu0 %v3215
        %3218 = vmatpush1.msra.mxu0 %v3213
        %3219 = vmatprep.subr.mxu0 0.0
        %3220 = vmatpush1.msra.mxu0 0.0
        %3221 = vmatprep.subr.mxu0 0.0
        %3222 = vmatpush1.msra.mxu0 0.0
        %3223 = vmatprep.subr.mxu0 0.0
        %3224 = vmatpush1.msra.mxu0 0.0
        %3225 = vmatprep.subr.mxu0 0.0
        %3226 = vmatpush1.msra.mxu0 0.0
        %3227 = vmatprep.subr.mxu0 0.0
        %3228 = vmatpush1.msra.mxu0 0.0
        %3229 = vmatprep.subr.mxu0 0.0
        %3230 = vmatpush1.msra.mxu0 0.0
        %3231 = vmatprep.subr.mxu0 0.0
        %3232 = vmatpush1.msra.mxu0 0.0
        %3233 = vmatprep.subr.mxu0 0.0
        %3234 = vmatpush1.msra.mxu0 0.0
        %3235 = vmatprep.subr.mxu0 0.0
        %3236 = vmatpush1.msra.mxu0 0.0
        %3237 = vmatprep.subr.mxu0 0.0
        %3238 = vmatpush1.msra.mxu0 0.0
        %3239 = vmatprep.subr.mxu0 0.0
        %3240 = vmatpush1.msra.mxu0 0.0
        %3241 = vmatprep.subr.mxu0 0.0
        %3242 = vmatpush1.msra.mxu0 0.0
        %3243 = vmatprep.subr.mxu0 0.0
        %3244 = vmatpush1.msra.mxu0 0.0
        %3245 = vmatprep.subr.mxu0 0.0
        %3246 = vmatpush1.msra.mxu0 0.0
        %3247 = vmatprep.subr.mxu0 0.0
        %3248 = vmatpush1.msra.mxu0 0.0
        %3249 = vmatprep.subr.mxu0 0.0
        %3250 = vmatpush1.msra.mxu0 0.0
        %3251 = vmatprep.subr.mxu0 0.0
        %3252 = vmatpush1.msra.mxu0 0.0
        %3253 = vmatprep.subr.mxu0 0.0
        %3254 = vmatpush1.msra.mxu0 0.0
        %3255 = vmatprep.subr.mxu0 0.0
        %3256 = vmatpush1.msra.mxu0 0.0
        %3257 = vmatprep.subr.mxu0 0.0
        %3258 = vmatpush1.msra.mxu0 0.0
        %3259 = vmatprep.subr.mxu0 0.0
        %3260 = vmatpush1.msra.mxu0 0.0
        %3261 = vmatprep.subr.mxu0 0.0
        %3262 = vmatpush1.msra.mxu0 0.0
        %3263 = vmatprep.subr.mxu0 0.0
        %3264 = vmatpush1.msra.mxu0 0.0
        %3265 = vmatprep.subr.mxu0 0.0
        %3266 = vmatpush1.msra.mxu0 0.0
        %3267 = vmatprep.subr.mxu0 0.0
        %3268 = vmatpush1.msra.mxu0 0.0
        %3269 = vmatprep.subr.mxu0 0.0
        %3270 = vmatpush1.msra.mxu0 0.0
        %3271 = vmatprep.subr.mxu0 0.0
        %3272 = vmatpush1.msra.mxu0 0.0
        %3273 = vmatprep.subr.mxu0 0.0
        %3274 = vmatpush1.msra.mxu0 0.0
        %3275 = vmatprep.subr.mxu0 0.0
        %3276 = vmatpush1.msra.mxu0 0.0
        %3277 = vmatprep.subr.mxu0 0.0
        %3278 = vmatpush1.msra.mxu0 0.0
        %3279 = vmatprep.subr.mxu0 0.0
        %3280 = vmatpush1.msra.mxu0 0.0
        %3281 = vmatprep.mubr.f32.mxu0 0.0
        %3282 = vmatmul.mubr.f32.gmra.mrb[0].mxu0 %v3211
        %v3283 = vpop.f32.mrb[0].mxu0
        %v3284 = vadd.f32 0.0, %v3283
        %v3285 = vpop.f32.mrb[0].mxu0
        %v3286 = vadd.f32 0.0, %v3285
        %3287 = vdwg.mxu0
        %v3288 = vadd.f32 %v3179, %v3284
        %v3289 = vadd.f32 %v3180, %v3286
        %v3290 = vld [vmem:[#allocation2 + $0x2] sm:$0xf]
        %s3291 = scalar_lea.vmem %s3, 44
        %v3292 = vld [vmem:[%s3291] sm:$0x3]
        %v3295 = vunpack.c.l.s4 1983009808
        %v3296 = vunpack.c.0.s8 %v3295
        %v3297 = vlaneseq
        %v3298 = vshrl.u32 %v3297, 7
        %v3299 = vsub.s32 %v3296, %v3298
        %v3300 = vrot.slane %v3290, %v3299
        %v3301 = vcombine.high %v3300, %v3300
        %v3303 = vsel %vm499, %v3292, 0
        %v3305 = vsel %vm331, %v3300, 0
        %v3307 = vsel %vm331, %v3301, 0
        %3309 = vmatprep.subr.mxu0 %v3307
        %3310 = vmatpush1.msra.mxu0 %v3305
        %3311 = vmatprep.subr.mxu0 0.0
        %3312 = vmatpush1.msra.mxu0 0.0
        %3313 = vmatprep.subr.mxu0 0.0
        %3314 = vmatpush1.msra.mxu0 0.0
        %3315 = vmatprep.subr.mxu0 0.0
        %3316 = vmatpush1.msra.mxu0 0.0
        %3317 = vmatprep.subr.mxu0 0.0
        %3318 = vmatpush1.msra.mxu0 0.0
        %3319 = vmatprep.subr.mxu0 0.0
        %3320 = vmatpush1.msra.mxu0 0.0
        %3321 = vmatprep.subr.mxu0 0.0
        %3322 = vmatpush1.msra.mxu0 0.0
        %3323 = vmatprep.subr.mxu0 0.0
        %3324 = vmatpush1.msra.mxu0 0.0
        %3325 = vmatprep.subr.mxu0 0.0
        %3326 = vmatpush1.msra.mxu0 0.0
        %3327 = vmatprep.subr.mxu0 0.0
        %3328 = vmatpush1.msra.mxu0 0.0
        %3329 = vmatprep.subr.mxu0 0.0
        %3330 = vmatpush1.msra.mxu0 0.0
        %3331 = vmatprep.subr.mxu0 0.0
        %3332 = vmatpush1.msra.mxu0 0.0
        %3333 = vmatprep.subr.mxu0 0.0
        %3334 = vmatpush1.msra.mxu0 0.0
        %3335 = vmatprep.subr.mxu0 0.0
        %3336 = vmatpush1.msra.mxu0 0.0
        %3337 = vmatprep.subr.mxu0 0.0
        %3338 = vmatpush1.msra.mxu0 0.0
        %3339 = vmatprep.subr.mxu0 0.0
        %3340 = vmatpush1.msra.mxu0 0.0
        %3341 = vmatprep.subr.mxu0 0.0
        %3342 = vmatpush1.msra.mxu0 0.0
        %3343 = vmatprep.subr.mxu0 0.0
        %3344 = vmatpush1.msra.mxu0 0.0
        %3345 = vmatprep.subr.mxu0 0.0
        %3346 = vmatpush1.msra.mxu0 0.0
        %3347 = vmatprep.subr.mxu0 0.0
        %3348 = vmatpush1.msra.mxu0 0.0
        %3349 = vmatprep.subr.mxu0 0.0
        %3350 = vmatpush1.msra.mxu0 0.0
        %3351 = vmatprep.subr.mxu0 0.0
        %3352 = vmatpush1.msra.mxu0 0.0
        %3353 = vmatprep.subr.mxu0 0.0
        %3354 = vmatpush1.msra.mxu0 0.0
        %3355 = vmatprep.subr.mxu0 0.0
        %3356 = vmatpush1.msra.mxu0 0.0
        %3357 = vmatprep.subr.mxu0 0.0
        %3358 = vmatpush1.msra.mxu0 0.0
        %3359 = vmatprep.subr.mxu0 0.0
        %3360 = vmatpush1.msra.mxu0 0.0
        %3361 = vmatprep.subr.mxu0 0.0
        %3362 = vmatpush1.msra.mxu0 0.0
        %3363 = vmatprep.subr.mxu0 0.0
        %3364 = vmatpush1.msra.mxu0 0.0
        %3365 = vmatprep.subr.mxu0 0.0
        %3366 = vmatpush1.msra.mxu0 0.0
        %3367 = vmatprep.subr.mxu0 0.0
        %3368 = vmatpush1.msra.mxu0 0.0
        %3369 = vmatprep.subr.mxu0 0.0
        %3370 = vmatpush1.msra.mxu0 0.0
        %3371 = vmatprep.subr.mxu0 0.0
        %3372 = vmatpush1.msra.mxu0 0.0
        %3373 = vmatprep.mubr.f32.mxu0 0.0
        %3374 = vmatmul.mubr.f32.gmra.mrb[0].mxu0 %v3303
        %v3375 = vpop.f32.mrb[0].mxu0
        %v3376 = vadd.f32 0.0, %v3375
        %v3377 = vpop.f32.mrb[0].mxu0
        %v3378 = vadd.f32 0.0, %v3377
        %3379 = vdwg.mxu0
        %v3380 = vadd.f32 %v3288, %v3376
        %v3381 = vadd.f32 %v3289, %v3378
        %v3382 = vld [vmem:[#allocation2 + $0x2] sm:$0x3f]
        %v3383 = vmul.f32 %v3382, %v1027
        %s3384 = scalar_lea.vmem %s3, 46
        %v3385 = vld [vmem:[%s3384] sm:$0x3]
        %v3387 = vcombine.high %v3383, %v3383
        %v3389 = vunpack.c.l.s4 1983009808
        %v3390 = vunpack.c.0.s8 %v3389
        %v3391 = vlaneseq
        %v3392 = vshrl.u32 %v3391, 7
        %v3393 = vsub.s32 %v3390, %v3392
        %v3394 = vrot.slane %v3383, %v3393
        %v3396 = vunpack.c.l.s4 1983009808
        %v3397 = vunpack.c.0.s8 %v3396
        %v3398 = vlaneseq
        %v3399 = vshrl.u32 %v3398, 7
        %v3400 = vsub.s32 %v3397, %v3399
        %v3401 = vrot.slane %v3387, %v3400
        %v3402 = vcombine.high %v3394, %v3394
        %3403 = vrot.lane.b32.xlu0 %v3394, 127
        %v3404 = vpop.permute.xlu0 %3403
        %3405 = vrot.lane.b32.xlu0 %v3402, 127
        %v3406 = vpop.permute.xlu0 %3405
        %3407 = vrot.lane.b32.xlu0 %v3401, 127
        %v3408 = vpop.permute.xlu0 %3407
        %v3409 = vsel %vm819, %v3404, %v3406
        %v3410 = vsel %vm819, %v3406, %v3408
        %v3412 = vsel %vm499, %v3385, 0
        %v3414 = vsel %vm331, %v3409, 0
        %v3416 = vsel %vm331, %v3410, 0
        %3418 = vmatprep.subr.mxu0 %v3416
        %3419 = vmatpush1.msra.mxu0 %v3414
        %3420 = vmatprep.subr.mxu0 0.0
        %3421 = vmatpush1.msra.mxu0 0.0
        %3422 = vmatprep.subr.mxu0 0.0
        %3423 = vmatpush1.msra.mxu0 0.0
        %3424 = vmatprep.subr.mxu0 0.0
        %3425 = vmatpush1.msra.mxu0 0.0
        %3426 = vmatprep.subr.mxu0 0.0
        %3427 = vmatpush1.msra.mxu0 0.0
        %3428 = vmatprep.subr.mxu0 0.0
        %3429 = vmatpush1.msra.mxu0 0.0
        %3430 = vmatprep.subr.mxu0 0.0
        %3431 = vmatpush1.msra.mxu0 0.0
        %3432 = vmatprep.subr.mxu0 0.0
        %3433 = vmatpush1.msra.mxu0 0.0
        %3434 = vmatprep.subr.mxu0 0.0
        %3435 = vmatpush1.msra.mxu0 0.0
        %3436 = vmatprep.subr.mxu0 0.0
        %3437 = vmatpush1.msra.mxu0 0.0
        %3438 = vmatprep.subr.mxu0 0.0
        %3439 = vmatpush1.msra.mxu0 0.0
        %3440 = vmatprep.subr.mxu0 0.0
        %3441 = vmatpush1.msra.mxu0 0.0
        %3442 = vmatprep.subr.mxu0 0.0
        %3443 = vmatpush1.msra.mxu0 0.0
        %3444 = vmatprep.subr.mxu0 0.0
        %3445 = vmatpush1.msra.mxu0 0.0
        %3446 = vmatprep.subr.mxu0 0.0
        %3447 = vmatpush1.msra.mxu0 0.0
        %3448 = vmatprep.subr.mxu0 0.0
        %3449 = vmatpush1.msra.mxu0 0.0
        %3450 = vmatprep.subr.mxu0 0.0
        %3451 = vmatpush1.msra.mxu0 0.0
        %3452 = vmatprep.subr.mxu0 0.0
        %3453 = vmatpush1.msra.mxu0 0.0
        %3454 = vmatprep.subr.mxu0 0.0
        %3455 = vmatpush1.msra.mxu0 0.0
        %3456 = vmatprep.subr.mxu0 0.0
        %3457 = vmatpush1.msra.mxu0 0.0
        %3458 = vmatprep.subr.mxu0 0.0
        %3459 = vmatpush1.msra.mxu0 0.0
        %3460 = vmatprep.subr.mxu0 0.0
        %3461 = vmatpush1.msra.mxu0 0.0
        %3462 = vmatprep.subr.mxu0 0.0
        %3463 = vmatpush1.msra.mxu0 0.0
        %3464 = vmatprep.subr.mxu0 0.0
        %3465 = vmatpush1.msra.mxu0 0.0
        %3466 = vmatprep.subr.mxu0 0.0
        %3467 = vmatpush1.msra.mxu0 0.0
        %3468 = vmatprep.subr.mxu0 0.0
        %3469 = vmatpush1.msra.mxu0 0.0
        %3470 = vmatprep.subr.mxu0 0.0
        %3471 = vmatpush1.msra.mxu0 0.0
        %3472 = vmatprep.subr.mxu0 0.0
        %3473 = vmatpush1.msra.mxu0 0.0
        %3474 = vmatprep.subr.mxu0 0.0
        %3475 = vmatpush1.msra.mxu0 0.0
        %3476 = vmatprep.subr.mxu0 0.0
        %3477 = vmatpush1.msra.mxu0 0.0
        %3478 = vmatprep.subr.mxu0 0.0
        %3479 = vmatpush1.msra.mxu0 0.0
        %3480 = vmatprep.subr.mxu0 0.0
        %3481 = vmatpush1.msra.mxu0 0.0
        %3482 = vmatprep.mubr.f32.mxu0 0.0
        %3483 = vmatmul.mubr.f32.gmra.mrb[0].mxu0 %v3412
        %v3484 = vpop.f32.mrb[0].mxu0
        %v3485 = vadd.f32 0.0, %v3484
        %v3486 = vpop.f32.mrb[0].mxu0
        %v3487 = vadd.f32 0.0, %v3486
        %3488 = vdwg.mxu0
        %v3489 = vadd.f32 %v3380, %v3485
        %v3490 = vadd.f32 %v3381, %v3487
        %v3491 = vld [vmem:[#allocation2 + $0x2] sm:$0x3f]
        %v3492 = vmul.f32 %v3491, %v1141
        %s3493 = scalar_lea.vmem %s3, 48
        %v3494 = vld [vmem:[%s3493] sm:$0x3]
        %v3496 = vcombine.high %v3492, %v3492
        %v3498 = vunpack.c.l.s4 1983009808
        %v3499 = vunpack.c.0.s8 %v3498
        %v3500 = vlaneseq
        %v3501 = vshrl.u32 %v3500, 7
        %v3502 = vsub.s32 %v3499, %v3501
        %v3503 = vrot.slane %v3492, %v3502
        %v3505 = vunpack.c.l.s4 1983009808
        %v3506 = vunpack.c.0.s8 %v3505
        %v3507 = vlaneseq
        %v3508 = vshrl.u32 %v3507, 7
        %v3509 = vsub.s32 %v3506, %v3508
        %v3510 = vrot.slane %v3496, %v3509
        %v3511 = vcombine.high %v3503, %v3503
        %3512 = vrot.lane.b32.xlu0 %v3503, 113
        %v3513 = vpop.permute.xlu0 %3512
        %3514 = vrot.lane.b32.xlu0 %v3511, 113
        %v3515 = vpop.permute.xlu0 %3514
        %3516 = vrot.lane.b32.xlu0 %v3510, 113
        %v3517 = vpop.permute.xlu0 %3516
        %v3518 = vsel %vm703, %v3513, %v3515
        %v3519 = vsel %vm703, %v3515, %v3517
        %v3521 = vsel %vm499, %v3494, 0
        %v3523 = vsel %vm331, %v3518, 0
        %v3525 = vsel %vm331, %v3519, 0
        %3527 = vmatprep.subr.mxu0 %v3525
        %3528 = vmatpush1.msra.mxu0 %v3523
        %3529 = vmatprep.subr.mxu0 0.0
        %3530 = vmatpush1.msra.mxu0 0.0
        %3531 = vmatprep.subr.mxu0 0.0
        %3532 = vmatpush1.msra.mxu0 0.0
        %3533 = vmatprep.subr.mxu0 0.0
        %3534 = vmatpush1.msra.mxu0 0.0
        %3535 = vmatprep.subr.mxu0 0.0
        %3536 = vmatpush1.msra.mxu0 0.0
        %3537 = vmatprep.subr.mxu0 0.0
        %3538 = vmatpush1.msra.mxu0 0.0
        %3539 = vmatprep.subr.mxu0 0.0
        %3540 = vmatpush1.msra.mxu0 0.0
        %3541 = vmatprep.subr.mxu0 0.0
        %3542 = vmatpush1.msra.mxu0 0.0
        %3543 = vmatprep.subr.mxu0 0.0
        %3544 = vmatpush1.msra.mxu0 0.0
        %3545 = vmatprep.subr.mxu0 0.0
        %3546 = vmatpush1.msra.mxu0 0.0
        %3547 = vmatprep.subr.mxu0 0.0
        %3548 = vmatpush1.msra.mxu0 0.0
        %3549 = vmatprep.subr.mxu0 0.0
        %3550 = vmatpush1.msra.mxu0 0.0
        %3551 = vmatprep.subr.mxu0 0.0
        %3552 = vmatpush1.msra.mxu0 0.0
        %3553 = vmatprep.subr.mxu0 0.0
        %3554 = vmatpush1.msra.mxu0 0.0
        %3555 = vmatprep.subr.mxu0 0.0
        %3556 = vmatpush1.msra.mxu0 0.0
        %3557 = vmatprep.subr.mxu0 0.0
        %3558 = vmatpush1.msra.mxu0 0.0
        %3559 = vmatprep.subr.mxu0 0.0
        %3560 = vmatpush1.msra.mxu0 0.0
        %3561 = vmatprep.subr.mxu0 0.0
        %3562 = vmatpush1.msra.mxu0 0.0
        %3563 = vmatprep.subr.mxu0 0.0
        %3564 = vmatpush1.msra.mxu0 0.0
        %3565 = vmatprep.subr.mxu0 0.0
        %3566 = vmatpush1.msra.mxu0 0.0
        %3567 = vmatprep.subr.mxu0 0.0
        %3568 = vmatpush1.msra.mxu0 0.0
        %3569 = vmatprep.subr.mxu0 0.0
        %3570 = vmatpush1.msra.mxu0 0.0
        %3571 = vmatprep.subr.mxu0 0.0
        %3572 = vmatpush1.msra.mxu0 0.0
        %3573 = vmatprep.subr.mxu0 0.0
        %3574 = vmatpush1.msra.mxu0 0.0
        %3575 = vmatprep.subr.mxu0 0.0
        %3576 = vmatpush1.msra.mxu0 0.0
        %3577 = vmatprep.subr.mxu0 0.0
        %3578 = vmatpush1.msra.mxu0 0.0
        %3579 = vmatprep.subr.mxu0 0.0
        %3580 = vmatpush1.msra.mxu0 0.0
        %3581 = vmatprep.subr.mxu0 0.0
        %3582 = vmatpush1.msra.mxu0 0.0
        %3583 = vmatprep.subr.mxu0 0.0
        %3584 = vmatpush1.msra.mxu0 0.0
        %3585 = vmatprep.subr.mxu0 0.0
        %3586 = vmatpush1.msra.mxu0 0.0
        %3587 = vmatprep.subr.mxu0 0.0
        %3588 = vmatpush1.msra.mxu0 0.0
        %3589 = vmatprep.subr.mxu0 0.0
        %3590 = vmatpush1.msra.mxu0 0.0
        %3591 = vmatprep.mubr.f32.mxu0 0.0
        %3592 = vmatmul.mubr.f32.gmra.mrb[0].mxu0 %v3521
        %v3593 = vpop.f32.mrb[0].mxu0
        %v3594 = vadd.f32 0.0, %v3593
        %v3595 = vpop.f32.mrb[0].mxu0
        %v3596 = vadd.f32 0.0, %v3595
        %3597 = vdwg.mxu0
        %v3598 = vadd.f32 %v3489, %v3594
        %v3599 = vadd.f32 %v3490, %v3596
        %v3600 = vld [vmem:[#allocation2 + $0x2] sm:$0x3f]
        %s3601 = scalar_lea.vmem %s3, 50
        %v3602 = vld [vmem:[%s3601] sm:$0x3]
        %v3604 = vcombine.high %v3600, %v3600
        %v3606 = vunpack.c.l.s4 1983009808
        %v3607 = vunpack.c.0.s8 %v3606
        %v3608 = vlaneseq
        %v3609 = vshrl.u32 %v3608, 7
        %v3610 = vsub.s32 %v3607, %v3609
        %v3611 = vrot.slane %v3600, %v3610
        %v3613 = vunpack.c.l.s4 1983009808
        %v3614 = vunpack.c.0.s8 %v3613
        %v3615 = vlaneseq
        %v3616 = vshrl.u32 %v3615, 7
        %v3617 = vsub.s32 %v3614, %v3616
        %v3618 = vrot.slane %v3604, %v3617
        %v3619 = vcombine.high %v3611, %v3611
        %3620 = vrot.lane.b32.xlu0 %v3611, 112
        %v3621 = vpop.permute.xlu0 %3620
        %3622 = vrot.lane.b32.xlu0 %v3619, 112
        %v3623 = vpop.permute.xlu0 %3622
        %3624 = vrot.lane.b32.xlu0 %v3618, 112
        %v3625 = vpop.permute.xlu0 %3624
        %v3626 = vsel %vm1277, %v3621, %v3623
        %v3627 = vsel %vm1277, %v3623, %v3625
        %v3629 = vsel %vm499, %v3602, 0
        %v3631 = vsel %vm331, %v3626, 0
        %v3633 = vsel %vm331, %v3627, 0
        %3635 = vmatprep.subr.mxu0 %v3633
        %3636 = vmatpush1.msra.mxu0 %v3631
        %3637 = vmatprep.subr.mxu0 0.0
        %3638 = vmatpush1.msra.mxu0 0.0
        %3639 = vmatprep.subr.mxu0 0.0
        %3640 = vmatpush1.msra.mxu0 0.0
        %3641 = vmatprep.subr.mxu0 0.0
        %3642 = vmatpush1.msra.mxu0 0.0
        %3643 = vmatprep.subr.mxu0 0.0
        %3644 = vmatpush1.msra.mxu0 0.0
        %3645 = vmatprep.subr.mxu0 0.0
        %3646 = vmatpush1.msra.mxu0 0.0
        %3647 = vmatprep.subr.mxu0 0.0
        %3648 = vmatpush1.msra.mxu0 0.0
        %3649 = vmatprep.subr.mxu0 0.0
        %3650 = vmatpush1.msra.mxu0 0.0
        %3651 = vmatprep.subr.mxu0 0.0
        %3652 = vmatpush1.msra.mxu0 0.0
        %3653 = vmatprep.subr.mxu0 0.0
        %3654 = vmatpush1.msra.mxu0 0.0
        %3655 = vmatprep.subr.mxu0 0.0
        %3656 = vmatpush1.msra.mxu0 0.0
        %3657 = vmatprep.subr.mxu0 0.0
        %3658 = vmatpush1.msra.mxu0 0.0
        %3659 = vmatprep.subr.mxu0 0.0
        %3660 = vmatpush1.msra.mxu0 0.0
        %3661 = vmatprep.subr.mxu0 0.0
        %3662 = vmatpush1.msra.mxu0 0.0
        %3663 = vmatprep.subr.mxu0 0.0
        %3664 = vmatpush1.msra.mxu0 0.0
        %3665 = vmatprep.subr.mxu0 0.0
        %3666 = vmatpush1.msra.mxu0 0.0
        %3667 = vmatprep.subr.mxu0 0.0
        %3668 = vmatpush1.msra.mxu0 0.0
        %3669 = vmatprep.subr.mxu0 0.0
        %3670 = vmatpush1.msra.mxu0 0.0
        %3671 = vmatprep.subr.mxu0 0.0
        %3672 = vmatpush1.msra.mxu0 0.0
        %3673 = vmatprep.subr.mxu0 0.0
        %3674 = vmatpush1.msra.mxu0 0.0
        %3675 = vmatprep.subr.mxu0 0.0
        %3676 = vmatpush1.msra.mxu0 0.0
        %3677 = vmatprep.subr.mxu0 0.0
        %3678 = vmatpush1.msra.mxu0 0.0
        %3679 = vmatprep.subr.mxu0 0.0
        %3680 = vmatpush1.msra.mxu0 0.0
        %3681 = vmatprep.subr.mxu0 0.0
        %3682 = vmatpush1.msra.mxu0 0.0
        %3683 = vmatprep.subr.mxu0 0.0
        %3684 = vmatpush1.msra.mxu0 0.0
        %3685 = vmatprep.subr.mxu0 0.0
        %3686 = vmatpush1.msra.mxu0 0.0
        %3687 = vmatprep.subr.mxu0 0.0
        %3688 = vmatpush1.msra.mxu0 0.0
        %3689 = vmatprep.subr.mxu0 0.0
        %3690 = vmatpush1.msra.mxu0 0.0
        %3691 = vmatprep.subr.mxu0 0.0
        %3692 = vmatpush1.msra.mxu0 0.0
        %3693 = vmatprep.subr.mxu0 0.0
        %3694 = vmatpush1.msra.mxu0 0.0
        %3695 = vmatprep.subr.mxu0 0.0
        %3696 = vmatpush1.msra.mxu0 0.0
        %3697 = vmatprep.subr.mxu0 0.0
        %3698 = vmatpush1.msra.mxu0 0.0
        %3699 = vmatprep.mubr.f32.mxu0 0.0
        %3700 = vmatmul.mubr.f32.gmra.mrb[0].mxu0 %v3629
        %v3701 = vpop.f32.mrb[0].mxu0
        %v3702 = vadd.f32 0.0, %v3701
        %v3703 = vpop.f32.mrb[0].mxu0
        %v3704 = vadd.f32 0.0, %v3703
        %3705 = vdwg.mxu0
        %v3706 = vadd.f32 %v3598, %v3702
        %v3707 = vadd.f32 %v3599, %v3704
        %v3708 = vld [vmem:[#allocation2 + $0x2] sm:$0x3f]
        %v3709 = vmul.f32 %v3708, %v1364
        %s3710 = scalar_lea.vmem %s3, 52
        %v3711 = vld [vmem:[%s3710] sm:$0x3]
        %v3713 = vcombine.high %v3709, %v3709
        %v3715 = vunpack.c.l.s4 1983009808
        %v3716 = vunpack.c.0.s8 %v3715
        %v3717 = vlaneseq
        %v3718 = vshrl.u32 %v3717, 7
        %v3719 = vsub.s32 %v3716, %v3718
        %v3720 = vrot.slane %v3709, %v3719
        %v3722 = vunpack.c.l.s4 1983009808
        %v3723 = vunpack.c.0.s8 %v3722
        %v3724 = vlaneseq
        %v3725 = vshrl.u32 %v3724, 7
        %v3726 = vsub.s32 %v3723, %v3725
        %v3727 = vrot.slane %v3713, %v3726
        %v3728 = vcombine.high %v3720, %v3720
        %3729 = vrot.lane.b32.xlu0 %v3720, 111
        %v3730 = vpop.permute.xlu0 %3729
        %3731 = vrot.lane.b32.xlu0 %v3728, 111
        %v3732 = vpop.permute.xlu0 %3731
        %3733 = vrot.lane.b32.xlu0 %v3727, 111
        %v3734 = vpop.permute.xlu0 %3733
        %v3735 = vsel %vm466, %v3730, %v3732
        %v3736 = vsel %vm466, %v3732, %v3734
        %v3738 = vsel %vm499, %v3711, 0
        %v3740 = vsel %vm331, %v3735, 0
        %v3742 = vsel %vm331, %v3736, 0
        %3744 = vmatprep.subr.mxu0 %v3742
        %3745 = vmatpush1.msra.mxu0 %v3740
        %3746 = vmatprep.subr.mxu0 0.0
        %3747 = vmatpush1.msra.mxu0 0.0
        %3748 = vmatprep.subr.mxu0 0.0
        %3749 = vmatpush1.msra.mxu0 0.0
        %3750 = vmatprep.subr.mxu0 0.0
        %3751 = vmatpush1.msra.mxu0 0.0
        %3752 = vmatprep.subr.mxu0 0.0
        %3753 = vmatpush1.msra.mxu0 0.0
        %3754 = vmatprep.subr.mxu0 0.0
        %3755 = vmatpush1.msra.mxu0 0.0
        %3756 = vmatprep.subr.mxu0 0.0
        %3757 = vmatpush1.msra.mxu0 0.0
        %3758 = vmatprep.subr.mxu0 0.0
        %3759 = vmatpush1.msra.mxu0 0.0
        %3760 = vmatprep.subr.mxu0 0.0
        %3761 = vmatpush1.msra.mxu0 0.0
        %3762 = vmatprep.subr.mxu0 0.0
        %3763 = vmatpush1.msra.mxu0 0.0
        %3764 = vmatprep.subr.mxu0 0.0
        %3765 = vmatpush1.msra.mxu0 0.0
        %3766 = vmatprep.subr.mxu0 0.0
        %3767 = vmatpush1.msra.mxu0 0.0
        %3768 = vmatprep.subr.mxu0 0.0
        %3769 = vmatpush1.msra.mxu0 0.0
        %3770 = vmatprep.subr.mxu0 0.0
        %3771 = vmatpush1.msra.mxu0 0.0
        %3772 = vmatprep.subr.mxu0 0.0
        %3773 = vmatpush1.msra.mxu0 0.0
        %3774 = vmatprep.subr.mxu0 0.0
        %3775 = vmatpush1.msra.mxu0 0.0
        %3776 = vmatprep.subr.mxu0 0.0
        %3777 = vmatpush1.msra.mxu0 0.0
        %3778 = vmatprep.subr.mxu0 0.0
        %3779 = vmatpush1.msra.mxu0 0.0
        %3780 = vmatprep.subr.mxu0 0.0
        %3781 = vmatpush1.msra.mxu0 0.0
        %3782 = vmatprep.subr.mxu0 0.0
        %3783 = vmatpush1.msra.mxu0 0.0
        %3784 = vmatprep.subr.mxu0 0.0
        %3785 = vmatpush1.msra.mxu0 0.0
        %3786 = vmatprep.subr.mxu0 0.0
        %3787 = vmatpush1.msra.mxu0 0.0
        %3788 = vmatprep.subr.mxu0 0.0
        %3789 = vmatpush1.msra.mxu0 0.0
        %3790 = vmatprep.subr.mxu0 0.0
        %3791 = vmatpush1.msra.mxu0 0.0
        %3792 = vmatprep.subr.mxu0 0.0
        %3793 = vmatpush1.msra.mxu0 0.0
        %3794 = vmatprep.subr.mxu0 0.0
        %3795 = vmatpush1.msra.mxu0 0.0
        %3796 = vmatprep.subr.mxu0 0.0
        %3797 = vmatpush1.msra.mxu0 0.0
        %3798 = vmatprep.subr.mxu0 0.0
        %3799 = vmatpush1.msra.mxu0 0.0
        %3800 = vmatprep.subr.mxu0 0.0
        %3801 = vmatpush1.msra.mxu0 0.0
        %3802 = vmatprep.subr.mxu0 0.0
        %3803 = vmatpush1.msra.mxu0 0.0
        %3804 = vmatprep.subr.mxu0 0.0
        %3805 = vmatpush1.msra.mxu0 0.0
        %3806 = vmatprep.subr.mxu0 0.0
        %3807 = vmatpush1.msra.mxu0 0.0
        %3808 = vmatprep.mubr.f32.mxu0 0.0
        %3809 = vmatmul.mubr.f32.gmra.mrb[0].mxu0 %v3738
        %v3810 = vpop.f32.mrb[0].mxu0
        %v3811 = vadd.f32 0.0, %v3810
        %v3812 = vpop.f32.mrb[0].mxu0
        %v3813 = vadd.f32 0.0, %v3812
        %3814 = vdwg.mxu0
        %v3815 = vadd.f32 %v3706, %v3811
        %v3816 = vadd.f32 %v3707, %v3813
        %s3817 = scalar_lea.vmem %s4, 4
        %v3818 = vld [vmem:[%s3817] sm:$0x3]
        %3820 = vset.pattern.permute.xlu0 0
        %3821 = vperm.xlu0 %3820, %v3818
        %v3822 = vpop.permute.xlu0 %3821
        %v3824 = vadd.f32 %v3815, %v3822
        %v3825 = vadd.f32 %v3816, %v3822
        %v3826 = vmax.f32 %v3824, 0.0
        %v3827 = vmax.f32 %v3825, 0.0
        %s3828 = scalar_lea.vmem %s5, 8
        %v3829 = vld [vmem:[%s3828] sm:$0xf]
        %v3831 = vsel %vm499, %v3829, 0
        %v3834 = vsel %vm331, %v3826, 0
        %v3837 = vsel %vm331, %v3827, 0
        %3839 = vmatprep.subr.mxu0 %v3837
        %3840 = vmatpush1.msra.mxu0 %v3834
        %3841 = vmatprep.subr.mxu0 0.0
        %3842 = vmatpush1.msra.mxu0 0.0
        %3843 = vmatprep.subr.mxu0 0.0
        %3844 = vmatpush1.msra.mxu0 0.0
        %3845 = vmatprep.subr.mxu0 0.0
        %3846 = vmatpush1.msra.mxu0 0.0
        %3847 = vmatprep.subr.mxu0 0.0
        %3848 = vmatpush1.msra.mxu0 0.0
        %3849 = vmatprep.subr.mxu0 0.0
        %3850 = vmatpush1.msra.mxu0 0.0
        %3851 = vmatprep.subr.mxu0 0.0
        %3852 = vmatpush1.msra.mxu0 0.0
        %3853 = vmatprep.subr.mxu0 0.0
        %3854 = vmatpush1.msra.mxu0 0.0
        %3855 = vmatprep.subr.mxu0 0.0
        %3856 = vmatpush1.msra.mxu0 0.0
        %3857 = vmatprep.subr.mxu0 0.0
        %3858 = vmatpush1.msra.mxu0 0.0
        %3859 = vmatprep.subr.mxu0 0.0
        %3860 = vmatpush1.msra.mxu0 0.0
        %3861 = vmatprep.subr.mxu0 0.0
        %3862 = vmatpush1.msra.mxu0 0.0
        %3863 = vmatprep.subr.mxu0 0.0
        %3864 = vmatpush1.msra.mxu0 0.0
        %3865 = vmatprep.subr.mxu0 0.0
        %3866 = vmatpush1.msra.mxu0 0.0
        %3867 = vmatprep.subr.mxu0 0.0
        %3868 = vmatpush1.msra.mxu0 0.0
        %3869 = vmatprep.subr.mxu0 0.0
        %3870 = vmatpush1.msra.mxu0 0.0
        %3871 = vmatprep.subr.mxu0 0.0
        %3872 = vmatpush1.msra.mxu0 0.0
        %3873 = vmatprep.subr.mxu0 0.0
        %3874 = vmatpush1.msra.mxu0 0.0
        %3875 = vmatprep.subr.mxu0 0.0
        %3876 = vmatpush1.msra.mxu0 0.0
        %3877 = vmatprep.subr.mxu0 0.0
        %3878 = vmatpush1.msra.mxu0 0.0
        %3879 = vmatprep.subr.mxu0 0.0
        %3880 = vmatpush1.msra.mxu0 0.0
        %3881 = vmatprep.subr.mxu0 0.0
        %3882 = vmatpush1.msra.mxu0 0.0
        %3883 = vmatprep.subr.mxu0 0.0
        %3884 = vmatpush1.msra.mxu0 0.0
        %3885 = vmatprep.subr.mxu0 0.0
        %3886 = vmatpush1.msra.mxu0 0.0
        %3887 = vmatprep.subr.mxu0 0.0
        %3888 = vmatpush1.msra.mxu0 0.0
        %3889 = vmatprep.subr.mxu0 0.0
        %3890 = vmatpush1.msra.mxu0 0.0
        %3891 = vmatprep.subr.mxu0 0.0
        %3892 = vmatpush1.msra.mxu0 0.0
        %3893 = vmatprep.subr.mxu0 0.0
        %3894 = vmatpush1.msra.mxu0 0.0
        %3895 = vmatprep.subr.mxu0 0.0
        %3896 = vmatpush1.msra.mxu0 0.0
        %3897 = vmatprep.subr.mxu0 0.0
        %3898 = vmatpush1.msra.mxu0 0.0
        %3899 = vmatprep.subr.mxu0 0.0
        %3900 = vmatpush1.msra.mxu0 0.0
        %3901 = vmatprep.subr.mxu0 0.0
        %3902 = vmatpush1.msra.mxu0 0.0
        %3903 = vmatprep.mubr.f32.mxu0 0.0
        %3904 = vmatmul.mubr.f32.gmra.mrb[0].mxu0 %v3831
        %v3905 = vpop.f32.mrb[0].mxu0
        %v3906 = vadd.f32 0.0, %v3905
        %v3907 = vpop.f32.mrb[0].mxu0
        %v3908 = vadd.f32 0.0, %v3907
        %3909 = vdwg.mxu0
        %v3912 = vcombine.low %v3906, %v3908
        %v3914 = vadd.f32 %v2756, %v3912
        %s3915 = scalar_lea.vmem %s6, 8
        %v3916 = vld [vmem:[%s3915] sm:$0xf]
        %3918 = vset.pattern.permute.xlu0 0
        %3919 = vperm.xlu0 %3918, %v3916
        %v3920 = vpop.permute.xlu0 %3919
        %v3922 = vunpack.c.l.s4 839922192
        %v3923 = vunpack.c.0.s8 %v3922
        %v3924 = vlaneseq
        %v3925 = vshrl.u32 %v3924, 7
        %v3926 = vsub.s32 %v3923, %v3925
        %v3927 = vrot.slane %v3920, %v3926
        %v3929 = vadd.f32 %v3914, %v3927
        %3930 = vst [vmem:[%s325] sm:$0xff] %v3929
        %s3931 = sand.u32 %s225, 1
        %s3932 = scalar_lea.sflag [#allocation4], %s3931
        %s3933 = sand.u32 %s225, 1
        %s3934 = smul.addr %s3933, 8
        %s3935 = scalar_lea.vmem [#allocation3], %s3934
        // Predicated region
        $region57: #{tpu_custom_call.1} parent=55 // pred_check
          %p3936 = pneg %p235
        $region58: #{tpu_custom_call.1} parent=55 // pred_check_branch
          %3938 = sbr.rel (%p3936) target = $region60
        $region59: #{tpu_custom_call.1} parent=55 // pred_region
          %s3940 = ssub.s32 128, 128
          %3941 = vsyncadd %s3932, %s3940
          %s3942 = smul.addr %s23, 2
          %s3943 = smul.addr %s3942, 64
          %s3944 = scalar_lea.hbm %s9, %s3943
          %s3946 = sshll.u32 %s3935, 4
          %s3947 = int_to_ptr.vmem [resolvable:$true] %s3946
          %3949 = dma.vmem_to_hbm [thread:$0]  %s3947, 128, %s3944, %s3932
        $region60: #{tpu_custom_call.1} parent=55 // pred_fallthru
          _
      $region56: #{tpu_custom_call.1} parent=5 // pred_fallthru
        _
      %p3950 = scmp.le.s32.totalorder 2, %s18
      // Predicated region
      $region61: #{tpu_custom_call.1} parent=5 // pred_check
        %p3951 = pneg %p3950
      $region62: #{tpu_custom_call.1} parent=5 // pred_check_branch
        %3953 = sbr.rel (%p3951) target = $region64
      $region63: #{tpu_custom_call.1} parent=5 // pred_region
        %s3954 = ssub.s32 %s18, 2
        // Predicated region
        $region65: #{tpu_custom_call.1} parent=63 // pred_check
          %p3955 = pneg %p241
        $region66: #{tpu_custom_call.1} parent=63 // pred_check_branch
          %3957 = sbr.rel (%p3955) target = $region68
        $region67: #{tpu_custom_call.1} parent=63 // pred_region
          %s3958 = sand.u32 %s226, 1
          %s3959 = scalar_lea.sflag [#allocation4], %s3958
          %s3960 = sand.u32 %s226, 1
          %s3961 = smul.addr %s3960, 8
          %s3962 = scalar_lea.vmem [#allocation3], %s3961
          %3963 = dma.done %s3959, 128
        $region68: #{tpu_custom_call.1} parent=63 // pred_fallthru
          _
      $region64: #{tpu_custom_call.1} parent=5 // pred_fallthru
        _
    $region6: #{tpu_custom_call.1} parent=1 // loop_footer
      %s22 = sadd.s32 1, %s18
    $region7: #{tpu_custom_call.1} parent=1 // loop_footer_branch
      %17 = sbr.rel target = $region3
    $region8: #{tpu_custom_call.1} parent=1 // loop_exit
      _
    %3964 = vsyncpa [#allocation4], 1
    %s3965 = scalar_lea.sflag [#allocation4], 1
    %3966 = vsyncpa %s3965, 1

</llo_original>
